<compile_context>
chip_gen: v7x
topology: tpu7x:2x2x1
jax: 0.10.0
libtpu: 0.0.40
codegen_flags: <defaults>
</compile_context>

<pallas_src>
import functools

import jax
import jax.numpy as jnp
from jax.experimental import pallas as pl
from jax.experimental.pallas import tpu as pltpu


# --------------------------- fused multi-layer encoder kernel ----------------

def _ln(x, g, b, eps=1e-5):
    mu = jnp.mean(x, axis=-1, keepdims=True)
    var = jnp.mean(jnp.square(x - mu), axis=-1, keepdims=True)
    return (x - mu) * jax.lax.rsqrt(var + eps) * g + b


def _encoder_kernel(x_ref, bias_ref, wqkv_ref, wo_ref, w1_ref, w2_ref, vecs_ref,
                    o_ref, *, num_layers, num_heads, d_model, ffn_dim):
    """All `num_layers` post-norm transformer layers on one [R, D] row block.

    R = (sequences in block) * seq_len.  Attention over all sequences in the block is
    one dense softmax with a precomputed block-diagonal additive bias, so everything
    stays 2-D and VMEM-resident for the whole encoder stack.
    """
    D, F, H = d_model, ffn_dim, num_heads
    Dh = D // H
    scale = Dh ** -0.5

    x = x_ref[...]                       # [R, D] f32
    bias = bias_ref[...]                 # [R, R] f32 (0 / -1e30 block-diagonal)

    for l in range(num_layers):          # unrolled; static layer indices into refs
        vec = vecs_ref[l]                # [8, W] f32: packed bias / LN parameters
        bqkv, bo = vec[0:1, :3 * D], vec[1:2, :D]
        g1, be1 = vec[2:3, :D], vec[3:4, :D]
        b1, b2 = vec[4:5, :F], vec[5:6, :D]
        g2, be2 = vec[6:7, :D], vec[7:8, :D]

        xb = x.astype(jnp.bfloat16)      # bf16 operands, f32 accumulation

        # ---- fused QKV projection: one [R,D]x[D,3D] matmul + one bias add ----
        qkv = jnp.dot(xb, wqkv_ref[l], preferred_element_type=jnp.float32) + bqkv

        # ---- per-head attention on lane slices of the fused QKV result ----
        pv_heads = []
        for h in range(H):
            q = qkv[:, h * Dh:(h + 1) * Dh]
            k = qkv[:, D + h * Dh:D + (h + 1) * Dh]
            v = qkv[:, 2 * D + h * Dh:2 * D + (h + 1) * Dh]
            s = jnp.einsum('qd,kd->qk', q, k,
                           preferred_element_type=jnp.float32) * scale + bias
            s = s - jnp.max(s, axis=-1, keepdims=True)
            p = jnp.exp(s)
            inv = pl.reciprocal(jnp.sum(p, axis=-1, keepdims=True), approx=True)
            pv_heads.append(jnp.dot(p, v, preferred_element_type=jnp.float32) * inv)

        # ---- single output projection on the concatenated per-head results ----
        pv = jnp.concatenate(pv_heads, axis=-1)                        # [R, D]
        attn = jnp.dot(pv.astype(jnp.bfloat16), wo_ref[l],
                       preferred_element_type=jnp.float32) + bo

        # ---- residual + LN1, FFN(relu), residual + LN2 (dropout: eval parity) ----
        h1 = _ln(x + attn, g1, be1)
        f = jnp.dot(h1.astype(jnp.bfloat16), w1_ref[l],
                    preferred_element_type=jnp.float32) + b1
        f = jnp.maximum(f, 0.0)
        f = jnp.dot(f.astype(jnp.bfloat16), w2_ref[l],
                    preferred_element_type=jnp.float32) + b2
        x = _ln(h1 + f, g2, be2)

    o_ref[...] = x


def _pick_block_n(n_seq, s, max_rows=256):
    """Whole sequences per row block.

    Prefers >=2 grid blocks (so the 'parallel' grid can use both v7x TensorCores) and
    the largest block whose row count is a multiple of 8 and <= max_rows (bounding the
    wasted work of the dense block-diagonal attention).  Falls back to the full array
    (always a legal block shape) only if no tiled choice exists.
    """
    candidates = []
    for bn in range(1, n_seq + 1):
        if n_seq % bn:
            continue
        rows = bn * s
        if rows % 8 != 0 and bn != n_seq:
            continue
        if rows > max_rows and bn != n_seq:
            continue
        candidates.append(bn)
    if not candidates:
        return n_seq
    multi = [bn for bn in candidates if n_seq // bn >= 2 and bn * s <= max_rows]
    return max(multi) if multi else max(candidates)


def transformer(x_nsd, enc, *, num_heads):
    """x_nsd: [N, S, D]; self-attention over axis 1, independently for each n.
    `enc` holds layer-stacked weights (leading axis = layer)."""
    N, S, D = x_nsd.shape
    L = enc["wqkv"].shape[0]
    F = enc["w1"].shape[-1]

    bn = _pick_block_n(N, S)
    r_blk = bn * S
    r_total = N * S
    n_blocks = N // bn

    x2 = x_nsd.reshape(r_total, D)

    # Precomputed block-diagonal additive bias (identical for every row block).
    seq_id = jnp.arange(r_blk, dtype=jnp.int32) // S
    bias = jnp.where(seq_id[:, None] == seq_id[None, :], 0.0, -1e30).astype(jnp.float32)

    kernel = functools.partial(_encoder_kernel, num_layers=L, num_heads=num_heads,
                               d_model=D, ffn_dim=F)

    row_spec = pl.BlockSpec((r_blk, D), lambda i: (i, 0))

    def invariant(arr):
        nd = arr.ndim
        return pl.BlockSpec(arr.shape, lambda i, nd=nd: (0,) * nd)

    weight_bytes = sum(int(a.size) * a.dtype.itemsize
                       for a in (enc["wqkv"], enc["wo"], enc["w1"], enc["w2"], enc["vecs"]))
    cost = pl.CostEstimate(
        flops=int(L * r_total * (8 * D * D + 4 * r_blk * D + 4 * D * F)),
        transcendentals=int(L * (num_heads * r_total * r_blk + 2 * r_total)),
        bytes_accessed=int(2 * r_total * D * 4 + r_blk * r_blk * 4 + weight_bytes),
    )

    out = pl.pallas_call(
        kernel,
        out_shape=jax.ShapeDtypeStruct((r_total, D), jnp.float32),
        grid=(n_blocks,),
        in_specs=[row_spec, invariant(bias), invariant(enc["wqkv"]),
                  invariant(enc["wo"]), invariant(enc["w1"]),
                  invariant(enc["w2"]), invariant(enc["vecs"])],
        out_specs=row_spec,
        compiler_params=pltpu.CompilerParams(dimension_semantics=("parallel",)),
        cost_estimate=cost,
    )(x2, bias, enc["wqkv"], enc["wo"], enc["w1"], enc["w2"], enc["vecs"])
    return out.reshape(N, S, D)


# --------------------------- params -----------------------------------------

def init_params(key, enc_in, d_model, seq_len, pred_len, num_layers, ffn_mult=4):
    ffn_dim = ffn_mult * d_model
    k_proj, k_pred, k_dec, k_e1, k_e2, k_v1, k_v2 = jax.random.split(key, 7)

    def w(k, shape, scale=0.02):
        return scale * jax.random.normal(k, shape, dtype=jnp.float32)

    def encoder(k_w, k_v):
        kws = jax.random.split(k_w, 4 * num_layers)

        def wl(i, shape):
            return (0.02 * jax.random.normal(kws[i], shape)).astype(jnp.bfloat16)

        wqkv = jnp.stack([wl(4 * l + 0, (d_model, 3 * d_model)) for l in range(num_layers)])
        wo = jnp.stack([wl(4 * l + 1, (d_model, d_model)) for l in range(num_layers)])
        w1 = jnp.stack([wl(4 * l + 2, (d_model, ffn_dim)) for l in range(num_layers)])
        w2 = jnp.stack([wl(4 * l + 3, (ffn_dim, d_model)) for l in range(num_layers)])
        # packed per-layer vectors, one row each:
        #   bqkv | bo | ln1_g | ln1_b | b1 | b2 | ln2_g | ln2_b   (padded to `width`)
        width = max(3 * d_model, ffn_dim)
        vecs = 0.02 * jax.random.normal(k_v, (num_layers, 8, width), dtype=jnp.float32)
        vecs = vecs.at[:, 2, :d_model].add(1.0)   # ln1 gamma ~ 1
        vecs = vecs.at[:, 6, :d_model].add(1.0)   # ln2 gamma ~ 1
        return dict(wqkv=wqkv, wo=wo, w1=w1, w2=w2, vecs=vecs)

    return dict(
        proj_w=w(k_proj, (enc_in, d_model)), proj_b=jnp.zeros((d_model,), jnp.float32),
        pred_w=w(k_pred, (seq_len, pred_len + seq_len)),
        pred_b=jnp.zeros((pred_len + seq_len,), jnp.float32),
        enc1=encoder(k_e1, k_v1), enc2=encoder(k_e2, k_v2),
        dec_w=w(k_dec, (d_model, 3)), dec_b=jnp.zeros((3,), jnp.float32),
    )


# --------------------------- forward -----------------------------------------

def backbone_forward(params, x, x_mark, x_fund, *, seq_len, pred_len,
                     num_heads=4, revin=True):
    # x: [bs, seq_len, channels, enc_in]   (x_mark, x_fund unused by the torch forward)
    bs, S, C, E = x.shape
    eps = 1e-5

    if revin:  # RevIN(affine=False, subtract_last=False): stats over non-batch, non-feature dims
        mean = jnp.mean(x, axis=(1, 2), keepdims=True)
        std = jnp.sqrt(jnp.var(x, axis=(1, 2), keepdims=True) + eps)
        x = (x - mean) / std

    # TODO(synk): fft=True path (DFT seasonality/trend decompose) — reference class undefined; fft=False only.

    # Tiny-K/N linears left to XLA (per perf review): projection E->D, predict S->P+S.
    x_enc = jnp.einsum('bsce,ed->bscd', x, params["proj_w"]) + params["proj_b"]
    x_enc = (jnp.einsum('bscd,sp->bpcd', x_enc, params["pred_w"])
             + params["pred_b"][None, :, None, None])                 # [bs, P, C, D]
    P = pred_len + seq_len
    D = x_enc.shape[-1]

    # encoder1: attention across channels — layout [bs*P, C, D] needs no transpose
    x1 = transformer(x_enc.reshape(bs * P, C, D), params["enc1"], num_heads=num_heads)
    x_enc = x1.reshape(bs, P, C, D)

    # encoder2: attention across time — [bs*C, P, D]
    # TODO(synk): these XLA transposes could be folded into 4-D BlockSpecs; negligible at this size.
    x2 = x_enc.transpose(0, 2, 1, 3).reshape(bs * C, P, D)
    x2 = transformer(x2, params["enc2"], num_heads=num_heads)
    x_enc = x2.reshape(bs, C, P, D).transpose(0, 2, 1, 3)             # [bs, P, C, D]

    # decoder: Linear(d_model -> 3), tiny N -> XLA
    y = jnp.einsum('bpcd,de->bpce', x_enc, params["dec_w"]) + params["dec_b"]
    y = y[:, -pred_len:, :, :]          # torch .squeeze(-1) is a no-op (last dim == 3)

    if revin:
        # NOTE: like the torch module, denorm relies on decoder width (3) == enc_in.
        y = y * std + mean
    return y


# --------------------------- driver ------------------------------------------

if __name__ == "__main__":
    enc_in, d_model, seq_len, pred_len = 3, 32, 8, 4
    num_layers, num_heads = 2, 4
    bs, channels = 2, 4

    key = jax.random.PRNGKey(0)
    pkey, xkey = jax.random.split(key)
    params = init_params(pkey, enc_in, d_model, seq_len, pred_len, num_layers)

    x = jax.random.normal(xkey, (bs, seq_len, channels, enc_in), dtype=jnp.float32)
    x_mark = jnp.zeros((bs, seq_len, 4), jnp.float32)   # unused in forward
    x_fund = jnp.zeros((bs,), jnp.int32)                # unused in forward

    fwd = jax.jit(functools.partial(
        backbone_forward, seq_len=seq_len, pred_len=pred_len,
        num_heads=num_heads, revin=True))
    y = jax.block_until_ready(fwd(params, x, x_mark, x_fund))

    assert y.shape == (bs, pred_len, channels, 3), y.shape
    assert bool(jnp.all(jnp.isfinite(y)))
    print("KERNEL_OK")
</pallas_src>

<mosaic_0001>
module attributes {stable_mosaic.version = 11 : i64} {
  func.func @_encoder_kernel(%arg0: i32, %arg1: memref<48x32xf32, #tpu.memory_space<vmem>>, %arg2: memref<48x48xf32, #tpu.memory_space<vmem>>, %arg3: memref<2x32x96xbf16, #tpu.memory_space<vmem>>, %arg4: memref<2x32x32xbf16, #tpu.memory_space<vmem>>, %arg5: memref<2x32x128xbf16, #tpu.memory_space<vmem>>, %arg6: memref<2x128x32xbf16, #tpu.memory_space<vmem>>, %arg7: memref<2x8x128xf32, #tpu.memory_space<vmem>>, %arg8: memref<48x32xf32, #tpu.memory_space<vmem>>) attributes {dimension_semantics = [#tpu.dimension_semantics<parallel>], iteration_bounds = array<i64: 2>, scalar_prefetch = 0 : i64, scratch_operands = 0 : i64, tpu.core_type = #tpu.core_type<tc>, window_params = [{transform_indices = @transform_0, window_bounds = array<i64: 48, 32>}, {pipeline_mode = #tpu.pipeline_mode<synchronous>, transform_indices = @transform_1, window_bounds = array<i64: 48, 48>}, {pipeline_mode = #tpu.pipeline_mode<synchronous>, transform_indices = @transform_2, window_bounds = array<i64: 2, 32, 96>}, {pipeline_mode = #tpu.pipeline_mode<synchronous>, transform_indices = @transform_3, window_bounds = array<i64: 2, 32, 32>}, {pipeline_mode = #tpu.pipeline_mode<synchronous>, transform_indices = @transform_4, window_bounds = array<i64: 2, 32, 128>}, {pipeline_mode = #tpu.pipeline_mode<synchronous>, transform_indices = @transform_5, window_bounds = array<i64: 2, 128, 32>}, {pipeline_mode = #tpu.pipeline_mode<synchronous>, transform_indices = @transform_6, window_bounds = array<i64: 2, 8, 128>}, {transform_indices = @transform_7, window_bounds = array<i64: 48, 32>}]} {
    %c0 = arith.constant 0 : index
    %c0_0 = arith.constant 0 : index
    %0 = vector.load %arg1[%c0, %c0_0] : memref<48x32xf32, #tpu.memory_space<vmem>>, vector<48x32xf32>
    %c0_1 = arith.constant 0 : index
    %c0_2 = arith.constant 0 : index
    %1 = vector.load %arg2[%c0_1, %c0_2] : memref<48x48xf32, #tpu.memory_space<vmem>>, vector<48x48xf32>
    %c0_3 = arith.constant 0 : index
    %c0_4 = arith.constant 0 : index
    %c0_5 = arith.constant 0 : index
    %2 = vector.load %arg7[%c0_3, %c0_4, %c0_5] : memref<2x8x128xf32, #tpu.memory_space<vmem>>, vector<1x8x128xf32>
    %3 = vector.shape_cast %2 : vector<1x8x128xf32> to vector<8x128xf32>
    %4 = vector.extract_strided_slice %3 {offsets = [0, 0], sizes = [1, 96], strides = [1, 1]} : vector<8x128xf32> to vector<1x96xf32>
    %5 = vector.extract_strided_slice %3 {offsets = [1, 0], sizes = [1, 32], strides = [1, 1]} : vector<8x128xf32> to vector<1x32xf32>
    %6 = vector.extract_strided_slice %3 {offsets = [2, 0], sizes = [1, 32], strides = [1, 1]} : vector<8x128xf32> to vector<1x32xf32>
    %7 = vector.extract_strided_slice %3 {offsets = [3, 0], sizes = [1, 32], strides = [1, 1]} : vector<8x128xf32> to vector<1x32xf32>
    %8 = vector.extract_strided_slice %3 {offsets = [4, 0], sizes = [1, 128], strides = [1, 1]} : vector<8x128xf32> to vector<1x128xf32>
    %9 = vector.extract_strided_slice %3 {offsets = [5, 0], sizes = [1, 32], strides = [1, 1]} : vector<8x128xf32> to vector<1x32xf32>
    %10 = vector.extract_strided_slice %3 {offsets = [6, 0], sizes = [1, 32], strides = [1, 1]} : vector<8x128xf32> to vector<1x32xf32>
    %11 = vector.extract_strided_slice %3 {offsets = [7, 0], sizes = [1, 32], strides = [1, 1]} : vector<8x128xf32> to vector<1x32xf32>
    %12 = arith.truncf %0 : vector<48x32xf32> to vector<48x32xbf16>
    %c0_6 = arith.constant 0 : index
    %c0_7 = arith.constant 0 : index
    %c0_8 = arith.constant 0 : index
    %13 = vector.load %arg3[%c0_6, %c0_7, %c0_8] : memref<2x32x96xbf16, #tpu.memory_space<vmem>>, vector<1x32x96xbf16>
    %14 = vector.shape_cast %13 : vector<1x32x96xbf16> to vector<32x96xbf16>
    %cst = arith.constant dense<0.000000e+00> : vector<48x96xf32>
    %15 = tpu.matmul %12, %14, %cst {dimension_numbers = #tpu.dot_dimension_numbers<[1], [0], [0], [1], [0, 0, 1, 1], [], []>} : vector<48x32xbf16>, vector<32x96xbf16>, vector<48x96xf32> -> vector<48x96xf32>
    %16 = vector.broadcast %4 : vector<1x96xf32> to vector<48x96xf32>
    %17 = arith.addf %15, %16 : vector<48x96xf32>
    %18 = vector.extract_strided_slice %17 {offsets = [0, 0], sizes = [48, 8], strides = [1, 1]} : vector<48x96xf32> to vector<48x8xf32>
    %19 = vector.extract_strided_slice %17 {offsets = [0, 32], sizes = [48, 8], strides = [1, 1]} : vector<48x96xf32> to vector<48x8xf32>
    %20 = vector.extract_strided_slice %17 {offsets = [0, 64], sizes = [48, 8], strides = [1, 1]} : vector<48x96xf32> to vector<48x8xf32>
    "tpu.trace_start"() <{level = 10 : i32, message = "qd,kd->qk"}> : () -> ()
    %cst_9 = arith.constant dense<0.000000e+00> : vector<48x48xf32>
    %21 = tpu.matmul %18, %19, %cst_9 {dimension_numbers = #tpu.dot_dimension_numbers<[1], [1], [0], [0], [0, 0, 1, 0], [], []>} : vector<48x8xf32>, vector<48x8xf32>, vector<48x48xf32> -> vector<48x48xf32>
    "tpu.trace_stop"() : () -> ()
    %cst_10 = arith.constant 0.353553385 : f32
    %22 = vector.broadcast %cst_10 : f32 to vector<48x48xf32>
    %23 = arith.mulf %21, %22 : vector<48x48xf32>
    %24 = arith.addf %23, %1 : vector<48x48xf32>
    %cst_11 = arith.constant dense<0xFF800000> : vector<48xf32>
    %25 = vector.multi_reduction <maximumf>, %24, %cst_11 [1] : vector<48x48xf32> to vector<48xf32>
    %26 = vector.shape_cast %25 : vector<48xf32> to vector<48x1xf32>
    %27 = vector.broadcast %26 : vector<48x1xf32> to vector<48x48xf32>
    %28 = arith.subf %24, %27 : vector<48x48xf32>
    %29 = math.exp %28 : vector<48x48xf32>
    %cst_12 = arith.constant dense<0.000000e+00> : vector<48xf32>
    %30 = vector.multi_reduction <add>, %29, %cst_12 [1] : vector<48x48xf32> to vector<48xf32>
    %31 = vector.shape_cast %30 : vector<48xf32> to vector<48x1xf32>
    %32 = tpu.reciprocal %31 {approx = true} : vector<48x1xf32> -> vector<48x1xf32>
    %cst_13 = arith.constant dense<0.000000e+00> : vector<48x8xf32>
    %33 = tpu.matmul %29, %20, %cst_13 {dimension_numbers = #tpu.dot_dimension_numbers<[1], [0], [0], [1], [0, 0, 1, 1], [], []>} : vector<48x48xf32>, vector<48x8xf32>, vector<48x8xf32> -> vector<48x8xf32>
    %34 = vector.broadcast %32 : vector<48x1xf32> to vector<48x8xf32>
    %35 = arith.mulf %33, %34 : vector<48x8xf32>
    %36 = vector.extract_strided_slice %17 {offsets = [0, 8], sizes = [48, 8], strides = [1, 1]} : vector<48x96xf32> to vector<48x8xf32>
    %37 = vector.extract_strided_slice %17 {offsets = [0, 40], sizes = [48, 8], strides = [1, 1]} : vector<48x96xf32> to vector<48x8xf32>
    %38 = vector.extract_strided_slice %17 {offsets = [0, 72], sizes = [48, 8], strides = [1, 1]} : vector<48x96xf32> to vector<48x8xf32>
    "tpu.trace_start"() <{level = 10 : i32, message = "qd,kd->qk"}> : () -> ()
    %cst_14 = arith.constant dense<0.000000e+00> : vector<48x48xf32>
    %39 = tpu.matmul %36, %37, %cst_14 {dimension_numbers = #tpu.dot_dimension_numbers<[1], [1], [0], [0], [0, 0, 1, 0], [], []>} : vector<48x8xf32>, vector<48x8xf32>, vector<48x48xf32> -> vector<48x48xf32>
    "tpu.trace_stop"() : () -> ()
    %cst_15 = arith.constant 0.353553385 : f32
    %40 = vector.broadcast %cst_15 : f32 to vector<48x48xf32>
    %41 = arith.mulf %39, %40 : vector<48x48xf32>
    %42 = arith.addf %41, %1 : vector<48x48xf32>
    %cst_16 = arith.constant dense<0xFF800000> : vector<48xf32>
    %43 = vector.multi_reduction <maximumf>, %42, %cst_16 [1] : vector<48x48xf32> to vector<48xf32>
    %44 = vector.shape_cast %43 : vector<48xf32> to vector<48x1xf32>
    %45 = vector.broadcast %44 : vector<48x1xf32> to vector<48x48xf32>
    %46 = arith.subf %42, %45 : vector<48x48xf32>
    %47 = math.exp %46 : vector<48x48xf32>
    %cst_17 = arith.constant dense<0.000000e+00> : vector<48xf32>
    %48 = vector.multi_reduction <add>, %47, %cst_17 [1] : vector<48x48xf32> to vector<48xf32>
    %49 = vector.shape_cast %48 : vector<48xf32> to vector<48x1xf32>
    %50 = tpu.reciprocal %49 {approx = true} : vector<48x1xf32> -> vector<48x1xf32>
    %cst_18 = arith.constant dense<0.000000e+00> : vector<48x8xf32>
    %51 = tpu.matmul %47, %38, %cst_18 {dimension_numbers = #tpu.dot_dimension_numbers<[1], [0], [0], [1], [0, 0, 1, 1], [], []>} : vector<48x48xf32>, vector<48x8xf32>, vector<48x8xf32> -> vector<48x8xf32>
    %52 = vector.broadcast %50 : vector<48x1xf32> to vector<48x8xf32>
    %53 = arith.mulf %51, %52 : vector<48x8xf32>
    %54 = vector.extract_strided_slice %17 {offsets = [0, 16], sizes = [48, 8], strides = [1, 1]} : vector<48x96xf32> to vector<48x8xf32>
    %55 = vector.extract_strided_slice %17 {offsets = [0, 48], sizes = [48, 8], strides = [1, 1]} : vector<48x96xf32> to vector<48x8xf32>
    %56 = vector.extract_strided_slice %17 {offsets = [0, 80], sizes = [48, 8], strides = [1, 1]} : vector<48x96xf32> to vector<48x8xf32>
    "tpu.trace_start"() <{level = 10 : i32, message = "qd,kd->qk"}> : () -> ()
    %cst_19 = arith.constant dense<0.000000e+00> : vector<48x48xf32>
    %57 = tpu.matmul %54, %55, %cst_19 {dimension_numbers = #tpu.dot_dimension_numbers<[1], [1], [0], [0], [0, 0, 1, 0], [], []>} : vector<48x8xf32>, vector<48x8xf32>, vector<48x48xf32> -> vector<48x48xf32>
    "tpu.trace_stop"() : () -> ()
    %cst_20 = arith.constant 0.353553385 : f32
    %58 = vector.broadcast %cst_20 : f32 to vector<48x48xf32>
    %59 = arith.mulf %57, %58 : vector<48x48xf32>
    %60 = arith.addf %59, %1 : vector<48x48xf32>
    %cst_21 = arith.constant dense<0xFF800000> : vector<48xf32>
    %61 = vector.multi_reduction <maximumf>, %60, %cst_21 [1] : vector<48x48xf32> to vector<48xf32>
    %62 = vector.shape_cast %61 : vector<48xf32> to vector<48x1xf32>
    %63 = vector.broadcast %62 : vector<48x1xf32> to vector<48x48xf32>
    %64 = arith.subf %60, %63 : vector<48x48xf32>
    %65 = math.exp %64 : vector<48x48xf32>
    %cst_22 = arith.constant dense<0.000000e+00> : vector<48xf32>
    %66 = vector.multi_reduction <add>, %65, %cst_22 [1] : vector<48x48xf32> to vector<48xf32>
    %67 = vector.shape_cast %66 : vector<48xf32> to vector<48x1xf32>
    %68 = tpu.reciprocal %67 {approx = true} : vector<48x1xf32> -> vector<48x1xf32>
    %cst_23 = arith.constant dense<0.000000e+00> : vector<48x8xf32>
    %69 = tpu.matmul %65, %56, %cst_23 {dimension_numbers = #tpu.dot_dimension_numbers<[1], [0], [0], [1], [0, 0, 1, 1], [], []>} : vector<48x48xf32>, vector<48x8xf32>, vector<48x8xf32> -> vector<48x8xf32>
    %70 = vector.broadcast %68 : vector<48x1xf32> to vector<48x8xf32>
    %71 = arith.mulf %69, %70 : vector<48x8xf32>
    %72 = vector.extract_strided_slice %17 {offsets = [0, 24], sizes = [48, 8], strides = [1, 1]} : vector<48x96xf32> to vector<48x8xf32>
    %73 = vector.extract_strided_slice %17 {offsets = [0, 56], sizes = [48, 8], strides = [1, 1]} : vector<48x96xf32> to vector<48x8xf32>
    %74 = vector.extract_strided_slice %17 {offsets = [0, 88], sizes = [48, 8], strides = [1, 1]} : vector<48x96xf32> to vector<48x8xf32>
    "tpu.trace_start"() <{level = 10 : i32, message = "qd,kd->qk"}> : () -> ()
    %cst_24 = arith.constant dense<0.000000e+00> : vector<48x48xf32>
    %75 = tpu.matmul %72, %73, %cst_24 {dimension_numbers = #tpu.dot_dimension_numbers<[1], [1], [0], [0], [0, 0, 1, 0], [], []>} : vector<48x8xf32>, vector<48x8xf32>, vector<48x48xf32> -> vector<48x48xf32>
    "tpu.trace_stop"() : () -> ()
    %cst_25 = arith.constant 0.353553385 : f32
    %76 = vector.broadcast %cst_25 : f32 to vector<48x48xf32>
    %77 = arith.mulf %75, %76 : vector<48x48xf32>
    %78 = arith.addf %77, %1 : vector<48x48xf32>
    %cst_26 = arith.constant dense<0xFF800000> : vector<48xf32>
    %79 = vector.multi_reduction <maximumf>, %78, %cst_26 [1] : vector<48x48xf32> to vector<48xf32>
    %80 = vector.shape_cast %79 : vector<48xf32> to vector<48x1xf32>
    %81 = vector.broadcast %80 : vector<48x1xf32> to vector<48x48xf32>
    %82 = arith.subf %78, %81 : vector<48x48xf32>
    %83 = math.exp %82 : vector<48x48xf32>
    %cst_27 = arith.constant dense<0.000000e+00> : vector<48xf32>
    %84 = vector.multi_reduction <add>, %83, %cst_27 [1] : vector<48x48xf32> to vector<48xf32>
    %85 = vector.shape_cast %84 : vector<48xf32> to vector<48x1xf32>
    %86 = tpu.reciprocal %85 {approx = true} : vector<48x1xf32> -> vector<48x1xf32>
    %cst_28 = arith.constant dense<0.000000e+00> : vector<48x8xf32>
    %87 = tpu.matmul %83, %74, %cst_28 {dimension_numbers = #tpu.dot_dimension_numbers<[1], [0], [0], [1], [0, 0, 1, 1], [], []>} : vector<48x48xf32>, vector<48x8xf32>, vector<48x8xf32> -> vector<48x8xf32>
    %88 = vector.broadcast %86 : vector<48x1xf32> to vector<48x8xf32>
    %89 = arith.mulf %87, %88 : vector<48x8xf32>
    %90 = tpu.concatenate %35, %53, %71, %89 in 1 : vector<48x8xf32>, vector<48x8xf32>, vector<48x8xf32>, vector<48x8xf32> -> vector<48x32xf32>
    %91 = arith.truncf %90 : vector<48x32xf32> to vector<48x32xbf16>
    %c0_29 = arith.constant 0 : index
    %c0_30 = arith.constant 0 : index
    %c0_31 = arith.constant 0 : index
    %92 = vector.load %arg4[%c0_29, %c0_30, %c0_31] : memref<2x32x32xbf16, #tpu.memory_space<vmem>>, vector<1x32x32xbf16>
    %93 = vector.shape_cast %92 : vector<1x32x32xbf16> to vector<32x32xbf16>
    %cst_32 = arith.constant dense<0.000000e+00> : vector<48x32xf32>
    %94 = tpu.matmul %91, %93, %cst_32 {dimension_numbers = #tpu.dot_dimension_numbers<[1], [0], [0], [1], [0, 0, 1, 1], [], []>} : vector<48x32xbf16>, vector<32x32xbf16>, vector<48x32xf32> -> vector<48x32xf32>
    %95 = vector.broadcast %5 : vector<1x32xf32> to vector<48x32xf32>
    %96 = arith.addf %94, %95 : vector<48x32xf32>
    %97 = arith.addf %0, %96 : vector<48x32xf32>
    %cst_33 = arith.constant dense<0.000000e+00> : vector<48xf32>
    %98 = vector.multi_reduction <add>, %97, %cst_33 [1] : vector<48x32xf32> to vector<48xf32>
    %99 = vector.shape_cast %98 : vector<48xf32> to vector<48x1xf32>
    %cst_34 = arith.constant 3.200000e+01 : f32
    %100 = vector.broadcast %cst_34 : f32 to vector<48x1xf32>
    %101 = arith.divf %99, %100 : vector<48x1xf32>
    %102 = vector.broadcast %101 : vector<48x1xf32> to vector<48x32xf32>
    %103 = arith.subf %97, %102 : vector<48x32xf32>
    %104 = arith.mulf %103, %103 : vector<48x32xf32>
    %cst_35 = arith.constant dense<0.000000e+00> : vector<48xf32>
    %105 = vector.multi_reduction <add>, %104, %cst_35 [1] : vector<48x32xf32> to vector<48xf32>
    %106 = vector.shape_cast %105 : vector<48xf32> to vector<48x1xf32>
    %cst_36 = arith.constant 3.200000e+01 : f32
    %107 = vector.broadcast %cst_36 : f32 to vector<48x1xf32>
    %108 = arith.divf %106, %107 : vector<48x1xf32>
    %109 = vector.broadcast %101 : vector<48x1xf32> to vector<48x32xf32>
    %110 = arith.subf %97, %109 : vector<48x32xf32>
    %cst_37 = arith.constant 9.99999974E-6 : f32
    %111 = vector.broadcast %cst_37 : f32 to vector<48x1xf32>
    %112 = arith.addf %108, %111 : vector<48x1xf32>
    %113 = math.rsqrt %112 : vector<48x1xf32>
    %114 = vector.broadcast %113 : vector<48x1xf32> to vector<48x32xf32>
    %115 = arith.mulf %110, %114 : vector<48x32xf32>
    %116 = vector.broadcast %6 : vector<1x32xf32> to vector<48x32xf32>
    %117 = arith.mulf %115, %116 : vector<48x32xf32>
    %118 = vector.broadcast %7 : vector<1x32xf32> to vector<48x32xf32>
    %119 = arith.addf %117, %118 : vector<48x32xf32>
    %120 = arith.truncf %119 : vector<48x32xf32> to vector<48x32xbf16>
    %c0_38 = arith.constant 0 : index
    %c0_39 = arith.constant 0 : index
    %c0_40 = arith.constant 0 : index
    %121 = vector.load %arg5[%c0_38, %c0_39, %c0_40] : memref<2x32x128xbf16, #tpu.memory_space<vmem>>, vector<1x32x128xbf16>
    %122 = vector.shape_cast %121 : vector<1x32x128xbf16> to vector<32x128xbf16>
    %cst_41 = arith.constant dense<0.000000e+00> : vector<48x128xf32>
    %123 = tpu.matmul %120, %122, %cst_41 {dimension_numbers = #tpu.dot_dimension_numbers<[1], [0], [0], [1], [0, 0, 1, 1], [], []>} : vector<48x32xbf16>, vector<32x128xbf16>, vector<48x128xf32> -> vector<48x128xf32>
    %124 = vector.broadcast %8 : vector<1x128xf32> to vector<48x128xf32>
    %125 = arith.addf %123, %124 : vector<48x128xf32>
    %cst_42 = arith.constant 0.000000e+00 : f32
    %126 = vector.broadcast %cst_42 : f32 to vector<48x128xf32>
    %127 = arith.maximumf %125, %126 : vector<48x128xf32>
    %128 = arith.truncf %127 : vector<48x128xf32> to vector<48x128xbf16>
    %c0_43 = arith.constant 0 : index
    %c0_44 = arith.constant 0 : index
    %c0_45 = arith.constant 0 : index
    %129 = vector.load %arg6[%c0_43, %c0_44, %c0_45] : memref<2x128x32xbf16, #tpu.memory_space<vmem>>, vector<1x128x32xbf16>
    %130 = vector.shape_cast %129 : vector<1x128x32xbf16> to vector<128x32xbf16>
    %cst_46 = arith.constant dense<0.000000e+00> : vector<48x32xf32>
    %131 = tpu.matmul %128, %130, %cst_46 {dimension_numbers = #tpu.dot_dimension_numbers<[1], [0], [0], [1], [0, 0, 1, 1], [], []>} : vector<48x128xbf16>, vector<128x32xbf16>, vector<48x32xf32> -> vector<48x32xf32>
    %132 = vector.broadcast %9 : vector<1x32xf32> to vector<48x32xf32>
    %133 = arith.addf %131, %132 : vector<48x32xf32>
    %134 = arith.addf %119, %133 : vector<48x32xf32>
    %cst_47 = arith.constant dense<0.000000e+00> : vector<48xf32>
    %135 = vector.multi_reduction <add>, %134, %cst_47 [1] : vector<48x32xf32> to vector<48xf32>
    %136 = vector.shape_cast %135 : vector<48xf32> to vector<48x1xf32>
    %cst_48 = arith.constant 3.200000e+01 : f32
    %137 = vector.broadcast %cst_48 : f32 to vector<48x1xf32>
    %138 = arith.divf %136, %137 : vector<48x1xf32>
    %139 = vector.broadcast %138 : vector<48x1xf32> to vector<48x32xf32>
    %140 = arith.subf %134, %139 : vector<48x32xf32>
    %141 = arith.mulf %140, %140 : vector<48x32xf32>
    %cst_49 = arith.constant dense<0.000000e+00> : vector<48xf32>
    %142 = vector.multi_reduction <add>, %141, %cst_49 [1] : vector<48x32xf32> to vector<48xf32>
    %143 = vector.shape_cast %142 : vector<48xf32> to vector<48x1xf32>
    %cst_50 = arith.constant 3.200000e+01 : f32
    %144 = vector.broadcast %cst_50 : f32 to vector<48x1xf32>
    %145 = arith.divf %143, %144 : vector<48x1xf32>
    %146 = vector.broadcast %138 : vector<48x1xf32> to vector<48x32xf32>
    %147 = arith.subf %134, %146 : vector<48x32xf32>
    %cst_51 = arith.constant 9.99999974E-6 : f32
    %148 = vector.broadcast %cst_51 : f32 to vector<48x1xf32>
    %149 = arith.addf %145, %148 : vector<48x1xf32>
    %150 = math.rsqrt %149 : vector<48x1xf32>
    %151 = vector.broadcast %150 : vector<48x1xf32> to vector<48x32xf32>
    %152 = arith.mulf %147, %151 : vector<48x32xf32>
    %153 = vector.broadcast %10 : vector<1x32xf32> to vector<48x32xf32>
    %154 = arith.mulf %152, %153 : vector<48x32xf32>
    %155 = vector.broadcast %11 : vector<1x32xf32> to vector<48x32xf32>
    %156 = arith.addf %154, %155 : vector<48x32xf32>
    %c1 = arith.constant 1 : index
    %c0_52 = arith.constant 0 : index
    %c0_53 = arith.constant 0 : index
    %157 = vector.load %arg7[%c1, %c0_52, %c0_53] : memref<2x8x128xf32, #tpu.memory_space<vmem>>, vector<1x8x128xf32>
    %158 = vector.shape_cast %157 : vector<1x8x128xf32> to vector<8x128xf32>
    %159 = vector.extract_strided_slice %158 {offsets = [0, 0], sizes = [1, 96], strides = [1, 1]} : vector<8x128xf32> to vector<1x96xf32>
    %160 = vector.extract_strided_slice %158 {offsets = [1, 0], sizes = [1, 32], strides = [1, 1]} : vector<8x128xf32> to vector<1x32xf32>
    %161 = vector.extract_strided_slice %158 {offsets = [2, 0], sizes = [1, 32], strides = [1, 1]} : vector<8x128xf32> to vector<1x32xf32>
    %162 = vector.extract_strided_slice %158 {offsets = [3, 0], sizes = [1, 32], strides = [1, 1]} : vector<8x128xf32> to vector<1x32xf32>
    %163 = vector.extract_strided_slice %158 {offsets = [4, 0], sizes = [1, 128], strides = [1, 1]} : vector<8x128xf32> to vector<1x128xf32>
    %164 = vector.extract_strided_slice %158 {offsets = [5, 0], sizes = [1, 32], strides = [1, 1]} : vector<8x128xf32> to vector<1x32xf32>
    %165 = vector.extract_strided_slice %158 {offsets = [6, 0], sizes = [1, 32], strides = [1, 1]} : vector<8x128xf32> to vector<1x32xf32>
    %166 = vector.extract_strided_slice %158 {offsets = [7, 0], sizes = [1, 32], strides = [1, 1]} : vector<8x128xf32> to vector<1x32xf32>
    %167 = arith.truncf %156 : vector<48x32xf32> to vector<48x32xbf16>
    %c1_54 = arith.constant 1 : index
    %c0_55 = arith.constant 0 : index
    %c0_56 = arith.constant 0 : index
    %168 = vector.load %arg3[%c1_54, %c0_55, %c0_56] : memref<2x32x96xbf16, #tpu.memory_space<vmem>>, vector<1x32x96xbf16>
    %169 = vector.shape_cast %168 : vector<1x32x96xbf16> to vector<32x96xbf16>
    %cst_57 = arith.constant dense<0.000000e+00> : vector<48x96xf32>
    %170 = tpu.matmul %167, %169, %cst_57 {dimension_numbers = #tpu.dot_dimension_numbers<[1], [0], [0], [1], [0, 0, 1, 1], [], []>} : vector<48x32xbf16>, vector<32x96xbf16>, vector<48x96xf32> -> vector<48x96xf32>
    %171 = vector.broadcast %159 : vector<1x96xf32> to vector<48x96xf32>
    %172 = arith.addf %170, %171 : vector<48x96xf32>
    %173 = vector.extract_strided_slice %172 {offsets = [0, 0], sizes = [48, 8], strides = [1, 1]} : vector<48x96xf32> to vector<48x8xf32>
    %174 = vector.extract_strided_slice %172 {offsets = [0, 32], sizes = [48, 8], strides = [1, 1]} : vector<48x96xf32> to vector<48x8xf32>
    %175 = vector.extract_strided_slice %172 {offsets = [0, 64], sizes = [48, 8], strides = [1, 1]} : vector<48x96xf32> to vector<48x8xf32>
    "tpu.trace_start"() <{level = 10 : i32, message = "qd,kd->qk"}> : () -> ()
    %cst_58 = arith.constant dense<0.000000e+00> : vector<48x48xf32>
    %176 = tpu.matmul %173, %174, %cst_58 {dimension_numbers = #tpu.dot_dimension_numbers<[1], [1], [0], [0], [0, 0, 1, 0], [], []>} : vector<48x8xf32>, vector<48x8xf32>, vector<48x48xf32> -> vector<48x48xf32>
    "tpu.trace_stop"() : () -> ()
    %cst_59 = arith.constant 0.353553385 : f32
    %177 = vector.broadcast %cst_59 : f32 to vector<48x48xf32>
    %178 = arith.mulf %176, %177 : vector<48x48xf32>
    %179 = arith.addf %178, %1 : vector<48x48xf32>
    %cst_60 = arith.constant dense<0xFF800000> : vector<48xf32>
    %180 = vector.multi_reduction <maximumf>, %179, %cst_60 [1] : vector<48x48xf32> to vector<48xf32>
    %181 = vector.shape_cast %180 : vector<48xf32> to vector<48x1xf32>
    %182 = vector.broadcast %181 : vector<48x1xf32> to vector<48x48xf32>
    %183 = arith.subf %179, %182 : vector<48x48xf32>
    %184 = math.exp %183 : vector<48x48xf32>
    %cst_61 = arith.constant dense<0.000000e+00> : vector<48xf32>
    %185 = vector.multi_reduction <add>, %184, %cst_61 [1] : vector<48x48xf32> to vector<48xf32>
    %186 = vector.shape_cast %185 : vector<48xf32> to vector<48x1xf32>
    %187 = tpu.reciprocal %186 {approx = true} : vector<48x1xf32> -> vector<48x1xf32>
    %cst_62 = arith.constant dense<0.000000e+00> : vector<48x8xf32>
    %188 = tpu.matmul %184, %175, %cst_62 {dimension_numbers = #tpu.dot_dimension_numbers<[1], [0], [0], [1], [0, 0, 1, 1], [], []>} : vector<48x48xf32>, vector<48x8xf32>, vector<48x8xf32> -> vector<48x8xf32>
    %189 = vector.broadcast %187 : vector<48x1xf32> to vector<48x8xf32>
    %190 = arith.mulf %188, %189 : vector<48x8xf32>
    %191 = vector.extract_strided_slice %172 {offsets = [0, 8], sizes = [48, 8], strides = [1, 1]} : vector<48x96xf32> to vector<48x8xf32>
    %192 = vector.extract_strided_slice %172 {offsets = [0, 40], sizes = [48, 8], strides = [1, 1]} : vector<48x96xf32> to vector<48x8xf32>
    %193 = vector.extract_strided_slice %172 {offsets = [0, 72], sizes = [48, 8], strides = [1, 1]} : vector<48x96xf32> to vector<48x8xf32>
    "tpu.trace_start"() <{level = 10 : i32, message = "qd,kd->qk"}> : () -> ()
    %cst_63 = arith.constant dense<0.000000e+00> : vector<48x48xf32>
    %194 = tpu.matmul %191, %192, %cst_63 {dimension_numbers = #tpu.dot_dimension_numbers<[1], [1], [0], [0], [0, 0, 1, 0], [], []>} : vector<48x8xf32>, vector<48x8xf32>, vector<48x48xf32> -> vector<48x48xf32>
    "tpu.trace_stop"() : () -> ()
    %cst_64 = arith.constant 0.353553385 : f32
    %195 = vector.broadcast %cst_64 : f32 to vector<48x48xf32>
    %196 = arith.mulf %194, %195 : vector<48x48xf32>
    %197 = arith.addf %196, %1 : vector<48x48xf32>
    %cst_65 = arith.constant dense<0xFF800000> : vector<48xf32>
    %198 = vector.multi_reduction <maximumf>, %197, %cst_65 [1] : vector<48x48xf32> to vector<48xf32>
    %199 = vector.shape_cast %198 : vector<48xf32> to vector<48x1xf32>
    %200 = vector.broadcast %199 : vector<48x1xf32> to vector<48x48xf32>
    %201 = arith.subf %197, %200 : vector<48x48xf32>
    %202 = math.exp %201 : vector<48x48xf32>
    %cst_66 = arith.constant dense<0.000000e+00> : vector<48xf32>
    %203 = vector.multi_reduction <add>, %202, %cst_66 [1] : vector<48x48xf32> to vector<48xf32>
    %204 = vector.shape_cast %203 : vector<48xf32> to vector<48x1xf32>
    %205 = tpu.reciprocal %204 {approx = true} : vector<48x1xf32> -> vector<48x1xf32>
    %cst_67 = arith.constant dense<0.000000e+00> : vector<48x8xf32>
    %206 = tpu.matmul %202, %193, %cst_67 {dimension_numbers = #tpu.dot_dimension_numbers<[1], [0], [0], [1], [0, 0, 1, 1], [], []>} : vector<48x48xf32>, vector<48x8xf32>, vector<48x8xf32> -> vector<48x8xf32>
    %207 = vector.broadcast %205 : vector<48x1xf32> to vector<48x8xf32>
    %208 = arith.mulf %206, %207 : vector<48x8xf32>
    %209 = vector.extract_strided_slice %172 {offsets = [0, 16], sizes = [48, 8], strides = [1, 1]} : vector<48x96xf32> to vector<48x8xf32>
    %210 = vector.extract_strided_slice %172 {offsets = [0, 48], sizes = [48, 8], strides = [1, 1]} : vector<48x96xf32> to vector<48x8xf32>
    %211 = vector.extract_strided_slice %172 {offsets = [0, 80], sizes = [48, 8], strides = [1, 1]} : vector<48x96xf32> to vector<48x8xf32>
    "tpu.trace_start"() <{level = 10 : i32, message = "qd,kd->qk"}> : () -> ()
    %cst_68 = arith.constant dense<0.000000e+00> : vector<48x48xf32>
    %212 = tpu.matmul %209, %210, %cst_68 {dimension_numbers = #tpu.dot_dimension_numbers<[1], [1], [0], [0], [0, 0, 1, 0], [], []>} : vector<48x8xf32>, vector<48x8xf32>, vector<48x48xf32> -> vector<48x48xf32>
    "tpu.trace_stop"() : () -> ()
    %cst_69 = arith.constant 0.353553385 : f32
    %213 = vector.broadcast %cst_69 : f32 to vector<48x48xf32>
    %214 = arith.mulf %212, %213 : vector<48x48xf32>
    %215 = arith.addf %214, %1 : vector<48x48xf32>
    %cst_70 = arith.constant dense<0xFF800000> : vector<48xf32>
    %216 = vector.multi_reduction <maximumf>, %215, %cst_70 [1] : vector<48x48xf32> to vector<48xf32>
    %217 = vector.shape_cast %216 : vector<48xf32> to vector<48x1xf32>
    %218 = vector.broadcast %217 : vector<48x1xf32> to vector<48x48xf32>
    %219 = arith.subf %215, %218 : vector<48x48xf32>
    %220 = math.exp %219 : vector<48x48xf32>
    %cst_71 = arith.constant dense<0.000000e+00> : vector<48xf32>
    %221 = vector.multi_reduction <add>, %220, %cst_71 [1] : vector<48x48xf32> to vector<48xf32>
    %222 = vector.shape_cast %221 : vector<48xf32> to vector<48x1xf32>
    %223 = tpu.reciprocal %222 {approx = true} : vector<48x1xf32> -> vector<48x1xf32>
    %cst_72 = arith.constant dense<0.000000e+00> : vector<48x8xf32>
    %224 = tpu.matmul %220, %211, %cst_72 {dimension_numbers = #tpu.dot_dimension_numbers<[1], [0], [0], [1], [0, 0, 1, 1], [], []>} : vector<48x48xf32>, vector<48x8xf32>, vector<48x8xf32> -> vector<48x8xf32>
    %225 = vector.broadcast %223 : vector<48x1xf32> to vector<48x8xf32>
    %226 = arith.mulf %224, %225 : vector<48x8xf32>
    %227 = vector.extract_strided_slice %172 {offsets = [0, 24], sizes = [48, 8], strides = [1, 1]} : vector<48x96xf32> to vector<48x8xf32>
    %228 = vector.extract_strided_slice %172 {offsets = [0, 56], sizes = [48, 8], strides = [1, 1]} : vector<48x96xf32> to vector<48x8xf32>
    %229 = vector.extract_strided_slice %172 {offsets = [0, 88], sizes = [48, 8], strides = [1, 1]} : vector<48x96xf32> to vector<48x8xf32>
    "tpu.trace_start"() <{level = 10 : i32, message = "qd,kd->qk"}> : () -> ()
    %cst_73 = arith.constant dense<0.000000e+00> : vector<48x48xf32>
    %230 = tpu.matmul %227, %228, %cst_73 {dimension_numbers = #tpu.dot_dimension_numbers<[1], [1], [0], [0], [0, 0, 1, 0], [], []>} : vector<48x8xf32>, vector<48x8xf32>, vector<48x48xf32> -> vector<48x48xf32>
    "tpu.trace_stop"() : () -> ()
    %cst_74 = arith.constant 0.353553385 : f32
    %231 = vector.broadcast %cst_74 : f32 to vector<48x48xf32>
    %232 = arith.mulf %230, %231 : vector<48x48xf32>
    %233 = arith.addf %232, %1 : vector<48x48xf32>
    %cst_75 = arith.constant dense<0xFF800000> : vector<48xf32>
    %234 = vector.multi_reduction <maximumf>, %233, %cst_75 [1] : vector<48x48xf32> to vector<48xf32>
    %235 = vector.shape_cast %234 : vector<48xf32> to vector<48x1xf32>
    %236 = vector.broadcast %235 : vector<48x1xf32> to vector<48x48xf32>
    %237 = arith.subf %233, %236 : vector<48x48xf32>
    %238 = math.exp %237 : vector<48x48xf32>
    %cst_76 = arith.constant dense<0.000000e+00> : vector<48xf32>
    %239 = vector.multi_reduction <add>, %238, %cst_76 [1] : vector<48x48xf32> to vector<48xf32>
    %240 = vector.shape_cast %239 : vector<48xf32> to vector<48x1xf32>
    %241 = tpu.reciprocal %240 {approx = true} : vector<48x1xf32> -> vector<48x1xf32>
    %cst_77 = arith.constant dense<0.000000e+00> : vector<48x8xf32>
    %242 = tpu.matmul %238, %229, %cst_77 {dimension_numbers = #tpu.dot_dimension_numbers<[1], [0], [0], [1], [0, 0, 1, 1], [], []>} : vector<48x48xf32>, vector<48x8xf32>, vector<48x8xf32> -> vector<48x8xf32>
    %243 = vector.broadcast %241 : vector<48x1xf32> to vector<48x8xf32>
    %244 = arith.mulf %242, %243 : vector<48x8xf32>
    %245 = tpu.concatenate %190, %208, %226, %244 in 1 : vector<48x8xf32>, vector<48x8xf32>, vector<48x8xf32>, vector<48x8xf32> -> vector<48x32xf32>
    %246 = arith.truncf %245 : vector<48x32xf32> to vector<48x32xbf16>
    %c1_78 = arith.constant 1 : index
    %c0_79 = arith.constant 0 : index
    %c0_80 = arith.constant 0 : index
    %247 = vector.load %arg4[%c1_78, %c0_79, %c0_80] : memref<2x32x32xbf16, #tpu.memory_space<vmem>>, vector<1x32x32xbf16>
    %248 = vector.shape_cast %247 : vector<1x32x32xbf16> to vector<32x32xbf16>
    %cst_81 = arith.constant dense<0.000000e+00> : vector<48x32xf32>
    %249 = tpu.matmul %246, %248, %cst_81 {dimension_numbers = #tpu.dot_dimension_numbers<[1], [0], [0], [1], [0, 0, 1, 1], [], []>} : vector<48x32xbf16>, vector<32x32xbf16>, vector<48x32xf32> -> vector<48x32xf32>
    %250 = vector.broadcast %160 : vector<1x32xf32> to vector<48x32xf32>
    %251 = arith.addf %249, %250 : vector<48x32xf32>
    %252 = arith.addf %156, %251 : vector<48x32xf32>
    %cst_82 = arith.constant dense<0.000000e+00> : vector<48xf32>
    %253 = vector.multi_reduction <add>, %252, %cst_82 [1] : vector<48x32xf32> to vector<48xf32>
    %254 = vector.shape_cast %253 : vector<48xf32> to vector<48x1xf32>
    %cst_83 = arith.constant 3.200000e+01 : f32
    %255 = vector.broadcast %cst_83 : f32 to vector<48x1xf32>
    %256 = arith.divf %254, %255 : vector<48x1xf32>
    %257 = vector.broadcast %256 : vector<48x1xf32> to vector<48x32xf32>
    %258 = arith.subf %252, %257 : vector<48x32xf32>
    %259 = arith.mulf %258, %258 : vector<48x32xf32>
    %cst_84 = arith.constant dense<0.000000e+00> : vector<48xf32>
    %260 = vector.multi_reduction <add>, %259, %cst_84 [1] : vector<48x32xf32> to vector<48xf32>
    %261 = vector.shape_cast %260 : vector<48xf32> to vector<48x1xf32>
    %cst_85 = arith.constant 3.200000e+01 : f32
    %262 = vector.broadcast %cst_85 : f32 to vector<48x1xf32>
    %263 = arith.divf %261, %262 : vector<48x1xf32>
    %264 = vector.broadcast %256 : vector<48x1xf32> to vector<48x32xf32>
    %265 = arith.subf %252, %264 : vector<48x32xf32>
    %cst_86 = arith.constant 9.99999974E-6 : f32
    %266 = vector.broadcast %cst_86 : f32 to vector<48x1xf32>
    %267 = arith.addf %263, %266 : vector<48x1xf32>
    %268 = math.rsqrt %267 : vector<48x1xf32>
    %269 = vector.broadcast %268 : vector<48x1xf32> to vector<48x32xf32>
    %270 = arith.mulf %265, %269 : vector<48x32xf32>
    %271 = vector.broadcast %161 : vector<1x32xf32> to vector<48x32xf32>
    %272 = arith.mulf %270, %271 : vector<48x32xf32>
    %273 = vector.broadcast %162 : vector<1x32xf32> to vector<48x32xf32>
    %274 = arith.addf %272, %273 : vector<48x32xf32>
    %275 = arith.truncf %274 : vector<48x32xf32> to vector<48x32xbf16>
    %c1_87 = arith.constant 1 : index
    %c0_88 = arith.constant 0 : index
    %c0_89 = arith.constant 0 : index
    %276 = vector.load %arg5[%c1_87, %c0_88, %c0_89] : memref<2x32x128xbf16, #tpu.memory_space<vmem>>, vector<1x32x128xbf16>
    %277 = vector.shape_cast %276 : vector<1x32x128xbf16> to vector<32x128xbf16>
    %cst_90 = arith.constant dense<0.000000e+00> : vector<48x128xf32>
    %278 = tpu.matmul %275, %277, %cst_90 {dimension_numbers = #tpu.dot_dimension_numbers<[1], [0], [0], [1], [0, 0, 1, 1], [], []>} : vector<48x32xbf16>, vector<32x128xbf16>, vector<48x128xf32> -> vector<48x128xf32>
    %279 = vector.broadcast %163 : vector<1x128xf32> to vector<48x128xf32>
    %280 = arith.addf %278, %279 : vector<48x128xf32>
    %cst_91 = arith.constant 0.000000e+00 : f32
    %281 = vector.broadcast %cst_91 : f32 to vector<48x128xf32>
    %282 = arith.maximumf %280, %281 : vector<48x128xf32>
    %283 = arith.truncf %282 : vector<48x128xf32> to vector<48x128xbf16>
    %c1_92 = arith.constant 1 : index
    %c0_93 = arith.constant 0 : index
    %c0_94 = arith.constant 0 : index
    %284 = vector.load %arg6[%c1_92, %c0_93, %c0_94] : memref<2x128x32xbf16, #tpu.memory_space<vmem>>, vector<1x128x32xbf16>
    %285 = vector.shape_cast %284 : vector<1x128x32xbf16> to vector<128x32xbf16>
    %cst_95 = arith.constant dense<0.000000e+00> : vector<48x32xf32>
    %286 = tpu.matmul %283, %285, %cst_95 {dimension_numbers = #tpu.dot_dimension_numbers<[1], [0], [0], [1], [0, 0, 1, 1], [], []>} : vector<48x128xbf16>, vector<128x32xbf16>, vector<48x32xf32> -> vector<48x32xf32>
    %287 = vector.broadcast %164 : vector<1x32xf32> to vector<48x32xf32>
    %288 = arith.addf %286, %287 : vector<48x32xf32>
    %289 = arith.addf %274, %288 : vector<48x32xf32>
    %cst_96 = arith.constant dense<0.000000e+00> : vector<48xf32>
    %290 = vector.multi_reduction <add>, %289, %cst_96 [1] : vector<48x32xf32> to vector<48xf32>
    %291 = vector.shape_cast %290 : vector<48xf32> to vector<48x1xf32>
    %cst_97 = arith.constant 3.200000e+01 : f32
    %292 = vector.broadcast %cst_97 : f32 to vector<48x1xf32>
    %293 = arith.divf %291, %292 : vector<48x1xf32>
    %294 = vector.broadcast %293 : vector<48x1xf32> to vector<48x32xf32>
    %295 = arith.subf %289, %294 : vector<48x32xf32>
    %296 = arith.mulf %295, %295 : vector<48x32xf32>
    %cst_98 = arith.constant dense<0.000000e+00> : vector<48xf32>
    %297 = vector.multi_reduction <add>, %296, %cst_98 [1] : vector<48x32xf32> to vector<48xf32>
    %298 = vector.shape_cast %297 : vector<48xf32> to vector<48x1xf32>
    %cst_99 = arith.constant 3.200000e+01 : f32
    %299 = vector.broadcast %cst_99 : f32 to vector<48x1xf32>
    %300 = arith.divf %298, %299 : vector<48x1xf32>
    %301 = vector.broadcast %293 : vector<48x1xf32> to vector<48x32xf32>
    %302 = arith.subf %289, %301 : vector<48x32xf32>
    %cst_100 = arith.constant 9.99999974E-6 : f32
    %303 = vector.broadcast %cst_100 : f32 to vector<48x1xf32>
    %304 = arith.addf %300, %303 : vector<48x1xf32>
    %305 = math.rsqrt %304 : vector<48x1xf32>
    %306 = vector.broadcast %305 : vector<48x1xf32> to vector<48x32xf32>
    %307 = arith.mulf %302, %306 : vector<48x32xf32>
    %308 = vector.broadcast %165 : vector<1x32xf32> to vector<48x32xf32>
    %309 = arith.mulf %307, %308 : vector<48x32xf32>
    %310 = vector.broadcast %166 : vector<1x32xf32> to vector<48x32xf32>
    %311 = arith.addf %309, %310 : vector<48x32xf32>
    %c0_101 = arith.constant 0 : index
    %c0_102 = arith.constant 0 : index
    %312 = vector.load %arg8[%c0_101, %c0_102] : memref<48x32xf32, #tpu.memory_space<vmem>>, vector<48x32xf32>
    tpu.vector_store %arg8[%c0_101, %c0_102], %311 {strides = array<i32>} : memref<48x32xf32, #tpu.memory_space<vmem>>, vector<48x32xf32>,
    return
  }
  func.func @transform_0(%arg0: i32) -> (i32, i32) {
    %c0_i32 = arith.constant 0 : i32
    %c0_i32_0 = arith.constant 0 : i32
    return %arg0, %c0_i32 : i32, i32
  }
  func.func @transform_1(%arg0: i32) -> (i32, i32) {
    %c0_i32 = arith.constant 0 : i32
    %c0_i32_0 = arith.constant 0 : i32
    %c0_i32_1 = arith.constant 0 : i32
    return %c0_i32, %c0_i32_0 : i32, i32
  }
  func.func @transform_2(%arg0: i32) -> (i32, i32, i32) {
    %c0_i32 = arith.constant 0 : i32
    %c0_i32_0 = arith.constant 0 : i32
    %c0_i32_1 = arith.constant 0 : i32
    %c0_i32_2 = arith.constant 0 : i32
    return %c0_i32, %c0_i32_0, %c0_i32_1 : i32, i32, i32
  }
  func.func @transform_3(%arg0: i32) -> (i32, i32, i32) {
    %c0_i32 = arith.constant 0 : i32
    %c0_i32_0 = arith.constant 0 : i32
    %c0_i32_1 = arith.constant 0 : i32
    %c0_i32_2 = arith.constant 0 : i32
    return %c0_i32, %c0_i32_0, %c0_i32_1 : i32, i32, i32
  }
  func.func @transform_4(%arg0: i32) -> (i32, i32, i32) {
    %c0_i32 = arith.constant 0 : i32
    %c0_i32_0 = arith.constant 0 : i32
    %c0_i32_1 = arith.constant 0 : i32
    %c0_i32_2 = arith.constant 0 : i32
    return %c0_i32, %c0_i32_0, %c0_i32_1 : i32, i32, i32
  }
  func.func @transform_5(%arg0: i32) -> (i32, i32, i32) {
    %c0_i32 = arith.constant 0 : i32
    %c0_i32_0 = arith.constant 0 : i32
    %c0_i32_1 = arith.constant 0 : i32
    %c0_i32_2 = arith.constant 0 : i32
    return %c0_i32, %c0_i32_0, %c0_i32_1 : i32, i32, i32
  }
  func.func @transform_6(%arg0: i32) -> (i32, i32, i32) {
    %c0_i32 = arith.constant 0 : i32
    %c0_i32_0 = arith.constant 0 : i32
    %c0_i32_1 = arith.constant 0 : i32
    %c0_i32_2 = arith.constant 0 : i32
    return %c0_i32, %c0_i32_0, %c0_i32_1 : i32, i32, i32
  }
  func.func @transform_7(%arg0: i32) -> (i32, i32) {
    %c0_i32 = arith.constant 0 : i32
    %c0_i32_0 = arith.constant 0 : i32
    return %arg0, %c0_i32 : i32, i32
  }
}

</mosaic_0001>

<llo_original>
// kernel: backbone_forward.2
$region0: #{backbone_forward.2}
  #allocation0 [shape = 'u32[]', space=smem, size = 0x4, offset = 0x4, fixed_abs, tag = 'smem constant byte address 0x4 - core index']
  #allocation1 [shape = 'u32[144,128]{1,0:T(1,128)}', space=vmem, size = 0x12000, scoped, tag = 'internal scratch']
  %s0 = inlined_call_operand.vmem [shape: f32[96,32], index: 0, kind: input, shape index: {}]
  %s1 = inlined_call_operand.vmem [shape: f32[48,48], index: 1, kind: input, shape index: {}]
  %s2 = inlined_call_operand.vmem [shape: bf16[2,32,96], index: 2, kind: input, shape index: {}]
  %s3 = inlined_call_operand.vmem [shape: bf16[2,32,32], index: 3, kind: input, shape index: {}]
  %s4 = inlined_call_operand.vmem [shape: bf16[2,32,128], index: 4, kind: input, shape index: {}]
  %s5 = inlined_call_operand.vmem [shape: bf16[2,128,32], index: 5, kind: input, shape index: {}]
  %s6 = inlined_call_operand.vmem [shape: f32[2,8,128], index: 6, kind: input, shape index: {}]
  %s7 = inlined_call_operand.vmem [shape: f32[96,32], index: 7, kind: output, shape index: {}]
  %s8 = sld [smem:[#allocation0]]
  $region61: #{backbone_forward.2} parent=0
    _
  %s10 = ssub.s32 1, %s8
  %s11 = scalar_select 0, %s10, %s8
  loop: start=0, step=1, limit=4
  $region2: #{backbone_forward.2} parent=0 // loop_pre_header
    _
  $region3: #{backbone_forward.2} parent=0 // loop_header
    %s13 = sphi 0, %s17
    %p14 = scmp.ge.s32.totalorder %s13, 4
    %s23 = sphi 0, %s25
    %s26 = sphi 0, %s23
    %s27 = sphi 0, %s26
    %s43 = sphi 0, %s27
    %s47 = sphi 0, %s47
    %s49 = sphi 0, %s47
    %s50 = sphi 0, %s49
    %s64 = sphi 0, %s50
    %s68 = sphi 0, %s68
    %s70 = sphi 0, %s68
    %s71 = sphi 0, %s70
    %s85 = sphi 0, %s71
    %s89 = sphi 0, %s89
    %s91 = sphi 0, %s89
    %s92 = sphi 0, %s91
    %s106 = sphi 0, %s92
    %s110 = sphi 0, %s110
    %s112 = sphi 0, %s110
    %s113 = sphi 0, %s112
    %s127 = sphi 0, %s113
    %s131 = sphi 0, %s131
    %s133 = sphi 0, %s131
    %s134 = sphi 0, %s133
    %s148 = sphi 0, %s134
    %s152 = sphi 0, %s152
    %s154 = sphi 0, %s152
    %s155 = sphi 0, %s154
    %s169 = sphi 0, %s155
    %s175 = sphi 0, %s177
    %s178 = sphi 0, %s175
    %s179 = sphi 0, %s178
    %s195 = sphi 0, %s179
  $region4: #{backbone_forward.2} parent=0 // loop_header_branch
    %16 = sbr.rel (%p14) target = $region8
  $region5: #{backbone_forward.2} parent=0 // loop_body
    %s18 = ssub.s32 %s13, 1
    %s19 = ssub.s32 %s13, 2
    %s20 = sadd.s32 %s13, 1
    %s21 = ssub.s32 %s13, %s20
    %p22 = scmp.eq.s32.totalorder %s21, 0
    %s24 = sadd.s32 %s23, 1
    %s25 = scalar_select %p22, %s23, %s24
    %p28 = pneg %p22
    %p29 = scmp.eq.s32.totalorder %s13, 1
    %p30 = por %p28, %p29
    %p31 = scmp.ne.s32.totalorder %s23, %s26
    %p32 = scmp.eq.s32.totalorder %s13, 0
    %p33 = por %p31, %p32
    %p34 = scmp.ne.s32.totalorder %s23, %s26
    %p35 = scmp.eq.s32.totalorder %s18, 1
    %p36 = por %p34, %p35
    %p37 = scmp.ne.s32.totalorder %s26, %s27
    %p38 = scmp.eq.s32.totalorder %s18, 0
    %p39 = por %p37, %p38
    %p40 = scmp.ne.s32.totalorder %s26, %s27
    %p41 = scmp.eq.s32.totalorder %s19, 1
    %p42 = por %p40, %p41
    %p44 = scmp.ne.s32.totalorder %s27, %s43
    %p45 = scmp.eq.s32.totalorder %s19, 0
    %p46 = por %p44, %p45
    %s48 = sadd.s32 %s47, 1
    %p51 = scmp.eq.s32.totalorder %s13, 1
    %p52 = scmp.ne.s32.totalorder %s47, %s49
    %p53 = scmp.eq.s32.totalorder %s13, 0
    %p54 = por %p52, %p53
    %p55 = scmp.ne.s32.totalorder %s47, %s49
    %p56 = scmp.eq.s32.totalorder %s18, 1
    %p57 = por %p55, %p56
    %p58 = scmp.ne.s32.totalorder %s49, %s50
    %p59 = scmp.eq.s32.totalorder %s18, 0
    %p60 = por %p58, %p59
    %p61 = scmp.ne.s32.totalorder %s49, %s50
    %p62 = scmp.eq.s32.totalorder %s19, 1
    %p63 = por %p61, %p62
    %p65 = scmp.ne.s32.totalorder %s50, %s64
    %p66 = scmp.eq.s32.totalorder %s19, 0
    %p67 = por %p65, %p66
    %s69 = sadd.s32 %s68, 1
    %p72 = scmp.eq.s32.totalorder %s13, 1
    %p73 = scmp.ne.s32.totalorder %s68, %s70
    %p74 = scmp.eq.s32.totalorder %s13, 0
    %p75 = por %p73, %p74
    %p76 = scmp.ne.s32.totalorder %s68, %s70
    %p77 = scmp.eq.s32.totalorder %s18, 1
    %p78 = por %p76, %p77
    %p79 = scmp.ne.s32.totalorder %s70, %s71
    %p80 = scmp.eq.s32.totalorder %s18, 0
    %p81 = por %p79, %p80
    %p82 = scmp.ne.s32.totalorder %s70, %s71
    %p83 = scmp.eq.s32.totalorder %s19, 1
    %p84 = por %p82, %p83
    %p86 = scmp.ne.s32.totalorder %s71, %s85
    %p87 = scmp.eq.s32.totalorder %s19, 0
    %p88 = por %p86, %p87
    %s90 = sadd.s32 %s89, 1
    %p93 = scmp.eq.s32.totalorder %s13, 1
    %p94 = scmp.ne.s32.totalorder %s89, %s91
    %p95 = scmp.eq.s32.totalorder %s13, 0
    %p96 = por %p94, %p95
    %p97 = scmp.ne.s32.totalorder %s89, %s91
    %p98 = scmp.eq.s32.totalorder %s18, 1
    %p99 = por %p97, %p98
    %p100 = scmp.ne.s32.totalorder %s91, %s92
    %p101 = scmp.eq.s32.totalorder %s18, 0
    %p102 = por %p100, %p101
    %p103 = scmp.ne.s32.totalorder %s91, %s92
    %p104 = scmp.eq.s32.totalorder %s19, 1
    %p105 = por %p103, %p104
    %p107 = scmp.ne.s32.totalorder %s92, %s106
    %p108 = scmp.eq.s32.totalorder %s19, 0
    %p109 = por %p107, %p108
    %s111 = sadd.s32 %s110, 1
    %p114 = scmp.eq.s32.totalorder %s13, 1
    %p115 = scmp.ne.s32.totalorder %s110, %s112
    %p116 = scmp.eq.s32.totalorder %s13, 0
    %p117 = por %p115, %p116
    %p118 = scmp.ne.s32.totalorder %s110, %s112
    %p119 = scmp.eq.s32.totalorder %s18, 1
    %p120 = por %p118, %p119
    %p121 = scmp.ne.s32.totalorder %s112, %s113
    %p122 = scmp.eq.s32.totalorder %s18, 0
    %p123 = por %p121, %p122
    %p124 = scmp.ne.s32.totalorder %s112, %s113
    %p125 = scmp.eq.s32.totalorder %s19, 1
    %p126 = por %p124, %p125
    %p128 = scmp.ne.s32.totalorder %s113, %s127
    %p129 = scmp.eq.s32.totalorder %s19, 0
    %p130 = por %p128, %p129
    %s132 = sadd.s32 %s131, 1
    %p135 = scmp.eq.s32.totalorder %s13, 1
    %p136 = scmp.ne.s32.totalorder %s131, %s133
    %p137 = scmp.eq.s32.totalorder %s13, 0
    %p138 = por %p136, %p137
    %p139 = scmp.ne.s32.totalorder %s131, %s133
    %p140 = scmp.eq.s32.totalorder %s18, 1
    %p141 = por %p139, %p140
    %p142 = scmp.ne.s32.totalorder %s133, %s134
    %p143 = scmp.eq.s32.totalorder %s18, 0
    %p144 = por %p142, %p143
    %p145 = scmp.ne.s32.totalorder %s133, %s134
    %p146 = scmp.eq.s32.totalorder %s19, 1
    %p147 = por %p145, %p146
    %p149 = scmp.ne.s32.totalorder %s134, %s148
    %p150 = scmp.eq.s32.totalorder %s19, 0
    %p151 = por %p149, %p150
    %s153 = sadd.s32 %s152, 1
    %p156 = scmp.eq.s32.totalorder %s13, 1
    %p157 = scmp.ne.s32.totalorder %s152, %s154
    %p158 = scmp.eq.s32.totalorder %s13, 0
    %p159 = por %p157, %p158
    %p160 = scmp.ne.s32.totalorder %s152, %s154
    %p161 = scmp.eq.s32.totalorder %s18, 1
    %p162 = por %p160, %p161
    %p163 = scmp.ne.s32.totalorder %s154, %s155
    %p164 = scmp.eq.s32.totalorder %s18, 0
    %p165 = por %p163, %p164
    %p166 = scmp.ne.s32.totalorder %s154, %s155
    %p167 = scmp.eq.s32.totalorder %s19, 1
    %p168 = por %p166, %p167
    %p170 = scmp.ne.s32.totalorder %s155, %s169
    %p171 = scmp.eq.s32.totalorder %s19, 0
    %p172 = por %p170, %p171
    %s173 = ssub.s32 %s13, %s20
    %p174 = scmp.eq.s32.totalorder %s173, 0
    %s176 = sadd.s32 %s175, 1
    %s177 = scalar_select %p174, %s175, %s176
    %p180 = pneg %p174
    %p181 = scmp.eq.s32.totalorder %s13, 1
    %p182 = por %p180, %p181
    %p183 = scmp.ne.s32.totalorder %s175, %s178
    %p184 = scmp.eq.s32.totalorder %s13, 0
    %p185 = por %p183, %p184
    %p186 = scmp.ne.s32.totalorder %s175, %s178
    %p187 = scmp.eq.s32.totalorder %s18, 1
    %p188 = por %p186, %p187
    %p189 = scmp.ne.s32.totalorder %s178, %s179
    %p190 = scmp.eq.s32.totalorder %s18, 0
    %p191 = por %p189, %p190
    %p192 = scmp.ne.s32.totalorder %s178, %s179
    %p193 = scmp.eq.s32.totalorder %s19, 1
    %p194 = por %p192, %p193
    %p196 = scmp.ne.s32.totalorder %s179, %s195
    %p197 = scmp.eq.s32.totalorder %s19, 0
    %p198 = por %p196, %p197
    %p199 = scmp.le.s32.totalorder 1, %s13
    %p200 = scmp.lt.s32.totalorder %s13, 3
    %p201 = pnand %p199, %p200
    %p202 = pneg %p201
    // Predicated region
    $region9: #{backbone_forward.2} parent=5 // pred_check
      _
    $region10: #{backbone_forward.2} parent=5 // pred_check_branch
      %204 = sbr.rel (%p201) target = $region12
    $region11: #{backbone_forward.2} parent=5 // pred_region
      %s205 = ssub.s32 %s13, 1
      // Predicated region
      $region13: #{backbone_forward.2} parent=11 // pred_check
        %p206 = pneg %p60
      $region14: #{backbone_forward.2} parent=11 // pred_check_branch
        %208 = sbr.rel (%p206) target = $region16
      $region15: #{backbone_forward.2} parent=11 // pred_region
        _
      $region16: #{backbone_forward.2} parent=11 // pred_fallthru
        _
      // Predicated region
      $region17: #{backbone_forward.2} parent=11 // pred_check
        %p209 = pneg %p81
      $region18: #{backbone_forward.2} parent=11 // pred_check_branch
        %211 = sbr.rel (%p209) target = $region20
      $region19: #{backbone_forward.2} parent=11 // pred_region
        _
      $region20: #{backbone_forward.2} parent=11 // pred_fallthru
        _
      // Predicated region
      $region21: #{backbone_forward.2} parent=11 // pred_check
        %p212 = pneg %p102
      $region22: #{backbone_forward.2} parent=11 // pred_check_branch
        %214 = sbr.rel (%p212) target = $region24
      $region23: #{backbone_forward.2} parent=11 // pred_region
        _
      $region24: #{backbone_forward.2} parent=11 // pred_fallthru
        _
      // Predicated region
      $region25: #{backbone_forward.2} parent=11 // pred_check
        %p215 = pneg %p123
      $region26: #{backbone_forward.2} parent=11 // pred_check_branch
        %217 = sbr.rel (%p215) target = $region28
      $region27: #{backbone_forward.2} parent=11 // pred_region
        _
      $region28: #{backbone_forward.2} parent=11 // pred_fallthru
        _
      // Predicated region
      $region29: #{backbone_forward.2} parent=11 // pred_check
        %p218 = pneg %p144
      $region30: #{backbone_forward.2} parent=11 // pred_check_branch
        %220 = sbr.rel (%p218) target = $region32
      $region31: #{backbone_forward.2} parent=11 // pred_region
        _
      $region32: #{backbone_forward.2} parent=11 // pred_fallthru
        _
      // Predicated region
      $region33: #{backbone_forward.2} parent=11 // pred_check
        %p221 = pneg %p165
      $region34: #{backbone_forward.2} parent=11 // pred_check_branch
        %223 = sbr.rel (%p221) target = $region36
      $region35: #{backbone_forward.2} parent=11 // pred_region
        _
      $region36: #{backbone_forward.2} parent=11 // pred_fallthru
        _
    $region12: #{backbone_forward.2} parent=5 // pred_fallthru
      _
    %p224 = scmp.lt.s32.totalorder %s13, 2
    // Predicated region
    $region37: #{backbone_forward.2} parent=5 // pred_check
      %p225 = pneg %p224
    $region38: #{backbone_forward.2} parent=5 // pred_check_branch
      %227 = sbr.rel (%p225) target = $region40
    $region39: #{backbone_forward.2} parent=5 // pred_region
      // Predicated region
      $region41: #{backbone_forward.2} parent=39 // pred_check
        %p228 = pneg %p33
      $region42: #{backbone_forward.2} parent=39 // pred_check_branch
        %230 = sbr.rel (%p228) target = $region44
      $region43: #{backbone_forward.2} parent=39 // pred_region
        %s231 = smul.u32 6, %s13
        %p232 = scmp.lt.s32.totalorder %s231, 11
        %s233 = scalar_select %p232, %s231, 11
        %s234 = smul.addr %s233, 8
        %s235 = scalar_lea.vmem %s0, %s234
        %s236 = smul.u32 6, %s13
      $region44: #{backbone_forward.2} parent=39 // pred_fallthru
        _
    $region40: #{backbone_forward.2} parent=5 // pred_fallthru
      _
    %p237 = scmp.le.s32.totalorder 1, %s13
    %p238 = scmp.lt.s32.totalorder %s13, 3
    %p239 = pnand %p237, %p238
    %p240 = pneg %p239
    // Predicated region
    $region45: #{backbone_forward.2} parent=5 // pred_check
      _
    $region46: #{backbone_forward.2} parent=5 // pred_check_branch
      %242 = sbr.rel (%p239) target = $region48
    $region47: #{backbone_forward.2} parent=5 // pred_region
      %s243 = ssub.s32 %s13, 1
      %s244 = smul.u32 6, %s18
      %p245 = scmp.lt.s32.totalorder %s244, 11
      %s246 = scalar_select %p245, %s244, 11
      %s247 = smul.addr %s246, 8
      %s248 = scalar_lea.vmem %s0, %s247
      %p249 = pneg %p39
      %p250 = pneg %p36
      %p251 = pneg %p60
      %p252 = pneg %p57
      %p253 = pneg %p81
      %p254 = pneg %p78
      %p255 = pneg %p102
      %p256 = pneg %p99
      %p257 = pneg %p123
      %p258 = pneg %p120
      %p259 = pneg %p144
      %p260 = pneg %p141
      %p261 = pneg %p165
      %p262 = pneg %p162
      %p263 = pneg %p191
      %p264 = pneg %p188
      %s265 = smul.u32 6, %s18
      %p266 = scmp.lt.s32.totalorder %s265, 11
      %s267 = scalar_select %p266, %s265, 11
      %s268 = smul.addr %s267, 8
      %s269 = scalar_lea.vmem %s7, %s268
      %s270 = smul.u32 6, %s18
      %p271 = scmp.lt.s32.totalorder %s270, 11
      %s272 = scalar_select %p271, %s270, 11
      %s273 = smul.addr %s272, 8
      %s274 = scalar_lea.vmem %s0, %s273
      %s275 = smul.u32 6, %s18
      %s276 = smul.u32 6, %s18
      %p277 = scmp.lt.s32.totalorder %s276, 11
      %s278 = scalar_select %p277, %s276, 11
      %s279 = smul.addr %s278, 8
      %s280 = scalar_lea.vmem %s7, %s279
      %s281 = smul.u32 6, %s18
      %v283 = vld [vmem:[%s274] sm:$0xff]
      %v284 = vld [vmem:[%s274 + $0x8] sm:$0xff]
      %v285 = vld [vmem:[%s274 + $0x10] sm:$0xff]
      %v286 = vld [vmem:[%s274 + $0x18] sm:$0xff]
      %v287 = vld [vmem:[%s274 + $0x20] sm:$0xff]
      %v288 = vld [vmem:[%s274 + $0x28] sm:$0xff]
      %v289 = vld [vmem:[%s1] sm:$0xff]
      %v290 = vld [vmem:[%s1 + $0x8] sm:$0xff]
      %v291 = vld [vmem:[%s1 + $0x10] sm:$0xff]
      %v292 = vld [vmem:[%s1 + $0x18] sm:$0xff]
      %v293 = vld [vmem:[%s1 + $0x20] sm:$0xff]
      %v294 = vld [vmem:[%s1 + $0x28] sm:$0xff]
      %v295 = vld [vmem:[%s6] sm:$0xff]
      %v296 = vpack.c.bf16 %v284, %v283
      %v297 = vpack.c.bf16 %v286, %v285
      %v298 = vpack.c.bf16 %v288, %v287
      %v299 = vld [vmem:[%s2] sm:$0xf]
      %v300 = vld [vmem:[%s2 + $0x4] sm:$0xf]
      %v301 = vld [vmem:[%s2 + $0x8] sm:$0xf]
      %v302 = vld [vmem:[%s2 + $0xc] sm:$0xf]
      %v303 = vlaneseq
      %v304 = vshrl.u32 %v303, 7
      %v305 = vsub.s32 0, %v304
      %v306 = vrot.slane %v295, %v305
      %v311 = vunpack.c.l.b16 %v299
      %v312 = vunpack.c.l.b16 %v300
      %v313 = vunpack.c.l.b16 %v301
      %v314 = vunpack.c.l.b16 %v302
      %v315 = vpack.c.b16 %v312, %v311
      %v316 = vpack.c.b16 %v314, %v313
      %vm319 = vcmask 261120
      %v321 = vsel %vm319, %v296, 0
      %v324 = vsel %vm319, %v297, 0
      %v327 = vsel %vm319, %v298, 0
      %329 = vmatprep.subr.bf16.mxu0 0
      %330 = vmatpush1.bf16.msra.mxu0 %v315
      %331 = vmatprep.subr.bf16.mxu0 0
      %332 = vmatpush1.bf16.msra.mxu0 %v316
      %333 = vmatprep.subr.bf16.mxu0 0
      %334 = vmatpush1.bf16.msra.mxu0 0
      %335 = vmatprep.subr.bf16.mxu0 0
      %336 = vmatpush1.bf16.msra.mxu0 0
      %337 = vmatprep.subr.bf16.mxu0 0
      %338 = vmatpush1.bf16.msra.mxu0 0
      %339 = vmatprep.subr.bf16.mxu0 0
      %340 = vmatpush1.bf16.msra.mxu0 0
      %341 = vmatprep.subr.bf16.mxu0 0
      %342 = vmatpush1.bf16.msra.mxu0 0
      %343 = vmatprep.subr.bf16.mxu0 0
      %344 = vmatpush1.bf16.msra.mxu0 0
      %345 = vmatprep.subr.bf16.mxu0 0
      %346 = vmatpush1.bf16.msra.mxu0 0
      %347 = vmatprep.subr.bf16.mxu0 0
      %348 = vmatpush1.bf16.msra.mxu0 0
      %349 = vmatprep.subr.bf16.mxu0 0
      %350 = vmatpush1.bf16.msra.mxu0 0
      %351 = vmatprep.subr.bf16.mxu0 0
      %352 = vmatpush1.bf16.msra.mxu0 0
      %353 = vmatprep.subr.bf16.mxu0 0
      %354 = vmatpush1.bf16.msra.mxu0 0
      %355 = vmatprep.subr.bf16.mxu0 0
      %356 = vmatpush1.bf16.msra.mxu0 0
      %357 = vmatprep.subr.bf16.mxu0 0
      %358 = vmatpush1.bf16.msra.mxu0 0
      %359 = vmatprep.subr.bf16.mxu0 0
      %360 = vmatpush1.bf16.msra.mxu0 0
      %361 = vmatprep.mubr.bf16.mxu0 0
      %362 = vmatmul.mubr.bf16.gmra.mrb[0].mxu0 %v321
      %v363 = vpop.f32.mrb[0].mxu0
      %v364 = vadd.f32 %v306, %v363
      %v365 = vpop.f32.mrb[0].mxu0
      %v366 = vpop.f32.mrb[0].mxu0
      %v367 = vadd.f32 %v306, %v366
      %v368 = vpop.f32.mrb[0].mxu0
      %369 = vmatprep.mubr.bf16.mxu0 0
      %370 = vmatmul.mubr.bf16.gmra.mrb[0].mxu0 %v324
      %v371 = vpop.f32.mrb[0].mxu0
      %v372 = vadd.f32 %v306, %v371
      %v373 = vpop.f32.mrb[0].mxu0
      %v374 = vpop.f32.mrb[0].mxu0
      %v375 = vadd.f32 %v306, %v374
      %v376 = vpop.f32.mrb[0].mxu0
      %377 = vmatprep.mubr.bf16.mxu0 0
      %378 = vmatmul.mubr.bf16.gmra.mrb[0].mxu0 %v327
      %v379 = vpop.f32.mrb[0].mxu0
      %v380 = vadd.f32 %v306, %v379
      %v381 = vpop.f32.mrb[0].mxu0
      %v382 = vpop.f32.mrb[0].mxu0
      %v383 = vadd.f32 %v306, %v382
      %v384 = vpop.f32.mrb[0].mxu0
      %385 = vdwg.mxu0
      %392 = vrot.lane.b32.xlu0 %v364, 96
      %v393 = vpop.permute.xlu0 %392
      %394 = vrot.lane.b32.xlu0 %v367, 96
      %v395 = vpop.permute.xlu0 %394
      %396 = vrot.lane.b32.xlu0 %v372, 96
      %v397 = vpop.permute.xlu0 %396
      %398 = vrot.lane.b32.xlu0 %v375, 96
      %v399 = vpop.permute.xlu0 %398
      %400 = vrot.lane.b32.xlu0 %v380, 96
      %v401 = vpop.permute.xlu0 %400
      %402 = vrot.lane.b32.xlu0 %v383, 96
      %v403 = vpop.permute.xlu0 %402
      %vm404 = vcmask 64512
      %v405 = vsel %vm404, %v364, 0
      %v407 = vsel %vm404, %v367, 0
      %v409 = vsel %vm404, %v372, 0
      %v411 = vsel %vm404, %v375, 0
      %v413 = vsel %vm404, %v380, 0
      %v415 = vsel %vm404, %v383, 0
      %v417 = vsel %vm404, %v393, 0
      %v419 = vsel %vm404, %v395, 0
      %v421 = vsel %vm404, %v397, 0
      %v423 = vsel %vm404, %v399, 0
      %v425 = vsel %vm404, %v401, 0
      %v427 = vsel %vm404, %v403, 0
      %429 = vmatprep.subr.mxu0 0.0
      %430 = vmatpush1.xpose.msra.mxu0 %v417
      %431 = vmatprep.subr.mxu0 0.0
      %432 = vmatpush1.xpose.msra.mxu0 %v419
      %433 = vmatprep.subr.mxu0 0.0
      %434 = vmatpush1.xpose.msra.mxu0 %v421
      %435 = vmatprep.subr.mxu0 0.0
      %436 = vmatpush1.xpose.msra.mxu0 %v423
      %437 = vmatprep.subr.mxu0 0.0
      %438 = vmatpush1.xpose.msra.mxu0 %v425
      %439 = vmatprep.subr.mxu0 0.0
      %440 = vmatpush1.xpose.msra.mxu0 %v427
      %441 = vmatprep.subr.mxu0 0.0
      %442 = vmatpush1.xpose.msra.mxu0 0.0
      %443 = vmatprep.subr.mxu0 0.0
      %444 = vmatpush1.xpose.msra.mxu0 0.0
      %445 = vmatprep.subr.mxu0 0.0
      %446 = vmatpush1.xpose.msra.mxu0 0.0
      %447 = vmatprep.subr.mxu0 0.0
      %448 = vmatpush1.xpose.msra.mxu0 0.0
      %449 = vmatprep.subr.mxu0 0.0
      %450 = vmatpush1.xpose.msra.mxu0 0.0
      %451 = vmatprep.subr.mxu0 0.0
      %452 = vmatpush1.xpose.msra.mxu0 0.0
      %453 = vmatprep.subr.mxu0 0.0
      %454 = vmatpush1.xpose.msra.mxu0 0.0
      %455 = vmatprep.subr.mxu0 0.0
      %456 = vmatpush1.xpose.msra.mxu0 0.0
      %457 = vmatprep.subr.mxu0 0.0
      %458 = vmatpush1.xpose.msra.mxu0 0.0
      %459 = vmatprep.subr.mxu0 0.0
      %460 = vmatpush1.xpose.msra.mxu0 0.0
      %461 = vmatprep.subr.mxu0 0.0
      %462 = vmatpush1.xpose.msra.mxu0 0.0
      %463 = vmatprep.subr.mxu0 0.0
      %464 = vmatpush1.xpose.msra.mxu0 0.0
      %465 = vmatprep.subr.mxu0 0.0
      %466 = vmatpush1.xpose.msra.mxu0 0.0
      %467 = vmatprep.subr.mxu0 0.0
      %468 = vmatpush1.xpose.msra.mxu0 0.0
      %469 = vmatprep.subr.mxu0 0.0
      %470 = vmatpush1.xpose.msra.mxu0 0.0
      %471 = vmatprep.subr.mxu0 0.0
      %472 = vmatpush1.xpose.msra.mxu0 0.0
      %473 = vmatprep.subr.mxu0 0.0
      %474 = vmatpush1.xpose.msra.mxu0 0.0
      %475 = vmatprep.subr.mxu0 0.0
      %476 = vmatpush1.xpose.msra.mxu0 0.0
      %477 = vmatprep.subr.mxu0 0.0
      %478 = vmatpush1.xpose.msra.mxu0 0.0
      %479 = vmatprep.subr.mxu0 0.0
      %480 = vmatpush1.xpose.msra.mxu0 0.0
      %481 = vmatprep.subr.mxu0 0.0
      %482 = vmatpush1.xpose.msra.mxu0 0.0
      %483 = vmatprep.subr.mxu0 0.0
      %484 = vmatpush1.xpose.msra.mxu0 0.0
      %485 = vmatprep.subr.mxu0 0.0
      %486 = vmatpush1.xpose.msra.mxu0 0.0
      %487 = vmatprep.subr.mxu0 0.0
      %488 = vmatpush1.xpose.msra.mxu0 0.0
      %489 = vmatprep.subr.mxu0 0.0
      %490 = vmatpush1.xpose.msra.mxu0 0.0
      %491 = vmatprep.subr.mxu0 0.0
      %492 = vmatpush1.xpose.msra.mxu0 0.0
      %493 = vmatprep.mubr.f32.mxu0 0.0
      %494 = vmatmul.mubr.f32.gmra.mrb[0].mxu0 %v405
      %v495 = vpop.f32.mrb[0].mxu0
      %v496 = vadd.f32 0.0, %v495
      %v497 = vpop.f32.mrb[0].mxu0
      %498 = vmatprep.mubr.f32.mxu0 0.0
      %499 = vmatmul.mubr.f32.gmra.mrb[0].mxu0 %v407
      %v500 = vpop.f32.mrb[0].mxu0
      %v501 = vadd.f32 0.0, %v500
      %v502 = vpop.f32.mrb[0].mxu0
      %503 = vmatprep.mubr.f32.mxu0 0.0
      %504 = vmatmul.mubr.f32.gmra.mrb[0].mxu0 %v409
      %v505 = vpop.f32.mrb[0].mxu0
      %v506 = vadd.f32 0.0, %v505
      %v507 = vpop.f32.mrb[0].mxu0
      %508 = vmatprep.mubr.f32.mxu0 0.0
      %509 = vmatmul.mubr.f32.gmra.mrb[0].mxu0 %v411
      %v510 = vpop.f32.mrb[0].mxu0
      %v511 = vadd.f32 0.0, %v510
      %v512 = vpop.f32.mrb[0].mxu0
      %513 = vmatprep.mubr.f32.mxu0 0.0
      %514 = vmatmul.mubr.f32.gmra.mrb[0].mxu0 %v413
      %v515 = vpop.f32.mrb[0].mxu0
      %v516 = vadd.f32 0.0, %v515
      %v517 = vpop.f32.mrb[0].mxu0
      %518 = vmatprep.mubr.f32.mxu0 0.0
      %519 = vmatmul.mubr.f32.gmra.mrb[0].mxu0 %v415
      %v520 = vpop.f32.mrb[0].mxu0
      %v521 = vadd.f32 0.0, %v520
      %v522 = vpop.f32.mrb[0].mxu0
      %523 = vdwg.mxu0
      %v524 = vmul.f32 %v496, 0.35355338
      %v525 = vmul.f32 %v501, 0.35355338
      %v526 = vmul.f32 %v506, 0.35355338
      %v527 = vmul.f32 %v511, 0.35355338
      %v528 = vmul.f32 %v516, 0.35355338
      %v529 = vmul.f32 %v521, 0.35355338
      %v530 = vadd.f32 %v524, %v289
      %v531 = vadd.f32 %v525, %v290
      %v532 = vadd.f32 %v526, %v291
      %v533 = vadd.f32 %v527, %v292
      %v534 = vadd.f32 %v528, %v293
      %v535 = vadd.f32 %v529, %v294
      %vm536 = vcmask 392192
      %v537 = vsel %vm536, %v530, -inf
      %538 = vmax.xlane.f32.xlu0 %v537
      %v539 = vpop.xlane.xlu0 %538
      %v540 = vsel %vm536, %v531, -inf
      %541 = vmax.xlane.f32.xlu0 %v540
      %v542 = vpop.xlane.xlu0 %541
      %v543 = vsel %vm536, %v532, -inf
      %544 = vmax.xlane.f32.xlu0 %v543
      %v545 = vpop.xlane.xlu0 %544
      %v546 = vsel %vm536, %v533, -inf
      %547 = vmax.xlane.f32.xlu0 %v546
      %v548 = vpop.xlane.xlu0 %547
      %v549 = vsel %vm536, %v534, -inf
      %550 = vmax.xlane.f32.xlu0 %v549
      %v551 = vpop.xlane.xlu0 %550
      %v552 = vsel %vm536, %v535, -inf
      %553 = vmax.xlane.f32.xlu0 %v552
      %v554 = vpop.xlane.xlu0 %553
      %v555 = vsub.f32 %v530, %v539
      %v556 = vsub.f32 %v531, %v542
      %v557 = vsub.f32 %v532, %v545
      %v558 = vsub.f32 %v533, %v548
      %v559 = vsub.f32 %v534, %v551
      %v560 = vsub.f32 %v535, %v554
      %v561 = vmul.f32 %v555, 1.442695
      %v562 = vpow.pop %v561
      %v563 = vmul.f32 %v556, 1.442695
      %v564 = vpow.pop %v563
      %v565 = vmul.f32 %v557, 1.442695
      %v566 = vpow.pop %v565
      %v567 = vmul.f32 %v558, 1.442695
      %v568 = vpow.pop %v567
      %v569 = vmul.f32 %v559, 1.442695
      %v570 = vpow.pop %v569
      %v571 = vmul.f32 %v560, 1.442695
      %v572 = vpow.pop %v571
      %v573 = vsel %vm536, %v562, 0.0
      %574 = vadd.xlane.f32.xlu0 %v573
      %v575 = vpop.xlane.xlu0 %574
      %v576 = vsel %vm536, %v564, 0.0
      %577 = vadd.xlane.f32.xlu0 %v576
      %v578 = vpop.xlane.xlu0 %577
      %v579 = vsel %vm536, %v566, 0.0
      %580 = vadd.xlane.f32.xlu0 %v579
      %v581 = vpop.xlane.xlu0 %580
      %v582 = vsel %vm536, %v568, 0.0
      %583 = vadd.xlane.f32.xlu0 %v582
      %v584 = vpop.xlane.xlu0 %583
      %v585 = vsel %vm536, %v570, 0.0
      %586 = vadd.xlane.f32.xlu0 %v585
      %v587 = vpop.xlane.xlu0 %586
      %v588 = vsel %vm536, %v572, 0.0
      %589 = vadd.xlane.f32.xlu0 %v588
      %v590 = vpop.xlane.xlu0 %589
      %v591 = vrcp.pop %v575
      %v592 = vrcp.pop %v578
      %v593 = vrcp.pop %v581
      %v594 = vrcp.pop %v584
      %v595 = vrcp.pop %v587
      %v596 = vrcp.pop %v590
      %597 = vrot.lane.b32.xlu0 %v364, 64
      %v598 = vpop.permute.xlu0 %597
      %599 = vrot.lane.b32.xlu0 %v367, 64
      %v600 = vpop.permute.xlu0 %599
      %601 = vrot.lane.b32.xlu0 %v372, 64
      %v602 = vpop.permute.xlu0 %601
      %603 = vrot.lane.b32.xlu0 %v375, 64
      %v604 = vpop.permute.xlu0 %603
      %605 = vrot.lane.b32.xlu0 %v380, 64
      %v606 = vpop.permute.xlu0 %605
      %607 = vrot.lane.b32.xlu0 %v383, 64
      %v608 = vpop.permute.xlu0 %607
      %v616 = vsel %vm536, %v562, 0
      %v619 = vsel %vm536, %v564, 0
      %v622 = vsel %vm536, %v566, 0
      %v625 = vsel %vm536, %v568, 0
      %v628 = vsel %vm536, %v570, 0
      %v631 = vsel %vm536, %v572, 0
      %633 = vmatprep.subr.mxu0 0.0
      %634 = vmatpush1.msra.mxu0 %v598
      %635 = vmatprep.subr.mxu0 0.0
      %636 = vmatpush1.msra.mxu0 %v600
      %637 = vmatprep.subr.mxu0 0.0
      %638 = vmatpush1.msra.mxu0 %v602
      %639 = vmatprep.subr.mxu0 0.0
      %640 = vmatpush1.msra.mxu0 %v604
      %641 = vmatprep.subr.mxu0 0.0
      %642 = vmatpush1.msra.mxu0 %v606
      %643 = vmatprep.subr.mxu0 0.0
      %644 = vmatpush1.msra.mxu0 %v608
      %645 = vmatprep.subr.mxu0 0.0
      %646 = vmatpush1.msra.mxu0 0.0
      %647 = vmatprep.subr.mxu0 0.0
      %648 = vmatpush1.msra.mxu0 0.0
      %649 = vmatprep.subr.mxu0 0.0
      %650 = vmatpush1.msra.mxu0 0.0
      %651 = vmatprep.subr.mxu0 0.0
      %652 = vmatpush1.msra.mxu0 0.0
      %653 = vmatprep.subr.mxu0 0.0
      %654 = vmatpush1.msra.mxu0 0.0
      %655 = vmatprep.subr.mxu0 0.0
      %656 = vmatpush1.msra.mxu0 0.0
      %657 = vmatprep.subr.mxu0 0.0
      %658 = vmatpush1.msra.mxu0 0.0
      %659 = vmatprep.subr.mxu0 0.0
      %660 = vmatpush1.msra.mxu0 0.0
      %661 = vmatprep.subr.mxu0 0.0
      %662 = vmatpush1.msra.mxu0 0.0
      %663 = vmatprep.subr.mxu0 0.0
      %664 = vmatpush1.msra.mxu0 0.0
      %665 = vmatprep.subr.mxu0 0.0
      %666 = vmatpush1.msra.mxu0 0.0
      %667 = vmatprep.subr.mxu0 0.0
      %668 = vmatpush1.msra.mxu0 0.0
      %669 = vmatprep.subr.mxu0 0.0
      %670 = vmatpush1.msra.mxu0 0.0
      %671 = vmatprep.subr.mxu0 0.0
      %672 = vmatpush1.msra.mxu0 0.0
      %673 = vmatprep.subr.mxu0 0.0
      %674 = vmatpush1.msra.mxu0 0.0
      %675 = vmatprep.subr.mxu0 0.0
      %676 = vmatpush1.msra.mxu0 0.0
      %677 = vmatprep.subr.mxu0 0.0
      %678 = vmatpush1.msra.mxu0 0.0
      %679 = vmatprep.subr.mxu0 0.0
      %680 = vmatpush1.msra.mxu0 0.0
      %681 = vmatprep.subr.mxu0 0.0
      %682 = vmatpush1.msra.mxu0 0.0
      %683 = vmatprep.subr.mxu0 0.0
      %684 = vmatpush1.msra.mxu0 0.0
      %685 = vmatprep.subr.mxu0 0.0
      %686 = vmatpush1.msra.mxu0 0.0
      %687 = vmatprep.subr.mxu0 0.0
      %688 = vmatpush1.msra.mxu0 0.0
      %689 = vmatprep.subr.mxu0 0.0
      %690 = vmatpush1.msra.mxu0 0.0
      %691 = vmatprep.subr.mxu0 0.0
      %692 = vmatpush1.msra.mxu0 0.0
      %693 = vmatprep.subr.mxu0 0.0
      %694 = vmatpush1.msra.mxu0 0.0
      %695 = vmatprep.subr.mxu0 0.0
      %696 = vmatpush1.msra.mxu0 0.0
      %697 = vmatprep.mubr.f32.mxu0 0.0
      %698 = vmatmul.mubr.f32.gmra.mrb[0].mxu0 %v616
      %v699 = vpop.f32.mrb[0].mxu0
      %v700 = vadd.f32 0.0, %v699
      %v701 = vpop.f32.mrb[0].mxu0
      %702 = vmatprep.mubr.f32.mxu0 0.0
      %703 = vmatmul.mubr.f32.gmra.mrb[0].mxu0 %v619
      %v704 = vpop.f32.mrb[0].mxu0
      %v705 = vadd.f32 0.0, %v704
      %v706 = vpop.f32.mrb[0].mxu0
      %707 = vmatprep.mubr.f32.mxu0 0.0
      %708 = vmatmul.mubr.f32.gmra.mrb[0].mxu0 %v622
      %v709 = vpop.f32.mrb[0].mxu0
      %v710 = vadd.f32 0.0, %v709
      %v711 = vpop.f32.mrb[0].mxu0
      %712 = vmatprep.mubr.f32.mxu0 0.0
      %713 = vmatmul.mubr.f32.gmra.mrb[0].mxu0 %v625
      %v714 = vpop.f32.mrb[0].mxu0
      %v715 = vadd.f32 0.0, %v714
      %v716 = vpop.f32.mrb[0].mxu0
      %717 = vmatprep.mubr.f32.mxu0 0.0
      %718 = vmatmul.mubr.f32.gmra.mrb[0].mxu0 %v628
      %v719 = vpop.f32.mrb[0].mxu0
      %v720 = vadd.f32 0.0, %v719
      %v721 = vpop.f32.mrb[0].mxu0
      %722 = vmatprep.mubr.f32.mxu0 0.0
      %723 = vmatmul.mubr.f32.gmra.mrb[0].mxu0 %v631
      %v724 = vpop.f32.mrb[0].mxu0
      %v725 = vadd.f32 0.0, %v724
      %v726 = vpop.f32.mrb[0].mxu0
      %727 = vdwg.mxu0
      %v728 = vmul.f32 %v700, %v591
      %v729 = vmul.f32 %v705, %v592
      %v730 = vmul.f32 %v710, %v593
      %v731 = vmul.f32 %v715, %v594
      %v732 = vmul.f32 %v720, %v595
      %v733 = vmul.f32 %v725, %v596
      %734 = vrot.lane.b32.xlu0 %v364, 120
      %v735 = vpop.permute.xlu0 %734
      %736 = vrot.lane.b32.xlu0 %v367, 120
      %v737 = vpop.permute.xlu0 %736
      %738 = vrot.lane.b32.xlu0 %v372, 120
      %v739 = vpop.permute.xlu0 %738
      %740 = vrot.lane.b32.xlu0 %v375, 120
      %v741 = vpop.permute.xlu0 %740
      %742 = vrot.lane.b32.xlu0 %v380, 120
      %v743 = vpop.permute.xlu0 %742
      %744 = vrot.lane.b32.xlu0 %v383, 120
      %v745 = vpop.permute.xlu0 %744
      %746 = vrot.lane.b32.xlu0 %v364, 88
      %v747 = vpop.permute.xlu0 %746
      %748 = vrot.lane.b32.xlu0 %v367, 88
      %v749 = vpop.permute.xlu0 %748
      %750 = vrot.lane.b32.xlu0 %v372, 88
      %v751 = vpop.permute.xlu0 %750
      %752 = vrot.lane.b32.xlu0 %v375, 88
      %v753 = vpop.permute.xlu0 %752
      %754 = vrot.lane.b32.xlu0 %v380, 88
      %v755 = vpop.permute.xlu0 %754
      %756 = vrot.lane.b32.xlu0 %v383, 88
      %v757 = vpop.permute.xlu0 %756
      %v758 = vsel %vm404, %v735, 0
      %v760 = vsel %vm404, %v737, 0
      %v762 = vsel %vm404, %v739, 0
      %v764 = vsel %vm404, %v741, 0
      %v766 = vsel %vm404, %v743, 0
      %v768 = vsel %vm404, %v745, 0
      %v770 = vsel %vm404, %v747, 0
      %v772 = vsel %vm404, %v749, 0
      %v774 = vsel %vm404, %v751, 0
      %v776 = vsel %vm404, %v753, 0
      %v778 = vsel %vm404, %v755, 0
      %v780 = vsel %vm404, %v757, 0
      %782 = vmatprep.subr.mxu0 0.0
      %783 = vmatpush1.xpose.msra.mxu0 %v770
      %784 = vmatprep.subr.mxu0 0.0
      %785 = vmatpush1.xpose.msra.mxu0 %v772
      %786 = vmatprep.subr.mxu0 0.0
      %787 = vmatpush1.xpose.msra.mxu0 %v774
      %788 = vmatprep.subr.mxu0 0.0
      %789 = vmatpush1.xpose.msra.mxu0 %v776
      %790 = vmatprep.subr.mxu0 0.0
      %791 = vmatpush1.xpose.msra.mxu0 %v778
      %792 = vmatprep.subr.mxu0 0.0
      %793 = vmatpush1.xpose.msra.mxu0 %v780
      %794 = vmatprep.subr.mxu0 0.0
      %795 = vmatpush1.xpose.msra.mxu0 0.0
      %796 = vmatprep.subr.mxu0 0.0
      %797 = vmatpush1.xpose.msra.mxu0 0.0
      %798 = vmatprep.subr.mxu0 0.0
      %799 = vmatpush1.xpose.msra.mxu0 0.0
      %800 = vmatprep.subr.mxu0 0.0
      %801 = vmatpush1.xpose.msra.mxu0 0.0
      %802 = vmatprep.subr.mxu0 0.0
      %803 = vmatpush1.xpose.msra.mxu0 0.0
      %804 = vmatprep.subr.mxu0 0.0
      %805 = vmatpush1.xpose.msra.mxu0 0.0
      %806 = vmatprep.subr.mxu0 0.0
      %807 = vmatpush1.xpose.msra.mxu0 0.0
      %808 = vmatprep.subr.mxu0 0.0
      %809 = vmatpush1.xpose.msra.mxu0 0.0
      %810 = vmatprep.subr.mxu0 0.0
      %811 = vmatpush1.xpose.msra.mxu0 0.0
      %812 = vmatprep.subr.mxu0 0.0
      %813 = vmatpush1.xpose.msra.mxu0 0.0
      %814 = vmatprep.subr.mxu0 0.0
      %815 = vmatpush1.xpose.msra.mxu0 0.0
      %816 = vmatprep.subr.mxu0 0.0
      %817 = vmatpush1.xpose.msra.mxu0 0.0
      %818 = vmatprep.subr.mxu0 0.0
      %819 = vmatpush1.xpose.msra.mxu0 0.0
      %820 = vmatprep.subr.mxu0 0.0
      %821 = vmatpush1.xpose.msra.mxu0 0.0
      %822 = vmatprep.subr.mxu0 0.0
      %823 = vmatpush1.xpose.msra.mxu0 0.0
      %824 = vmatprep.subr.mxu0 0.0
      %825 = vmatpush1.xpose.msra.mxu0 0.0
      %826 = vmatprep.subr.mxu0 0.0
      %827 = vmatpush1.xpose.msra.mxu0 0.0
      %828 = vmatprep.subr.mxu0 0.0
      %829 = vmatpush1.xpose.msra.mxu0 0.0
      %830 = vmatprep.subr.mxu0 0.0
      %831 = vmatpush1.xpose.msra.mxu0 0.0
      %832 = vmatprep.subr.mxu0 0.0
      %833 = vmatpush1.xpose.msra.mxu0 0.0
      %834 = vmatprep.subr.mxu0 0.0
      %835 = vmatpush1.xpose.msra.mxu0 0.0
      %836 = vmatprep.subr.mxu0 0.0
      %837 = vmatpush1.xpose.msra.mxu0 0.0
      %838 = vmatprep.subr.mxu0 0.0
      %839 = vmatpush1.xpose.msra.mxu0 0.0
      %840 = vmatprep.subr.mxu0 0.0
      %841 = vmatpush1.xpose.msra.mxu0 0.0
      %842 = vmatprep.subr.mxu0 0.0
      %843 = vmatpush1.xpose.msra.mxu0 0.0
      %844 = vmatprep.subr.mxu0 0.0
      %845 = vmatpush1.xpose.msra.mxu0 0.0
      %846 = vmatprep.mubr.f32.mxu0 0.0
      %847 = vmatmul.mubr.f32.gmra.mrb[0].mxu0 %v758
      %v848 = vpop.f32.mrb[0].mxu0
      %v849 = vadd.f32 0.0, %v848
      %v850 = vpop.f32.mrb[0].mxu0
      %851 = vmatprep.mubr.f32.mxu0 0.0
      %852 = vmatmul.mubr.f32.gmra.mrb[0].mxu0 %v760
      %v853 = vpop.f32.mrb[0].mxu0
      %v854 = vadd.f32 0.0, %v853
      %v855 = vpop.f32.mrb[0].mxu0
      %856 = vmatprep.mubr.f32.mxu0 0.0
      %857 = vmatmul.mubr.f32.gmra.mrb[0].mxu0 %v762
      %v858 = vpop.f32.mrb[0].mxu0
      %v859 = vadd.f32 0.0, %v858
      %v860 = vpop.f32.mrb[0].mxu0
      %861 = vmatprep.mubr.f32.mxu0 0.0
      %862 = vmatmul.mubr.f32.gmra.mrb[0].mxu0 %v764
      %v863 = vpop.f32.mrb[0].mxu0
      %v864 = vadd.f32 0.0, %v863
      %v865 = vpop.f32.mrb[0].mxu0
      %866 = vmatprep.mubr.f32.mxu0 0.0
      %867 = vmatmul.mubr.f32.gmra.mrb[0].mxu0 %v766
      %v868 = vpop.f32.mrb[0].mxu0
      %v869 = vadd.f32 0.0, %v868
      %v870 = vpop.f32.mrb[0].mxu0
      %871 = vmatprep.mubr.f32.mxu0 0.0
      %872 = vmatmul.mubr.f32.gmra.mrb[0].mxu0 %v768
      %v873 = vpop.f32.mrb[0].mxu0
      %v874 = vadd.f32 0.0, %v873
      %v875 = vpop.f32.mrb[0].mxu0
      %876 = vdwg.mxu0
      %v877 = vmul.f32 %v849, 0.35355338
      %v878 = vmul.f32 %v854, 0.35355338
      %v879 = vmul.f32 %v859, 0.35355338
      %v880 = vmul.f32 %v864, 0.35355338
      %v881 = vmul.f32 %v869, 0.35355338
      %v882 = vmul.f32 %v874, 0.35355338
      %v883 = vadd.f32 %v877, %v289
      %v884 = vadd.f32 %v878, %v290
      %v885 = vadd.f32 %v879, %v291
      %v886 = vadd.f32 %v880, %v292
      %v887 = vadd.f32 %v881, %v293
      %v888 = vadd.f32 %v882, %v294
      %v889 = vsel %vm536, %v883, -inf
      %890 = vmax.xlane.f32.xlu0 %v889
      %v891 = vpop.xlane.xlu0 %890
      %v892 = vsel %vm536, %v884, -inf
      %893 = vmax.xlane.f32.xlu0 %v892
      %v894 = vpop.xlane.xlu0 %893
      %v895 = vsel %vm536, %v885, -inf
      %896 = vmax.xlane.f32.xlu0 %v895
      %v897 = vpop.xlane.xlu0 %896
      %v898 = vsel %vm536, %v886, -inf
      %899 = vmax.xlane.f32.xlu0 %v898
      %v900 = vpop.xlane.xlu0 %899
      %v901 = vsel %vm536, %v887, -inf
      %902 = vmax.xlane.f32.xlu0 %v901
      %v903 = vpop.xlane.xlu0 %902
      %v904 = vsel %vm536, %v888, -inf
      %905 = vmax.xlane.f32.xlu0 %v904
      %v906 = vpop.xlane.xlu0 %905
      %v907 = vsub.f32 %v883, %v891
      %v908 = vsub.f32 %v884, %v894
      %v909 = vsub.f32 %v885, %v897
      %v910 = vsub.f32 %v886, %v900
      %v911 = vsub.f32 %v887, %v903
      %v912 = vsub.f32 %v888, %v906
      %v913 = vmul.f32 %v907, 1.442695
      %v914 = vpow.pop %v913
      %v915 = vmul.f32 %v908, 1.442695
      %v916 = vpow.pop %v915
      %v917 = vmul.f32 %v909, 1.442695
      %v918 = vpow.pop %v917
      %v919 = vmul.f32 %v910, 1.442695
      %v920 = vpow.pop %v919
      %v921 = vmul.f32 %v911, 1.442695
      %v922 = vpow.pop %v921
      %v923 = vmul.f32 %v912, 1.442695
      %v924 = vpow.pop %v923
      %v925 = vsel %vm536, %v914, 0.0
      %926 = vadd.xlane.f32.xlu0 %v925
      %v927 = vpop.xlane.xlu0 %926
      %v928 = vsel %vm536, %v916, 0.0
      %929 = vadd.xlane.f32.xlu0 %v928
      %v930 = vpop.xlane.xlu0 %929
      %v931 = vsel %vm536, %v918, 0.0
      %932 = vadd.xlane.f32.xlu0 %v931
      %v933 = vpop.xlane.xlu0 %932
      %v934 = vsel %vm536, %v920, 0.0
      %935 = vadd.xlane.f32.xlu0 %v934
      %v936 = vpop.xlane.xlu0 %935
      %v937 = vsel %vm536, %v922, 0.0
      %938 = vadd.xlane.f32.xlu0 %v937
      %v939 = vpop.xlane.xlu0 %938
      %v940 = vsel %vm536, %v924, 0.0
      %941 = vadd.xlane.f32.xlu0 %v940
      %v942 = vpop.xlane.xlu0 %941
      %v943 = vrcp.pop %v927
      %v944 = vrcp.pop %v930
      %v945 = vrcp.pop %v933
      %v946 = vrcp.pop %v936
      %v947 = vrcp.pop %v939
      %v948 = vrcp.pop %v942
      %949 = vrot.lane.b32.xlu0 %v364, 56
      %v950 = vpop.permute.xlu0 %949
      %951 = vrot.lane.b32.xlu0 %v367, 56
      %v952 = vpop.permute.xlu0 %951
      %953 = vrot.lane.b32.xlu0 %v372, 56
      %v954 = vpop.permute.xlu0 %953
      %955 = vrot.lane.b32.xlu0 %v375, 56
      %v956 = vpop.permute.xlu0 %955
      %957 = vrot.lane.b32.xlu0 %v380, 56
      %v958 = vpop.permute.xlu0 %957
      %959 = vrot.lane.b32.xlu0 %v383, 56
      %v960 = vpop.permute.xlu0 %959
      %v968 = vsel %vm536, %v914, 0
      %v971 = vsel %vm536, %v916, 0
      %v974 = vsel %vm536, %v918, 0
      %v977 = vsel %vm536, %v920, 0
      %v980 = vsel %vm536, %v922, 0
      %v983 = vsel %vm536, %v924, 0
      %985 = vmatprep.subr.mxu0 0.0
      %986 = vmatpush1.msra.mxu0 %v950
      %987 = vmatprep.subr.mxu0 0.0
      %988 = vmatpush1.msra.mxu0 %v952
      %989 = vmatprep.subr.mxu0 0.0
      %990 = vmatpush1.msra.mxu0 %v954
      %991 = vmatprep.subr.mxu0 0.0
      %992 = vmatpush1.msra.mxu0 %v956
      %993 = vmatprep.subr.mxu0 0.0
      %994 = vmatpush1.msra.mxu0 %v958
      %995 = vmatprep.subr.mxu0 0.0
      %996 = vmatpush1.msra.mxu0 %v960
      %997 = vmatprep.subr.mxu0 0.0
      %998 = vmatpush1.msra.mxu0 0.0
      %999 = vmatprep.subr.mxu0 0.0
      %1000 = vmatpush1.msra.mxu0 0.0
      %1001 = vmatprep.subr.mxu0 0.0
      %1002 = vmatpush1.msra.mxu0 0.0
      %1003 = vmatprep.subr.mxu0 0.0
      %1004 = vmatpush1.msra.mxu0 0.0
      %1005 = vmatprep.subr.mxu0 0.0
      %1006 = vmatpush1.msra.mxu0 0.0
      %1007 = vmatprep.subr.mxu0 0.0
      %1008 = vmatpush1.msra.mxu0 0.0
      %1009 = vmatprep.subr.mxu0 0.0
      %1010 = vmatpush1.msra.mxu0 0.0
      %1011 = vmatprep.subr.mxu0 0.0
      %1012 = vmatpush1.msra.mxu0 0.0
      %1013 = vmatprep.subr.mxu0 0.0
      %1014 = vmatpush1.msra.mxu0 0.0
      %1015 = vmatprep.subr.mxu0 0.0
      %1016 = vmatpush1.msra.mxu0 0.0
      %1017 = vmatprep.subr.mxu0 0.0
      %1018 = vmatpush1.msra.mxu0 0.0
      %1019 = vmatprep.subr.mxu0 0.0
      %1020 = vmatpush1.msra.mxu0 0.0
      %1021 = vmatprep.subr.mxu0 0.0
      %1022 = vmatpush1.msra.mxu0 0.0
      %1023 = vmatprep.subr.mxu0 0.0
      %1024 = vmatpush1.msra.mxu0 0.0
      %1025 = vmatprep.subr.mxu0 0.0
      %1026 = vmatpush1.msra.mxu0 0.0
      %1027 = vmatprep.subr.mxu0 0.0
      %1028 = vmatpush1.msra.mxu0 0.0
      %1029 = vmatprep.subr.mxu0 0.0
      %1030 = vmatpush1.msra.mxu0 0.0
      %1031 = vmatprep.subr.mxu0 0.0
      %1032 = vmatpush1.msra.mxu0 0.0
      %1033 = vmatprep.subr.mxu0 0.0
      %1034 = vmatpush1.msra.mxu0 0.0
      %1035 = vmatprep.subr.mxu0 0.0
      %1036 = vmatpush1.msra.mxu0 0.0
      %1037 = vmatprep.subr.mxu0 0.0
      %1038 = vmatpush1.msra.mxu0 0.0
      %1039 = vmatprep.subr.mxu0 0.0
      %1040 = vmatpush1.msra.mxu0 0.0
      %1041 = vmatprep.subr.mxu0 0.0
      %1042 = vmatpush1.msra.mxu0 0.0
      %1043 = vmatprep.subr.mxu0 0.0
      %1044 = vmatpush1.msra.mxu0 0.0
      %1045 = vmatprep.subr.mxu0 0.0
      %1046 = vmatpush1.msra.mxu0 0.0
      %1047 = vmatprep.subr.mxu0 0.0
      %1048 = vmatpush1.msra.mxu0 0.0
      %1049 = vmatprep.mubr.f32.mxu0 0.0
      %1050 = vmatmul.mubr.f32.gmra.mrb[0].mxu0 %v968
      %v1051 = vpop.f32.mrb[0].mxu0
      %v1052 = vadd.f32 0.0, %v1051
      %v1053 = vpop.f32.mrb[0].mxu0
      %1054 = vmatprep.mubr.f32.mxu0 0.0
      %1055 = vmatmul.mubr.f32.gmra.mrb[0].mxu0 %v971
      %v1056 = vpop.f32.mrb[0].mxu0
      %v1057 = vadd.f32 0.0, %v1056
      %v1058 = vpop.f32.mrb[0].mxu0
      %1059 = vmatprep.mubr.f32.mxu0 0.0
      %1060 = vmatmul.mubr.f32.gmra.mrb[0].mxu0 %v974
      %v1061 = vpop.f32.mrb[0].mxu0
      %v1062 = vadd.f32 0.0, %v1061
      %v1063 = vpop.f32.mrb[0].mxu0
      %1064 = vmatprep.mubr.f32.mxu0 0.0
      %1065 = vmatmul.mubr.f32.gmra.mrb[0].mxu0 %v977
      %v1066 = vpop.f32.mrb[0].mxu0
      %v1067 = vadd.f32 0.0, %v1066
      %v1068 = vpop.f32.mrb[0].mxu0
      %1069 = vmatprep.mubr.f32.mxu0 0.0
      %1070 = vmatmul.mubr.f32.gmra.mrb[0].mxu0 %v980
      %v1071 = vpop.f32.mrb[0].mxu0
      %v1072 = vadd.f32 0.0, %v1071
      %v1073 = vpop.f32.mrb[0].mxu0
      %1074 = vmatprep.mubr.f32.mxu0 0.0
      %1075 = vmatmul.mubr.f32.gmra.mrb[0].mxu0 %v983
      %v1076 = vpop.f32.mrb[0].mxu0
      %v1077 = vadd.f32 0.0, %v1076
      %v1078 = vpop.f32.mrb[0].mxu0
      %1079 = vdwg.mxu0
      %v1080 = vmul.f32 %v1052, %v943
      %v1081 = vmul.f32 %v1057, %v944
      %v1082 = vmul.f32 %v1062, %v945
      %v1083 = vmul.f32 %v1067, %v946
      %v1084 = vmul.f32 %v1072, %v947
      %v1085 = vmul.f32 %v1077, %v948
      %1086 = vrot.lane.b32.xlu0 %v364, 112
      %v1087 = vpop.permute.xlu0 %1086
      %1088 = vrot.lane.b32.xlu0 %v367, 112
      %v1089 = vpop.permute.xlu0 %1088
      %1090 = vrot.lane.b32.xlu0 %v372, 112
      %v1091 = vpop.permute.xlu0 %1090
      %1092 = vrot.lane.b32.xlu0 %v375, 112
      %v1093 = vpop.permute.xlu0 %1092
      %1094 = vrot.lane.b32.xlu0 %v380, 112
      %v1095 = vpop.permute.xlu0 %1094
      %1096 = vrot.lane.b32.xlu0 %v383, 112
      %v1097 = vpop.permute.xlu0 %1096
      %1098 = vrot.lane.b32.xlu0 %v364, 80
      %v1099 = vpop.permute.xlu0 %1098
      %1100 = vrot.lane.b32.xlu0 %v367, 80
      %v1101 = vpop.permute.xlu0 %1100
      %1102 = vrot.lane.b32.xlu0 %v372, 80
      %v1103 = vpop.permute.xlu0 %1102
      %1104 = vrot.lane.b32.xlu0 %v375, 80
      %v1105 = vpop.permute.xlu0 %1104
      %1106 = vrot.lane.b32.xlu0 %v380, 80
      %v1107 = vpop.permute.xlu0 %1106
      %1108 = vrot.lane.b32.xlu0 %v383, 80
      %v1109 = vpop.permute.xlu0 %1108
      %v1110 = vsel %vm404, %v1087, 0
      %v1112 = vsel %vm404, %v1089, 0
      %v1114 = vsel %vm404, %v1091, 0
      %v1116 = vsel %vm404, %v1093, 0
      %v1118 = vsel %vm404, %v1095, 0
      %v1120 = vsel %vm404, %v1097, 0
      %v1122 = vsel %vm404, %v1099, 0
      %v1124 = vsel %vm404, %v1101, 0
      %v1126 = vsel %vm404, %v1103, 0
      %v1128 = vsel %vm404, %v1105, 0
      %v1130 = vsel %vm404, %v1107, 0
      %v1132 = vsel %vm404, %v1109, 0
      %1134 = vmatprep.subr.mxu0 0.0
      %1135 = vmatpush1.xpose.msra.mxu0 %v1122
      %1136 = vmatprep.subr.mxu0 0.0
      %1137 = vmatpush1.xpose.msra.mxu0 %v1124
      %1138 = vmatprep.subr.mxu0 0.0
      %1139 = vmatpush1.xpose.msra.mxu0 %v1126
      %1140 = vmatprep.subr.mxu0 0.0
      %1141 = vmatpush1.xpose.msra.mxu0 %v1128
      %1142 = vmatprep.subr.mxu0 0.0
      %1143 = vmatpush1.xpose.msra.mxu0 %v1130
      %1144 = vmatprep.subr.mxu0 0.0
      %1145 = vmatpush1.xpose.msra.mxu0 %v1132
      %1146 = vmatprep.subr.mxu0 0.0
      %1147 = vmatpush1.xpose.msra.mxu0 0.0
      %1148 = vmatprep.subr.mxu0 0.0
      %1149 = vmatpush1.xpose.msra.mxu0 0.0
      %1150 = vmatprep.subr.mxu0 0.0
      %1151 = vmatpush1.xpose.msra.mxu0 0.0
      %1152 = vmatprep.subr.mxu0 0.0
      %1153 = vmatpush1.xpose.msra.mxu0 0.0
      %1154 = vmatprep.subr.mxu0 0.0
      %1155 = vmatpush1.xpose.msra.mxu0 0.0
      %1156 = vmatprep.subr.mxu0 0.0
      %1157 = vmatpush1.xpose.msra.mxu0 0.0
      %1158 = vmatprep.subr.mxu0 0.0
      %1159 = vmatpush1.xpose.msra.mxu0 0.0
      %1160 = vmatprep.subr.mxu0 0.0
      %1161 = vmatpush1.xpose.msra.mxu0 0.0
      %1162 = vmatprep.subr.mxu0 0.0
      %1163 = vmatpush1.xpose.msra.mxu0 0.0
      %1164 = vmatprep.subr.mxu0 0.0
      %1165 = vmatpush1.xpose.msra.mxu0 0.0
      %1166 = vmatprep.subr.mxu0 0.0
      %1167 = vmatpush1.xpose.msra.mxu0 0.0
      %1168 = vmatprep.subr.mxu0 0.0
      %1169 = vmatpush1.xpose.msra.mxu0 0.0
      %1170 = vmatprep.subr.mxu0 0.0
      %1171 = vmatpush1.xpose.msra.mxu0 0.0
      %1172 = vmatprep.subr.mxu0 0.0
      %1173 = vmatpush1.xpose.msra.mxu0 0.0
      %1174 = vmatprep.subr.mxu0 0.0
      %1175 = vmatpush1.xpose.msra.mxu0 0.0
      %1176 = vmatprep.subr.mxu0 0.0
      %1177 = vmatpush1.xpose.msra.mxu0 0.0
      %1178 = vmatprep.subr.mxu0 0.0
      %1179 = vmatpush1.xpose.msra.mxu0 0.0
      %1180 = vmatprep.subr.mxu0 0.0
      %1181 = vmatpush1.xpose.msra.mxu0 0.0
      %1182 = vmatprep.subr.mxu0 0.0
      %1183 = vmatpush1.xpose.msra.mxu0 0.0
      %1184 = vmatprep.subr.mxu0 0.0
      %1185 = vmatpush1.xpose.msra.mxu0 0.0
      %1186 = vmatprep.subr.mxu0 0.0
      %1187 = vmatpush1.xpose.msra.mxu0 0.0
      %1188 = vmatprep.subr.mxu0 0.0
      %1189 = vmatpush1.xpose.msra.mxu0 0.0
      %1190 = vmatprep.subr.mxu0 0.0
      %1191 = vmatpush1.xpose.msra.mxu0 0.0
      %1192 = vmatprep.subr.mxu0 0.0
      %1193 = vmatpush1.xpose.msra.mxu0 0.0
      %1194 = vmatprep.subr.mxu0 0.0
      %1195 = vmatpush1.xpose.msra.mxu0 0.0
      %1196 = vmatprep.subr.mxu0 0.0
      %1197 = vmatpush1.xpose.msra.mxu0 0.0
      %1198 = vmatprep.mubr.f32.mxu0 0.0
      %1199 = vmatmul.mubr.f32.gmra.mrb[0].mxu0 %v1110
      %v1200 = vpop.f32.mrb[0].mxu0
      %v1201 = vadd.f32 0.0, %v1200
      %v1202 = vpop.f32.mrb[0].mxu0
      %1203 = vmatprep.mubr.f32.mxu0 0.0
      %1204 = vmatmul.mubr.f32.gmra.mrb[0].mxu0 %v1112
      %v1205 = vpop.f32.mrb[0].mxu0
      %v1206 = vadd.f32 0.0, %v1205
      %v1207 = vpop.f32.mrb[0].mxu0
      %1208 = vmatprep.mubr.f32.mxu0 0.0
      %1209 = vmatmul.mubr.f32.gmra.mrb[0].mxu0 %v1114
      %v1210 = vpop.f32.mrb[0].mxu0
      %v1211 = vadd.f32 0.0, %v1210
      %v1212 = vpop.f32.mrb[0].mxu0
      %1213 = vmatprep.mubr.f32.mxu0 0.0
      %1214 = vmatmul.mubr.f32.gmra.mrb[0].mxu0 %v1116
      %v1215 = vpop.f32.mrb[0].mxu0
      %v1216 = vadd.f32 0.0, %v1215
      %v1217 = vpop.f32.mrb[0].mxu0
      %1218 = vmatprep.mubr.f32.mxu0 0.0
      %1219 = vmatmul.mubr.f32.gmra.mrb[0].mxu0 %v1118
      %v1220 = vpop.f32.mrb[0].mxu0
      %v1221 = vadd.f32 0.0, %v1220
      %v1222 = vpop.f32.mrb[0].mxu0
      %1223 = vmatprep.mubr.f32.mxu0 0.0
      %1224 = vmatmul.mubr.f32.gmra.mrb[0].mxu0 %v1120
      %v1225 = vpop.f32.mrb[0].mxu0
      %v1226 = vadd.f32 0.0, %v1225
      %v1227 = vpop.f32.mrb[0].mxu0
      %1228 = vdwg.mxu0
      %v1229 = vmul.f32 %v1201, 0.35355338
      %v1230 = vmul.f32 %v1206, 0.35355338
      %v1231 = vmul.f32 %v1211, 0.35355338
      %v1232 = vmul.f32 %v1216, 0.35355338
      %v1233 = vmul.f32 %v1221, 0.35355338
      %v1234 = vmul.f32 %v1226, 0.35355338
      %v1235 = vadd.f32 %v1229, %v289
      %v1236 = vadd.f32 %v1230, %v290
      %v1237 = vadd.f32 %v1231, %v291
      %v1238 = vadd.f32 %v1232, %v292
      %v1239 = vadd.f32 %v1233, %v293
      %v1240 = vadd.f32 %v1234, %v294
      %v1241 = vsel %vm536, %v1235, -inf
      %1242 = vmax.xlane.f32.xlu0 %v1241
      %v1243 = vpop.xlane.xlu0 %1242
      %v1244 = vsel %vm536, %v1236, -inf
      %1245 = vmax.xlane.f32.xlu0 %v1244
      %v1246 = vpop.xlane.xlu0 %1245
      %v1247 = vsel %vm536, %v1237, -inf
      %1248 = vmax.xlane.f32.xlu0 %v1247
      %v1249 = vpop.xlane.xlu0 %1248
      %v1250 = vsel %vm536, %v1238, -inf
      %1251 = vmax.xlane.f32.xlu0 %v1250
      %v1252 = vpop.xlane.xlu0 %1251
      %v1253 = vsel %vm536, %v1239, -inf
      %1254 = vmax.xlane.f32.xlu0 %v1253
      %v1255 = vpop.xlane.xlu0 %1254
      %v1256 = vsel %vm536, %v1240, -inf
      %1257 = vmax.xlane.f32.xlu0 %v1256
      %v1258 = vpop.xlane.xlu0 %1257
      %v1259 = vsub.f32 %v1235, %v1243
      %v1260 = vsub.f32 %v1236, %v1246
      %v1261 = vsub.f32 %v1237, %v1249
      %v1262 = vsub.f32 %v1238, %v1252
      %v1263 = vsub.f32 %v1239, %v1255
      %v1264 = vsub.f32 %v1240, %v1258
      %v1265 = vmul.f32 %v1259, 1.442695
      %v1266 = vpow.pop %v1265
      %v1267 = vmul.f32 %v1260, 1.442695
      %v1268 = vpow.pop %v1267
      %v1269 = vmul.f32 %v1261, 1.442695
      %v1270 = vpow.pop %v1269
      %v1271 = vmul.f32 %v1262, 1.442695
      %v1272 = vpow.pop %v1271
      %v1273 = vmul.f32 %v1263, 1.442695
      %v1274 = vpow.pop %v1273
      %v1275 = vmul.f32 %v1264, 1.442695
      %v1276 = vpow.pop %v1275
      %v1277 = vsel %vm536, %v1266, 0.0
      %1278 = vadd.xlane.f32.xlu0 %v1277
      %v1279 = vpop.xlane.xlu0 %1278
      %v1280 = vsel %vm536, %v1268, 0.0
      %1281 = vadd.xlane.f32.xlu0 %v1280
      %v1282 = vpop.xlane.xlu0 %1281
      %v1283 = vsel %vm536, %v1270, 0.0
      %1284 = vadd.xlane.f32.xlu0 %v1283
      %v1285 = vpop.xlane.xlu0 %1284
      %v1286 = vsel %vm536, %v1272, 0.0
      %1287 = vadd.xlane.f32.xlu0 %v1286
      %v1288 = vpop.xlane.xlu0 %1287
      %v1289 = vsel %vm536, %v1274, 0.0
      %1290 = vadd.xlane.f32.xlu0 %v1289
      %v1291 = vpop.xlane.xlu0 %1290
      %v1292 = vsel %vm536, %v1276, 0.0
      %1293 = vadd.xlane.f32.xlu0 %v1292
      %v1294 = vpop.xlane.xlu0 %1293
      %v1295 = vrcp.pop %v1279
      %v1296 = vrcp.pop %v1282
      %v1297 = vrcp.pop %v1285
      %v1298 = vrcp.pop %v1288
      %v1299 = vrcp.pop %v1291
      %v1300 = vrcp.pop %v1294
      %1301 = vrot.lane.b32.xlu0 %v364, 48
      %v1302 = vpop.permute.xlu0 %1301
      %1303 = vrot.lane.b32.xlu0 %v367, 48
      %v1304 = vpop.permute.xlu0 %1303
      %1305 = vrot.lane.b32.xlu0 %v372, 48
      %v1306 = vpop.permute.xlu0 %1305
      %1307 = vrot.lane.b32.xlu0 %v375, 48
      %v1308 = vpop.permute.xlu0 %1307
      %1309 = vrot.lane.b32.xlu0 %v380, 48
      %v1310 = vpop.permute.xlu0 %1309
      %1311 = vrot.lane.b32.xlu0 %v383, 48
      %v1312 = vpop.permute.xlu0 %1311
      %v1320 = vsel %vm536, %v1266, 0
      %v1323 = vsel %vm536, %v1268, 0
      %v1326 = vsel %vm536, %v1270, 0
      %v1329 = vsel %vm536, %v1272, 0
      %v1332 = vsel %vm536, %v1274, 0
      %v1335 = vsel %vm536, %v1276, 0
      %1337 = vmatprep.subr.mxu0 0.0
      %1338 = vmatpush1.msra.mxu0 %v1302
      %1339 = vmatprep.subr.mxu0 0.0
      %1340 = vmatpush1.msra.mxu0 %v1304
      %1341 = vmatprep.subr.mxu0 0.0
      %1342 = vmatpush1.msra.mxu0 %v1306
      %1343 = vmatprep.subr.mxu0 0.0
      %1344 = vmatpush1.msra.mxu0 %v1308
      %1345 = vmatprep.subr.mxu0 0.0
      %1346 = vmatpush1.msra.mxu0 %v1310
      %1347 = vmatprep.subr.mxu0 0.0
      %1348 = vmatpush1.msra.mxu0 %v1312
      %1349 = vmatprep.subr.mxu0 0.0
      %1350 = vmatpush1.msra.mxu0 0.0
      %1351 = vmatprep.subr.mxu0 0.0
      %1352 = vmatpush1.msra.mxu0 0.0
      %1353 = vmatprep.subr.mxu0 0.0
      %1354 = vmatpush1.msra.mxu0 0.0
      %1355 = vmatprep.subr.mxu0 0.0
      %1356 = vmatpush1.msra.mxu0 0.0
      %1357 = vmatprep.subr.mxu0 0.0
      %1358 = vmatpush1.msra.mxu0 0.0
      %1359 = vmatprep.subr.mxu0 0.0
      %1360 = vmatpush1.msra.mxu0 0.0
      %1361 = vmatprep.subr.mxu0 0.0
      %1362 = vmatpush1.msra.mxu0 0.0
      %1363 = vmatprep.subr.mxu0 0.0
      %1364 = vmatpush1.msra.mxu0 0.0
      %1365 = vmatprep.subr.mxu0 0.0
      %1366 = vmatpush1.msra.mxu0 0.0
      %1367 = vmatprep.subr.mxu0 0.0
      %1368 = vmatpush1.msra.mxu0 0.0
      %1369 = vmatprep.subr.mxu0 0.0
      %1370 = vmatpush1.msra.mxu0 0.0
      %1371 = vmatprep.subr.mxu0 0.0
      %1372 = vmatpush1.msra.mxu0 0.0
      %1373 = vmatprep.subr.mxu0 0.0
      %1374 = vmatpush1.msra.mxu0 0.0
      %1375 = vmatprep.subr.mxu0 0.0
      %1376 = vmatpush1.msra.mxu0 0.0
      %1377 = vmatprep.subr.mxu0 0.0
      %1378 = vmatpush1.msra.mxu0 0.0
      %1379 = vmatprep.subr.mxu0 0.0
      %1380 = vmatpush1.msra.mxu0 0.0
      %1381 = vmatprep.subr.mxu0 0.0
      %1382 = vmatpush1.msra.mxu0 0.0
      %1383 = vmatprep.subr.mxu0 0.0
      %1384 = vmatpush1.msra.mxu0 0.0
      %1385 = vmatprep.subr.mxu0 0.0
      %1386 = vmatpush1.msra.mxu0 0.0
      %1387 = vmatprep.subr.mxu0 0.0
      %1388 = vmatpush1.msra.mxu0 0.0
      %1389 = vmatprep.subr.mxu0 0.0
      %1390 = vmatpush1.msra.mxu0 0.0
      %1391 = vmatprep.subr.mxu0 0.0
      %1392 = vmatpush1.msra.mxu0 0.0
      %1393 = vmatprep.subr.mxu0 0.0
      %1394 = vmatpush1.msra.mxu0 0.0
      %1395 = vmatprep.subr.mxu0 0.0
      %1396 = vmatpush1.msra.mxu0 0.0
      %1397 = vmatprep.subr.mxu0 0.0
      %1398 = vmatpush1.msra.mxu0 0.0
      %1399 = vmatprep.subr.mxu0 0.0
      %1400 = vmatpush1.msra.mxu0 0.0
      %1401 = vmatprep.mubr.f32.mxu0 0.0
      %1402 = vmatmul.mubr.f32.gmra.mrb[0].mxu0 %v1320
      %v1403 = vpop.f32.mrb[0].mxu0
      %v1404 = vadd.f32 0.0, %v1403
      %v1405 = vpop.f32.mrb[0].mxu0
      %1406 = vmatprep.mubr.f32.mxu0 0.0
      %1407 = vmatmul.mubr.f32.gmra.mrb[0].mxu0 %v1323
      %v1408 = vpop.f32.mrb[0].mxu0
      %v1409 = vadd.f32 0.0, %v1408
      %v1410 = vpop.f32.mrb[0].mxu0
      %1411 = vmatprep.mubr.f32.mxu0 0.0
      %1412 = vmatmul.mubr.f32.gmra.mrb[0].mxu0 %v1326
      %v1413 = vpop.f32.mrb[0].mxu0
      %v1414 = vadd.f32 0.0, %v1413
      %v1415 = vpop.f32.mrb[0].mxu0
      %1416 = vmatprep.mubr.f32.mxu0 0.0
      %1417 = vmatmul.mubr.f32.gmra.mrb[0].mxu0 %v1329
      %v1418 = vpop.f32.mrb[0].mxu0
      %v1419 = vadd.f32 0.0, %v1418
      %v1420 = vpop.f32.mrb[0].mxu0
      %1421 = vmatprep.mubr.f32.mxu0 0.0
      %1422 = vmatmul.mubr.f32.gmra.mrb[0].mxu0 %v1332
      %v1423 = vpop.f32.mrb[0].mxu0
      %v1424 = vadd.f32 0.0, %v1423
      %v1425 = vpop.f32.mrb[0].mxu0
      %1426 = vmatprep.mubr.f32.mxu0 0.0
      %1427 = vmatmul.mubr.f32.gmra.mrb[0].mxu0 %v1335
      %v1428 = vpop.f32.mrb[0].mxu0
      %v1429 = vadd.f32 0.0, %v1428
      %v1430 = vpop.f32.mrb[0].mxu0
      %1431 = vdwg.mxu0
      %v1432 = vmul.f32 %v1404, %v1295
      %v1433 = vmul.f32 %v1409, %v1296
      %v1434 = vmul.f32 %v1414, %v1297
      %v1435 = vmul.f32 %v1419, %v1298
      %v1436 = vmul.f32 %v1424, %v1299
      %v1437 = vmul.f32 %v1429, %v1300
      %1438 = vrot.lane.b32.xlu0 %v364, 104
      %v1439 = vpop.permute.xlu0 %1438
      %1440 = vrot.lane.b32.xlu0 %v367, 104
      %v1441 = vpop.permute.xlu0 %1440
      %1442 = vrot.lane.b32.xlu0 %v372, 104
      %v1443 = vpop.permute.xlu0 %1442
      %1444 = vrot.lane.b32.xlu0 %v375, 104
      %v1445 = vpop.permute.xlu0 %1444
      %1446 = vrot.lane.b32.xlu0 %v380, 104
      %v1447 = vpop.permute.xlu0 %1446
      %1448 = vrot.lane.b32.xlu0 %v383, 104
      %v1449 = vpop.permute.xlu0 %1448
      %1450 = vrot.lane.b32.xlu0 %v364, 72
      %v1451 = vpop.permute.xlu0 %1450
      %1452 = vrot.lane.b32.xlu0 %v367, 72
      %v1453 = vpop.permute.xlu0 %1452
      %1454 = vrot.lane.b32.xlu0 %v372, 72
      %v1455 = vpop.permute.xlu0 %1454
      %1456 = vrot.lane.b32.xlu0 %v375, 72
      %v1457 = vpop.permute.xlu0 %1456
      %1458 = vrot.lane.b32.xlu0 %v380, 72
      %v1459 = vpop.permute.xlu0 %1458
      %1460 = vrot.lane.b32.xlu0 %v383, 72
      %v1461 = vpop.permute.xlu0 %1460
      %v1462 = vsel %vm404, %v1439, 0
      %v1464 = vsel %vm404, %v1441, 0
      %v1466 = vsel %vm404, %v1443, 0
      %v1468 = vsel %vm404, %v1445, 0
      %v1470 = vsel %vm404, %v1447, 0
      %v1472 = vsel %vm404, %v1449, 0
      %v1474 = vsel %vm404, %v1451, 0
      %v1476 = vsel %vm404, %v1453, 0
      %v1478 = vsel %vm404, %v1455, 0
      %v1480 = vsel %vm404, %v1457, 0
      %v1482 = vsel %vm404, %v1459, 0
      %v1484 = vsel %vm404, %v1461, 0
      %1486 = vmatprep.subr.mxu0 0.0
      %1487 = vmatpush1.xpose.msra.mxu0 %v1474
      %1488 = vmatprep.subr.mxu0 0.0
      %1489 = vmatpush1.xpose.msra.mxu0 %v1476
      %1490 = vmatprep.subr.mxu0 0.0
      %1491 = vmatpush1.xpose.msra.mxu0 %v1478
      %1492 = vmatprep.subr.mxu0 0.0
      %1493 = vmatpush1.xpose.msra.mxu0 %v1480
      %1494 = vmatprep.subr.mxu0 0.0
      %1495 = vmatpush1.xpose.msra.mxu0 %v1482
      %1496 = vmatprep.subr.mxu0 0.0
      %1497 = vmatpush1.xpose.msra.mxu0 %v1484
      %1498 = vmatprep.subr.mxu0 0.0
      %1499 = vmatpush1.xpose.msra.mxu0 0.0
      %1500 = vmatprep.subr.mxu0 0.0
      %1501 = vmatpush1.xpose.msra.mxu0 0.0
      %1502 = vmatprep.subr.mxu0 0.0
      %1503 = vmatpush1.xpose.msra.mxu0 0.0
      %1504 = vmatprep.subr.mxu0 0.0
      %1505 = vmatpush1.xpose.msra.mxu0 0.0
      %1506 = vmatprep.subr.mxu0 0.0
      %1507 = vmatpush1.xpose.msra.mxu0 0.0
      %1508 = vmatprep.subr.mxu0 0.0
      %1509 = vmatpush1.xpose.msra.mxu0 0.0
      %1510 = vmatprep.subr.mxu0 0.0
      %1511 = vmatpush1.xpose.msra.mxu0 0.0
      %1512 = vmatprep.subr.mxu0 0.0
      %1513 = vmatpush1.xpose.msra.mxu0 0.0
      %1514 = vmatprep.subr.mxu0 0.0
      %1515 = vmatpush1.xpose.msra.mxu0 0.0
      %1516 = vmatprep.subr.mxu0 0.0
      %1517 = vmatpush1.xpose.msra.mxu0 0.0
      %1518 = vmatprep.subr.mxu0 0.0
      %1519 = vmatpush1.xpose.msra.mxu0 0.0
      %1520 = vmatprep.subr.mxu0 0.0
      %1521 = vmatpush1.xpose.msra.mxu0 0.0
      %1522 = vmatprep.subr.mxu0 0.0
      %1523 = vmatpush1.xpose.msra.mxu0 0.0
      %1524 = vmatprep.subr.mxu0 0.0
      %1525 = vmatpush1.xpose.msra.mxu0 0.0
      %1526 = vmatprep.subr.mxu0 0.0
      %1527 = vmatpush1.xpose.msra.mxu0 0.0
      %1528 = vmatprep.subr.mxu0 0.0
      %1529 = vmatpush1.xpose.msra.mxu0 0.0
      %1530 = vmatprep.subr.mxu0 0.0
      %1531 = vmatpush1.xpose.msra.mxu0 0.0
      %1532 = vmatprep.subr.mxu0 0.0
      %1533 = vmatpush1.xpose.msra.mxu0 0.0
      %1534 = vmatprep.subr.mxu0 0.0
      %1535 = vmatpush1.xpose.msra.mxu0 0.0
      %1536 = vmatprep.subr.mxu0 0.0
      %1537 = vmatpush1.xpose.msra.mxu0 0.0
      %1538 = vmatprep.subr.mxu0 0.0
      %1539 = vmatpush1.xpose.msra.mxu0 0.0
      %1540 = vmatprep.subr.mxu0 0.0
      %1541 = vmatpush1.xpose.msra.mxu0 0.0
      %1542 = vmatprep.subr.mxu0 0.0
      %1543 = vmatpush1.xpose.msra.mxu0 0.0
      %1544 = vmatprep.subr.mxu0 0.0
      %1545 = vmatpush1.xpose.msra.mxu0 0.0
      %1546 = vmatprep.subr.mxu0 0.0
      %1547 = vmatpush1.xpose.msra.mxu0 0.0
      %1548 = vmatprep.subr.mxu0 0.0
      %1549 = vmatpush1.xpose.msra.mxu0 0.0
      %1550 = vmatprep.mubr.f32.mxu0 0.0
      %1551 = vmatmul.mubr.f32.gmra.mrb[0].mxu0 %v1462
      %v1552 = vpop.f32.mrb[0].mxu0
      %v1553 = vadd.f32 0.0, %v1552
      %v1554 = vpop.f32.mrb[0].mxu0
      %1555 = vmatprep.mubr.f32.mxu0 0.0
      %1556 = vmatmul.mubr.f32.gmra.mrb[0].mxu0 %v1464
      %v1557 = vpop.f32.mrb[0].mxu0
      %v1558 = vadd.f32 0.0, %v1557
      %v1559 = vpop.f32.mrb[0].mxu0
      %1560 = vmatprep.mubr.f32.mxu0 0.0
      %1561 = vmatmul.mubr.f32.gmra.mrb[0].mxu0 %v1466
      %v1562 = vpop.f32.mrb[0].mxu0
      %v1563 = vadd.f32 0.0, %v1562
      %v1564 = vpop.f32.mrb[0].mxu0
      %1565 = vmatprep.mubr.f32.mxu0 0.0
      %1566 = vmatmul.mubr.f32.gmra.mrb[0].mxu0 %v1468
      %v1567 = vpop.f32.mrb[0].mxu0
      %v1568 = vadd.f32 0.0, %v1567
      %v1569 = vpop.f32.mrb[0].mxu0
      %1570 = vmatprep.mubr.f32.mxu0 0.0
      %1571 = vmatmul.mubr.f32.gmra.mrb[0].mxu0 %v1470
      %v1572 = vpop.f32.mrb[0].mxu0
      %v1573 = vadd.f32 0.0, %v1572
      %v1574 = vpop.f32.mrb[0].mxu0
      %1575 = vmatprep.mubr.f32.mxu0 0.0
      %1576 = vmatmul.mubr.f32.gmra.mrb[0].mxu0 %v1472
      %v1577 = vpop.f32.mrb[0].mxu0
      %v1578 = vadd.f32 0.0, %v1577
      %v1579 = vpop.f32.mrb[0].mxu0
      %1580 = vdwg.mxu0
      %v1581 = vmul.f32 %v1553, 0.35355338
      %v1582 = vmul.f32 %v1558, 0.35355338
      %v1583 = vmul.f32 %v1563, 0.35355338
      %v1584 = vmul.f32 %v1568, 0.35355338
      %v1585 = vmul.f32 %v1573, 0.35355338
      %v1586 = vmul.f32 %v1578, 0.35355338
      %v1587 = vadd.f32 %v1581, %v289
      %v1588 = vadd.f32 %v1582, %v290
      %v1589 = vadd.f32 %v1583, %v291
      %v1590 = vadd.f32 %v1584, %v292
      %v1591 = vadd.f32 %v1585, %v293
      %v1592 = vadd.f32 %v1586, %v294
      %v1593 = vsel %vm536, %v1587, -inf
      %1594 = vmax.xlane.f32.xlu0 %v1593
      %v1595 = vpop.xlane.xlu0 %1594
      %v1596 = vsel %vm536, %v1588, -inf
      %1597 = vmax.xlane.f32.xlu0 %v1596
      %v1598 = vpop.xlane.xlu0 %1597
      %v1599 = vsel %vm536, %v1589, -inf
      %1600 = vmax.xlane.f32.xlu0 %v1599
      %v1601 = vpop.xlane.xlu0 %1600
      %v1602 = vsel %vm536, %v1590, -inf
      %1603 = vmax.xlane.f32.xlu0 %v1602
      %v1604 = vpop.xlane.xlu0 %1603
      %v1605 = vsel %vm536, %v1591, -inf
      %1606 = vmax.xlane.f32.xlu0 %v1605
      %v1607 = vpop.xlane.xlu0 %1606
      %v1608 = vsel %vm536, %v1592, -inf
      %1609 = vmax.xlane.f32.xlu0 %v1608
      %v1610 = vpop.xlane.xlu0 %1609
      %v1611 = vsub.f32 %v1587, %v1595
      %v1612 = vsub.f32 %v1588, %v1598
      %v1613 = vsub.f32 %v1589, %v1601
      %v1614 = vsub.f32 %v1590, %v1604
      %v1615 = vsub.f32 %v1591, %v1607
      %v1616 = vsub.f32 %v1592, %v1610
      %v1617 = vmul.f32 %v1611, 1.442695
      %v1618 = vpow.pop %v1617
      %v1619 = vmul.f32 %v1612, 1.442695
      %v1620 = vpow.pop %v1619
      %v1621 = vmul.f32 %v1613, 1.442695
      %v1622 = vpow.pop %v1621
      %v1623 = vmul.f32 %v1614, 1.442695
      %v1624 = vpow.pop %v1623
      %v1625 = vmul.f32 %v1615, 1.442695
      %v1626 = vpow.pop %v1625
      %v1627 = vmul.f32 %v1616, 1.442695
      %v1628 = vpow.pop %v1627
      %v1629 = vsel %vm536, %v1618, 0.0
      %1630 = vadd.xlane.f32.xlu0 %v1629
      %v1631 = vpop.xlane.xlu0 %1630
      %v1632 = vsel %vm536, %v1620, 0.0
      %1633 = vadd.xlane.f32.xlu0 %v1632
      %v1634 = vpop.xlane.xlu0 %1633
      %v1635 = vsel %vm536, %v1622, 0.0
      %1636 = vadd.xlane.f32.xlu0 %v1635
      %v1637 = vpop.xlane.xlu0 %1636
      %v1638 = vsel %vm536, %v1624, 0.0
      %1639 = vadd.xlane.f32.xlu0 %v1638
      %v1640 = vpop.xlane.xlu0 %1639
      %v1641 = vsel %vm536, %v1626, 0.0
      %1642 = vadd.xlane.f32.xlu0 %v1641
      %v1643 = vpop.xlane.xlu0 %1642
      %v1644 = vsel %vm536, %v1628, 0.0
      %1645 = vadd.xlane.f32.xlu0 %v1644
      %v1646 = vpop.xlane.xlu0 %1645
      %v1647 = vrcp.pop %v1631
      %v1648 = vrcp.pop %v1634
      %v1649 = vrcp.pop %v1637
      %v1650 = vrcp.pop %v1640
      %v1651 = vrcp.pop %v1643
      %v1652 = vrcp.pop %v1646
      %1653 = vrot.lane.b32.xlu0 %v364, 40
      %v1654 = vpop.permute.xlu0 %1653
      %1655 = vrot.lane.b32.xlu0 %v367, 40
      %v1656 = vpop.permute.xlu0 %1655
      %1657 = vrot.lane.b32.xlu0 %v372, 40
      %v1658 = vpop.permute.xlu0 %1657
      %1659 = vrot.lane.b32.xlu0 %v375, 40
      %v1660 = vpop.permute.xlu0 %1659
      %1661 = vrot.lane.b32.xlu0 %v380, 40
      %v1662 = vpop.permute.xlu0 %1661
      %1663 = vrot.lane.b32.xlu0 %v383, 40
      %v1664 = vpop.permute.xlu0 %1663
      %v1672 = vsel %vm536, %v1618, 0
      %v1675 = vsel %vm536, %v1620, 0
      %v1678 = vsel %vm536, %v1622, 0
      %v1681 = vsel %vm536, %v1624, 0
      %v1684 = vsel %vm536, %v1626, 0
      %v1687 = vsel %vm536, %v1628, 0
      %1689 = vmatprep.subr.mxu0 0.0
      %1690 = vmatpush1.msra.mxu0 %v1654
      %1691 = vmatprep.subr.mxu0 0.0
      %1692 = vmatpush1.msra.mxu0 %v1656
      %1693 = vmatprep.subr.mxu0 0.0
      %1694 = vmatpush1.msra.mxu0 %v1658
      %1695 = vmatprep.subr.mxu0 0.0
      %1696 = vmatpush1.msra.mxu0 %v1660
      %1697 = vmatprep.subr.mxu0 0.0
      %1698 = vmatpush1.msra.mxu0 %v1662
      %1699 = vmatprep.subr.mxu0 0.0
      %1700 = vmatpush1.msra.mxu0 %v1664
      %1701 = vmatprep.subr.mxu0 0.0
      %1702 = vmatpush1.msra.mxu0 0.0
      %1703 = vmatprep.subr.mxu0 0.0
      %1704 = vmatpush1.msra.mxu0 0.0
      %1705 = vmatprep.subr.mxu0 0.0
      %1706 = vmatpush1.msra.mxu0 0.0
      %1707 = vmatprep.subr.mxu0 0.0
      %1708 = vmatpush1.msra.mxu0 0.0
      %1709 = vmatprep.subr.mxu0 0.0
      %1710 = vmatpush1.msra.mxu0 0.0
      %1711 = vmatprep.subr.mxu0 0.0
      %1712 = vmatpush1.msra.mxu0 0.0
      %1713 = vmatprep.subr.mxu0 0.0
      %1714 = vmatpush1.msra.mxu0 0.0
      %1715 = vmatprep.subr.mxu0 0.0
      %1716 = vmatpush1.msra.mxu0 0.0
      %1717 = vmatprep.subr.mxu0 0.0
      %1718 = vmatpush1.msra.mxu0 0.0
      %1719 = vmatprep.subr.mxu0 0.0
      %1720 = vmatpush1.msra.mxu0 0.0
      %1721 = vmatprep.subr.mxu0 0.0
      %1722 = vmatpush1.msra.mxu0 0.0
      %1723 = vmatprep.subr.mxu0 0.0
      %1724 = vmatpush1.msra.mxu0 0.0
      %1725 = vmatprep.subr.mxu0 0.0
      %1726 = vmatpush1.msra.mxu0 0.0
      %1727 = vmatprep.subr.mxu0 0.0
      %1728 = vmatpush1.msra.mxu0 0.0
      %1729 = vmatprep.subr.mxu0 0.0
      %1730 = vmatpush1.msra.mxu0 0.0
      %1731 = vmatprep.subr.mxu0 0.0
      %1732 = vmatpush1.msra.mxu0 0.0
      %1733 = vmatprep.subr.mxu0 0.0
      %1734 = vmatpush1.msra.mxu0 0.0
      %1735 = vmatprep.subr.mxu0 0.0
      %1736 = vmatpush1.msra.mxu0 0.0
      %1737 = vmatprep.subr.mxu0 0.0
      %1738 = vmatpush1.msra.mxu0 0.0
      %1739 = vmatprep.subr.mxu0 0.0
      %1740 = vmatpush1.msra.mxu0 0.0
      %1741 = vmatprep.subr.mxu0 0.0
      %1742 = vmatpush1.msra.mxu0 0.0
      %1743 = vmatprep.subr.mxu0 0.0
      %1744 = vmatpush1.msra.mxu0 0.0
      %1745 = vmatprep.subr.mxu0 0.0
      %1746 = vmatpush1.msra.mxu0 0.0
      %1747 = vmatprep.subr.mxu0 0.0
      %1748 = vmatpush1.msra.mxu0 0.0
      %1749 = vmatprep.subr.mxu0 0.0
      %1750 = vmatpush1.msra.mxu0 0.0
      %1751 = vmatprep.subr.mxu0 0.0
      %1752 = vmatpush1.msra.mxu0 0.0
      %1753 = vmatprep.mubr.f32.mxu0 0.0
      %1754 = vmatmul.mubr.f32.gmra.mrb[0].mxu0 %v1672
      %v1755 = vpop.f32.mrb[0].mxu0
      %v1756 = vadd.f32 0.0, %v1755
      %v1757 = vpop.f32.mrb[0].mxu0
      %1758 = vmatprep.mubr.f32.mxu0 0.0
      %1759 = vmatmul.mubr.f32.gmra.mrb[0].mxu0 %v1675
      %v1760 = vpop.f32.mrb[0].mxu0
      %v1761 = vadd.f32 0.0, %v1760
      %v1762 = vpop.f32.mrb[0].mxu0
      %1763 = vmatprep.mubr.f32.mxu0 0.0
      %1764 = vmatmul.mubr.f32.gmra.mrb[0].mxu0 %v1678
      %v1765 = vpop.f32.mrb[0].mxu0
      %v1766 = vadd.f32 0.0, %v1765
      %v1767 = vpop.f32.mrb[0].mxu0
      %1768 = vmatprep.mubr.f32.mxu0 0.0
      %1769 = vmatmul.mubr.f32.gmra.mrb[0].mxu0 %v1681
      %v1770 = vpop.f32.mrb[0].mxu0
      %v1771 = vadd.f32 0.0, %v1770
      %v1772 = vpop.f32.mrb[0].mxu0
      %1773 = vmatprep.mubr.f32.mxu0 0.0
      %1774 = vmatmul.mubr.f32.gmra.mrb[0].mxu0 %v1684
      %v1775 = vpop.f32.mrb[0].mxu0
      %v1776 = vadd.f32 0.0, %v1775
      %v1777 = vpop.f32.mrb[0].mxu0
      %1778 = vmatprep.mubr.f32.mxu0 0.0
      %1779 = vmatmul.mubr.f32.gmra.mrb[0].mxu0 %v1687
      %v1780 = vpop.f32.mrb[0].mxu0
      %v1781 = vadd.f32 0.0, %v1780
      %v1782 = vpop.f32.mrb[0].mxu0
      %1783 = vdwg.mxu0
      %v1784 = vmul.f32 %v1756, %v1647
      %v1785 = vmul.f32 %v1761, %v1648
      %v1786 = vmul.f32 %v1766, %v1649
      %v1787 = vmul.f32 %v1771, %v1650
      %v1788 = vmul.f32 %v1776, %v1651
      %v1789 = vmul.f32 %v1781, %v1652
      %1796 = vrot.lane.b32.xlu0 %v1080, 8
      %v1797 = vpop.permute.xlu0 %1796
      %1798 = vrot.lane.b32.xlu0 %v1081, 8
      %v1799 = vpop.permute.xlu0 %1798
      %1800 = vrot.lane.b32.xlu0 %v1082, 8
      %v1801 = vpop.permute.xlu0 %1800
      %1802 = vrot.lane.b32.xlu0 %v1083, 8
      %v1803 = vpop.permute.xlu0 %1802
      %1804 = vrot.lane.b32.xlu0 %v1084, 8
      %v1805 = vpop.permute.xlu0 %1804
      %1806 = vrot.lane.b32.xlu0 %v1085, 8
      %v1807 = vpop.permute.xlu0 %1806
      %1820 = vrot.lane.b32.xlu0 %v1432, 16
      %v1821 = vpop.permute.xlu0 %1820
      %1822 = vrot.lane.b32.xlu0 %v1433, 16
      %v1823 = vpop.permute.xlu0 %1822
      %1824 = vrot.lane.b32.xlu0 %v1434, 16
      %v1825 = vpop.permute.xlu0 %1824
      %1826 = vrot.lane.b32.xlu0 %v1435, 16
      %v1827 = vpop.permute.xlu0 %1826
      %1828 = vrot.lane.b32.xlu0 %v1436, 16
      %v1829 = vpop.permute.xlu0 %1828
      %1830 = vrot.lane.b32.xlu0 %v1437, 16
      %v1831 = vpop.permute.xlu0 %1830
      %1844 = vrot.lane.b32.xlu0 %v1784, 24
      %v1845 = vpop.permute.xlu0 %1844
      %1846 = vrot.lane.b32.xlu0 %v1785, 24
      %v1847 = vpop.permute.xlu0 %1846
      %1848 = vrot.lane.b32.xlu0 %v1786, 24
      %v1849 = vpop.permute.xlu0 %1848
      %1850 = vrot.lane.b32.xlu0 %v1787, 24
      %v1851 = vpop.permute.xlu0 %1850
      %1852 = vrot.lane.b32.xlu0 %v1788, 24
      %v1853 = vpop.permute.xlu0 %1852
      %1854 = vrot.lane.b32.xlu0 %v1789, 24
      %v1855 = vpop.permute.xlu0 %1854
      %v1862 = vsel %vm404, %v728, %v1797
      %v1863 = vsel %vm404, %v729, %v1799
      %v1864 = vsel %vm404, %v730, %v1801
      %v1865 = vsel %vm404, %v731, %v1803
      %v1866 = vsel %vm404, %v732, %v1805
      %v1867 = vsel %vm404, %v733, %v1807
      %vm1868 = vcmask 130048
      %v1869 = vsel %vm1868, %v1862, %v1821
      %v1870 = vsel %vm1868, %v1863, %v1823
      %v1871 = vsel %vm1868, %v1864, %v1825
      %v1872 = vsel %vm1868, %v1865, %v1827
      %v1873 = vsel %vm1868, %v1866, %v1829
      %v1874 = vsel %vm1868, %v1867, %v1831
      %vm1875 = vcmask 195584
      %v1876 = vsel %vm1875, %v1869, %v1845
      %v1877 = vsel %vm1875, %v1870, %v1847
      %v1878 = vsel %vm1875, %v1871, %v1849
      %v1879 = vsel %vm1875, %v1872, %v1851
      %v1880 = vsel %vm1875, %v1873, %v1853
      %v1881 = vsel %vm1875, %v1874, %v1855
      %v1882 = vpack.c.bf16 %v1877, %v1876
      %v1883 = vpack.c.bf16 %v1879, %v1878
      %v1884 = vpack.c.bf16 %v1881, %v1880
      %v1885 = vld [vmem:[%s3] sm:$0xf]
      %v1886 = vld [vmem:[%s3 + $0x4] sm:$0xf]
      %v1887 = vld [vmem:[%s3 + $0x8] sm:$0xf]
      %v1888 = vld [vmem:[%s3 + $0xc] sm:$0xf]
      %v1889 = vlaneseq
      %v1890 = vshrl.u32 %v1889, 7
      %v1891 = vsub.s32 1, %v1890
      %v1892 = vrot.slane %v295, %v1891
      %v1897 = vunpack.c.l.b16 %v1885
      %v1898 = vunpack.c.l.b16 %v1886
      %v1899 = vunpack.c.l.b16 %v1887
      %v1900 = vunpack.c.l.b16 %v1888
      %v1901 = vpack.c.b16 %v1898, %v1897
      %v1902 = vpack.c.b16 %v1900, %v1899
      %v1906 = vsel %vm319, %v1882, 0
      %v1909 = vsel %vm319, %v1883, 0
      %v1912 = vsel %vm319, %v1884, 0
      %1914 = vmatprep.subr.bf16.mxu0 0
      %1915 = vmatpush1.bf16.msra.mxu0 %v1901
      %1916 = vmatprep.subr.bf16.mxu0 0
      %1917 = vmatpush1.bf16.msra.mxu0 %v1902
      %1918 = vmatprep.subr.bf16.mxu0 0
      %1919 = vmatpush1.bf16.msra.mxu0 0
      %1920 = vmatprep.subr.bf16.mxu0 0
      %1921 = vmatpush1.bf16.msra.mxu0 0
      %1922 = vmatprep.subr.bf16.mxu0 0
      %1923 = vmatpush1.bf16.msra.mxu0 0
      %1924 = vmatprep.subr.bf16.mxu0 0
      %1925 = vmatpush1.bf16.msra.mxu0 0
      %1926 = vmatprep.subr.bf16.mxu0 0
      %1927 = vmatpush1.bf16.msra.mxu0 0
      %1928 = vmatprep.subr.bf16.mxu0 0
      %1929 = vmatpush1.bf16.msra.mxu0 0
      %1930 = vmatprep.subr.bf16.mxu0 0
      %1931 = vmatpush1.bf16.msra.mxu0 0
      %1932 = vmatprep.subr.bf16.mxu0 0
      %1933 = vmatpush1.bf16.msra.mxu0 0
      %1934 = vmatprep.subr.bf16.mxu0 0
      %1935 = vmatpush1.bf16.msra.mxu0 0
      %1936 = vmatprep.subr.bf16.mxu0 0
      %1937 = vmatpush1.bf16.msra.mxu0 0
      %1938 = vmatprep.subr.bf16.mxu0 0
      %1939 = vmatpush1.bf16.msra.mxu0 0
      %1940 = vmatprep.subr.bf16.mxu0 0
      %1941 = vmatpush1.bf16.msra.mxu0 0
      %1942 = vmatprep.subr.bf16.mxu0 0
      %1943 = vmatpush1.bf16.msra.mxu0 0
      %1944 = vmatprep.subr.bf16.mxu0 0
      %1945 = vmatpush1.bf16.msra.mxu0 0
      %1946 = vmatprep.mubr.bf16.mxu0 0
      %1947 = vmatmul.mubr.bf16.gmra.mrb[0].mxu0 %v1906
      %v1948 = vpop.f32.mrb[0].mxu0
      %v1949 = vadd.f32 %v1892, %v1948
      %v1950 = vpop.f32.mrb[0].mxu0
      %v1951 = vpop.f32.mrb[0].mxu0
      %v1952 = vadd.f32 %v1892, %v1951
      %v1953 = vpop.f32.mrb[0].mxu0
      %1954 = vmatprep.mubr.bf16.mxu0 0
      %1955 = vmatmul.mubr.bf16.gmra.mrb[0].mxu0 %v1909
      %v1956 = vpop.f32.mrb[0].mxu0
      %v1957 = vadd.f32 %v1892, %v1956
      %v1958 = vpop.f32.mrb[0].mxu0
      %v1959 = vpop.f32.mrb[0].mxu0
      %v1960 = vadd.f32 %v1892, %v1959
      %v1961 = vpop.f32.mrb[0].mxu0
      %1962 = vmatprep.mubr.bf16.mxu0 0
      %1963 = vmatmul.mubr.bf16.gmra.mrb[0].mxu0 %v1912
      %v1964 = vpop.f32.mrb[0].mxu0
      %v1965 = vadd.f32 %v1892, %v1964
      %v1966 = vpop.f32.mrb[0].mxu0
      %v1967 = vpop.f32.mrb[0].mxu0
      %v1968 = vadd.f32 %v1892, %v1967
      %v1969 = vpop.f32.mrb[0].mxu0
      %1970 = vdwg.mxu0
      %v1971 = vadd.f32 %v283, %v1949
      %v1972 = vadd.f32 %v284, %v1952
      %v1973 = vadd.f32 %v285, %v1957
      %v1974 = vadd.f32 %v286, %v1960
      %v1975 = vadd.f32 %v287, %v1965
      %v1976 = vadd.f32 %v288, %v1968
      %v1977 = vsel %vm319, %v1971, 0.0
      %1978 = vadd.xlane.f32.xlu0 %v1977
      %v1979 = vpop.xlane.xlu0 %1978
      %v1980 = vsel %vm319, %v1972, 0.0
      %1981 = vadd.xlane.f32.xlu0 %v1980
      %v1982 = vpop.xlane.xlu0 %1981
      %v1983 = vsel %vm319, %v1973, 0.0
      %1984 = vadd.xlane.f32.xlu0 %v1983
      %v1985 = vpop.xlane.xlu0 %1984
      %v1986 = vsel %vm319, %v1974, 0.0
      %1987 = vadd.xlane.f32.xlu0 %v1986
      %v1988 = vpop.xlane.xlu0 %1987
      %v1989 = vsel %vm319, %v1975, 0.0
      %1990 = vadd.xlane.f32.xlu0 %v1989
      %v1991 = vpop.xlane.xlu0 %1990
      %v1992 = vsel %vm319, %v1976, 0.0
      %1993 = vadd.xlane.f32.xlu0 %v1992
      %v1994 = vpop.xlane.xlu0 %1993
      %v1995 = vrcp.pop 32.0
      %v1996 = vmul.f32 %v1979, %v1995
      %v1997 = vmul.f32 %v1982, %v1995
      %v1998 = vmul.f32 %v1985, %v1995
      %v1999 = vmul.f32 %v1988, %v1995
      %v2000 = vmul.f32 %v1991, %v1995
      %v2001 = vmul.f32 %v1994, %v1995
      %v2002 = vsub.f32 %v1971, %v1996
      %v2003 = vsub.f32 %v1972, %v1997
      %v2004 = vsub.f32 %v1973, %v1998
      %v2005 = vsub.f32 %v1974, %v1999
      %v2006 = vsub.f32 %v1975, %v2000
      %v2007 = vsub.f32 %v1976, %v2001
      %v2008 = vmul.f32 %v2002, %v2002
      %v2009 = vmul.f32 %v2003, %v2003
      %v2010 = vmul.f32 %v2004, %v2004
      %v2011 = vmul.f32 %v2005, %v2005
      %v2012 = vmul.f32 %v2006, %v2006
      %v2013 = vmul.f32 %v2007, %v2007
      %v2014 = vsel %vm319, %v2008, 0.0
      %2015 = vadd.xlane.f32.xlu0 %v2014
      %v2016 = vpop.xlane.xlu0 %2015
      %v2017 = vsel %vm319, %v2009, 0.0
      %2018 = vadd.xlane.f32.xlu0 %v2017
      %v2019 = vpop.xlane.xlu0 %2018
      %v2020 = vsel %vm319, %v2010, 0.0
      %2021 = vadd.xlane.f32.xlu0 %v2020
      %v2022 = vpop.xlane.xlu0 %2021
      %v2023 = vsel %vm319, %v2011, 0.0
      %2024 = vadd.xlane.f32.xlu0 %v2023
      %v2025 = vpop.xlane.xlu0 %2024
      %v2026 = vsel %vm319, %v2012, 0.0
      %2027 = vadd.xlane.f32.xlu0 %v2026
      %v2028 = vpop.xlane.xlu0 %2027
      %v2029 = vsel %vm319, %v2013, 0.0
      %2030 = vadd.xlane.f32.xlu0 %v2029
      %v2031 = vpop.xlane.xlu0 %2030
      %v2032 = vmul.f32 %v2016, %v1995
      %v2033 = vmul.f32 %v2019, %v1995
      %v2034 = vmul.f32 %v2022, %v1995
      %v2035 = vmul.f32 %v2025, %v1995
      %v2036 = vmul.f32 %v2028, %v1995
      %v2037 = vmul.f32 %v2031, %v1995
      %v2038 = vadd.f32 %v2032, 1e-05
      %v2039 = vadd.f32 %v2033, 1e-05
      %v2040 = vadd.f32 %v2034, 1e-05
      %v2041 = vadd.f32 %v2035, 1e-05
      %v2042 = vadd.f32 %v2036, 1e-05
      %v2043 = vadd.f32 %v2037, 1e-05
      %v2044 = vrsqrt.pop %v2038
      %v2045 = vrsqrt.pop %v2039
      %v2046 = vrsqrt.pop %v2040
      %v2047 = vrsqrt.pop %v2041
      %v2048 = vrsqrt.pop %v2042
      %v2049 = vrsqrt.pop %v2043
      %v2050 = vmul.f32 %v2002, %v2044
      %v2051 = vmul.f32 %v2003, %v2045
      %v2052 = vmul.f32 %v2004, %v2046
      %v2053 = vmul.f32 %v2005, %v2047
      %v2054 = vmul.f32 %v2006, %v2048
      %v2055 = vmul.f32 %v2007, %v2049
      %v2056 = vlaneseq
      %v2057 = vshrl.u32 %v2056, 7
      %v2058 = vsub.s32 2, %v2057
      %v2059 = vrot.slane %v295, %v2058
      %v2060 = vmul.f32 %v2050, %v2059
      %v2061 = vmul.f32 %v2051, %v2059
      %v2062 = vmul.f32 %v2052, %v2059
      %v2063 = vmul.f32 %v2053, %v2059
      %v2064 = vmul.f32 %v2054, %v2059
      %v2065 = vmul.f32 %v2055, %v2059
      %v2066 = vlaneseq
      %v2067 = vshrl.u32 %v2066, 7
      %v2068 = vsub.s32 3, %v2067
      %v2069 = vrot.slane %v295, %v2068
      %v2070 = vadd.f32 %v2060, %v2069
      %v2071 = vadd.f32 %v2061, %v2069
      %v2072 = vadd.f32 %v2062, %v2069
      %v2073 = vadd.f32 %v2063, %v2069
      %v2074 = vadd.f32 %v2064, %v2069
      %v2075 = vadd.f32 %v2065, %v2069
      %v2076 = vpack.c.bf16 %v2071, %v2070
      %v2077 = vpack.c.bf16 %v2073, %v2072
      %v2078 = vpack.c.bf16 %v2075, %v2074
      %v2079 = vld [vmem:[%s4] sm:$0xf]
      %v2080 = vld [vmem:[%s4 + $0x4] sm:$0xf]
      %v2081 = vld [vmem:[%s4 + $0x8] sm:$0xf]
      %v2082 = vld [vmem:[%s4 + $0xc] sm:$0xf]
      %v2083 = vlaneseq
      %v2084 = vshrl.u32 %v2083, 7
      %v2085 = vsub.s32 4, %v2084
      %v2086 = vrot.slane %v295, %v2085
      %v2091 = vunpack.c.l.b16 %v2079
      %v2092 = vunpack.c.l.b16 %v2080
      %v2093 = vunpack.c.l.b16 %v2081
      %v2094 = vunpack.c.l.b16 %v2082
      %v2095 = vpack.c.b16 %v2092, %v2091
      %v2096 = vpack.c.b16 %v2094, %v2093
      %v2100 = vsel %vm319, %v2076, 0
      %v2103 = vsel %vm319, %v2077, 0
      %v2106 = vsel %vm319, %v2078, 0
      %2108 = vmatprep.subr.bf16.mxu0 0
      %2109 = vmatpush1.bf16.msra.mxu0 %v2095
      %2110 = vmatprep.subr.bf16.mxu0 0
      %2111 = vmatpush1.bf16.msra.mxu0 %v2096
      %2112 = vmatprep.subr.bf16.mxu0 0
      %2113 = vmatpush1.bf16.msra.mxu0 0
      %2114 = vmatprep.subr.bf16.mxu0 0
      %2115 = vmatpush1.bf16.msra.mxu0 0
      %2116 = vmatprep.subr.bf16.mxu0 0
      %2117 = vmatpush1.bf16.msra.mxu0 0
      %2118 = vmatprep.subr.bf16.mxu0 0
      %2119 = vmatpush1.bf16.msra.mxu0 0
      %2120 = vmatprep.subr.bf16.mxu0 0
      %2121 = vmatpush1.bf16.msra.mxu0 0
      %2122 = vmatprep.subr.bf16.mxu0 0
      %2123 = vmatpush1.bf16.msra.mxu0 0
      %2124 = vmatprep.subr.bf16.mxu0 0
      %2125 = vmatpush1.bf16.msra.mxu0 0
      %2126 = vmatprep.subr.bf16.mxu0 0
      %2127 = vmatpush1.bf16.msra.mxu0 0
      %2128 = vmatprep.subr.bf16.mxu0 0
      %2129 = vmatpush1.bf16.msra.mxu0 0
      %2130 = vmatprep.subr.bf16.mxu0 0
      %2131 = vmatpush1.bf16.msra.mxu0 0
      %2132 = vmatprep.subr.bf16.mxu0 0
      %2133 = vmatpush1.bf16.msra.mxu0 0
      %2134 = vmatprep.subr.bf16.mxu0 0
      %2135 = vmatpush1.bf16.msra.mxu0 0
      %2136 = vmatprep.subr.bf16.mxu0 0
      %2137 = vmatpush1.bf16.msra.mxu0 0
      %2138 = vmatprep.subr.bf16.mxu0 0
      %2139 = vmatpush1.bf16.msra.mxu0 0
      %2140 = vmatprep.mubr.bf16.mxu0 0
      %2141 = vmatmul.mubr.bf16.gmra.mrb[0].mxu0 %v2100
      %v2142 = vpop.f32.mrb[0].mxu0
      %v2143 = vadd.f32 %v2086, %v2142
      %v2144 = vpop.f32.mrb[0].mxu0
      %v2145 = vpop.f32.mrb[0].mxu0
      %v2146 = vadd.f32 %v2086, %v2145
      %v2147 = vpop.f32.mrb[0].mxu0
      %2148 = vmatprep.mubr.bf16.mxu0 0
      %2149 = vmatmul.mubr.bf16.gmra.mrb[0].mxu0 %v2103
      %v2150 = vpop.f32.mrb[0].mxu0
      %v2151 = vadd.f32 %v2086, %v2150
      %v2152 = vpop.f32.mrb[0].mxu0
      %v2153 = vpop.f32.mrb[0].mxu0
      %v2154 = vadd.f32 %v2086, %v2153
      %v2155 = vpop.f32.mrb[0].mxu0
      %2156 = vmatprep.mubr.bf16.mxu0 0
      %2157 = vmatmul.mubr.bf16.gmra.mrb[0].mxu0 %v2106
      %v2158 = vpop.f32.mrb[0].mxu0
      %v2159 = vadd.f32 %v2086, %v2158
      %v2160 = vpop.f32.mrb[0].mxu0
      %v2161 = vpop.f32.mrb[0].mxu0
      %v2162 = vadd.f32 %v2086, %v2161
      %v2163 = vpop.f32.mrb[0].mxu0
      %2164 = vdwg.mxu0
      %v2165 = vmax.f32 %v2143, 0.0
      %v2166 = vmax.f32 %v2146, 0.0
      %v2167 = vmax.f32 %v2151, 0.0
      %v2168 = vmax.f32 %v2154, 0.0
      %v2169 = vmax.f32 %v2159, 0.0
      %v2170 = vmax.f32 %v2162, 0.0
      %v2171 = vpack.c.bf16 %v2166, %v2165
      %v2172 = vpack.c.bf16 %v2168, %v2167
      %v2173 = vpack.c.bf16 %v2170, %v2169
      %v2174 = vld [vmem:[%s5] sm:$0xf]
      %v2175 = vld [vmem:[%s5 + $0x4] sm:$0xf]
      %v2176 = vld [vmem:[%s5 + $0x8] sm:$0xf]
      %v2177 = vld [vmem:[%s5 + $0xc] sm:$0xf]
      %v2178 = vld [vmem:[%s5 + $0x10] sm:$0xf]
      %v2179 = vld [vmem:[%s5 + $0x14] sm:$0xf]
      %v2180 = vld [vmem:[%s5 + $0x18] sm:$0xf]
      %v2181 = vld [vmem:[%s5 + $0x1c] sm:$0xf]
      %v2182 = vld [vmem:[%s5 + $0x20] sm:$0xf]
      %v2183 = vld [vmem:[%s5 + $0x24] sm:$0xf]
      %v2184 = vld [vmem:[%s5 + $0x28] sm:$0xf]
      %v2185 = vld [vmem:[%s5 + $0x2c] sm:$0xf]
      %v2186 = vld [vmem:[%s5 + $0x30] sm:$0xf]
      %v2187 = vld [vmem:[%s5 + $0x34] sm:$0xf]
      %v2188 = vld [vmem:[%s5 + $0x38] sm:$0xf]
      %v2189 = vld [vmem:[%s5 + $0x3c] sm:$0xf]
      %v2190 = vlaneseq
      %v2191 = vshrl.u32 %v2190, 7
      %v2192 = vsub.s32 5, %v2191
      %v2193 = vrot.slane %v295, %v2192
      %v2210 = vunpack.c.l.b16 %v2174
      %v2211 = vunpack.c.l.b16 %v2175
      %v2212 = vunpack.c.l.b16 %v2176
      %v2213 = vunpack.c.l.b16 %v2177
      %v2214 = vunpack.c.l.b16 %v2178
      %v2215 = vunpack.c.l.b16 %v2179
      %v2216 = vunpack.c.l.b16 %v2180
      %v2217 = vunpack.c.l.b16 %v2181
      %v2218 = vunpack.c.l.b16 %v2182
      %v2219 = vunpack.c.l.b16 %v2183
      %v2220 = vunpack.c.l.b16 %v2184
      %v2221 = vunpack.c.l.b16 %v2185
      %v2222 = vunpack.c.l.b16 %v2186
      %v2223 = vunpack.c.l.b16 %v2187
      %v2224 = vunpack.c.l.b16 %v2188
      %v2225 = vunpack.c.l.b16 %v2189
      %v2226 = vpack.c.b16 %v2211, %v2210
      %v2227 = vpack.c.b16 %v2213, %v2212
      %v2228 = vpack.c.b16 %v2215, %v2214
      %v2229 = vpack.c.b16 %v2217, %v2216
      %v2230 = vpack.c.b16 %v2219, %v2218
      %v2231 = vpack.c.b16 %v2221, %v2220
      %v2232 = vpack.c.b16 %v2223, %v2222
      %v2233 = vpack.c.b16 %v2225, %v2224
      %2242 = vmatprep.subr.bf16.mxu0 0
      %2243 = vmatpush1.bf16.msra.mxu0 %v2226
      %2244 = vmatprep.subr.bf16.mxu0 0
      %2245 = vmatpush1.bf16.msra.mxu0 %v2227
      %2246 = vmatprep.subr.bf16.mxu0 0
      %2247 = vmatpush1.bf16.msra.mxu0 %v2228
      %2248 = vmatprep.subr.bf16.mxu0 0
      %2249 = vmatpush1.bf16.msra.mxu0 %v2229
      %2250 = vmatprep.subr.bf16.mxu0 0
      %2251 = vmatpush1.bf16.msra.mxu0 %v2230
      %2252 = vmatprep.subr.bf16.mxu0 0
      %2253 = vmatpush1.bf16.msra.mxu0 %v2231
      %2254 = vmatprep.subr.bf16.mxu0 0
      %2255 = vmatpush1.bf16.msra.mxu0 %v2232
      %2256 = vmatprep.subr.bf16.mxu0 0
      %2257 = vmatpush1.bf16.msra.mxu0 %v2233
      %2258 = vmatprep.subr.bf16.mxu0 0
      %2259 = vmatpush1.bf16.msra.mxu0 0
      %2260 = vmatprep.subr.bf16.mxu0 0
      %2261 = vmatpush1.bf16.msra.mxu0 0
      %2262 = vmatprep.subr.bf16.mxu0 0
      %2263 = vmatpush1.bf16.msra.mxu0 0
      %2264 = vmatprep.subr.bf16.mxu0 0
      %2265 = vmatpush1.bf16.msra.mxu0 0
      %2266 = vmatprep.subr.bf16.mxu0 0
      %2267 = vmatpush1.bf16.msra.mxu0 0
      %2268 = vmatprep.subr.bf16.mxu0 0
      %2269 = vmatpush1.bf16.msra.mxu0 0
      %2270 = vmatprep.subr.bf16.mxu0 0
      %2271 = vmatpush1.bf16.msra.mxu0 0
      %2272 = vmatprep.subr.bf16.mxu0 0
      %2273 = vmatpush1.bf16.msra.mxu0 0
      %2274 = vmatprep.mubr.bf16.mxu0 0
      %2275 = vmatmul.mubr.bf16.gmra.mrb[0].mxu0 %v2171
      %v2276 = vpop.f32.mrb[0].mxu0
      %v2277 = vadd.f32 %v2193, %v2276
      %v2278 = vpop.f32.mrb[0].mxu0
      %v2279 = vpop.f32.mrb[0].mxu0
      %v2280 = vadd.f32 %v2193, %v2279
      %v2281 = vpop.f32.mrb[0].mxu0
      %2282 = vmatprep.mubr.bf16.mxu0 0
      %2283 = vmatmul.mubr.bf16.gmra.mrb[0].mxu0 %v2172
      %v2284 = vpop.f32.mrb[0].mxu0
      %v2285 = vadd.f32 %v2193, %v2284
      %v2286 = vpop.f32.mrb[0].mxu0
      %v2287 = vpop.f32.mrb[0].mxu0
      %v2288 = vadd.f32 %v2193, %v2287
      %v2289 = vpop.f32.mrb[0].mxu0
      %2290 = vmatprep.mubr.bf16.mxu0 0
      %2291 = vmatmul.mubr.bf16.gmra.mrb[0].mxu0 %v2173
      %v2292 = vpop.f32.mrb[0].mxu0
      %v2293 = vadd.f32 %v2193, %v2292
      %v2294 = vpop.f32.mrb[0].mxu0
      %v2295 = vpop.f32.mrb[0].mxu0
      %v2296 = vadd.f32 %v2193, %v2295
      %v2297 = vpop.f32.mrb[0].mxu0
      %2298 = vdwg.mxu0
      %v2299 = vadd.f32 %v2070, %v2277
      %v2300 = vadd.f32 %v2071, %v2280
      %v2301 = vadd.f32 %v2072, %v2285
      %v2302 = vadd.f32 %v2073, %v2288
      %v2303 = vadd.f32 %v2074, %v2293
      %v2304 = vadd.f32 %v2075, %v2296
      %v2305 = vsel %vm319, %v2299, 0.0
      %2306 = vadd.xlane.f32.xlu0 %v2305
      %v2307 = vpop.xlane.xlu0 %2306
      %v2308 = vsel %vm319, %v2300, 0.0
      %2309 = vadd.xlane.f32.xlu0 %v2308
      %v2310 = vpop.xlane.xlu0 %2309
      %v2311 = vsel %vm319, %v2301, 0.0
      %2312 = vadd.xlane.f32.xlu0 %v2311
      %v2313 = vpop.xlane.xlu0 %2312
      %v2314 = vsel %vm319, %v2302, 0.0
      %2315 = vadd.xlane.f32.xlu0 %v2314
      %v2316 = vpop.xlane.xlu0 %2315
      %v2317 = vsel %vm319, %v2303, 0.0
      %2318 = vadd.xlane.f32.xlu0 %v2317
      %v2319 = vpop.xlane.xlu0 %2318
      %v2320 = vsel %vm319, %v2304, 0.0
      %2321 = vadd.xlane.f32.xlu0 %v2320
      %v2322 = vpop.xlane.xlu0 %2321
      %v2323 = vmul.f32 %v2307, %v1995
      %v2324 = vmul.f32 %v2310, %v1995
      %v2325 = vmul.f32 %v2313, %v1995
      %v2326 = vmul.f32 %v2316, %v1995
      %v2327 = vmul.f32 %v2319, %v1995
      %v2328 = vmul.f32 %v2322, %v1995
      %v2329 = vsub.f32 %v2299, %v2323
      %v2330 = vsub.f32 %v2300, %v2324
      %v2331 = vsub.f32 %v2301, %v2325
      %v2332 = vsub.f32 %v2302, %v2326
      %v2333 = vsub.f32 %v2303, %v2327
      %v2334 = vsub.f32 %v2304, %v2328
      %v2335 = vmul.f32 %v2329, %v2329
      %v2336 = vmul.f32 %v2330, %v2330
      %v2337 = vmul.f32 %v2331, %v2331
      %v2338 = vmul.f32 %v2332, %v2332
      %v2339 = vmul.f32 %v2333, %v2333
      %v2340 = vmul.f32 %v2334, %v2334
      %v2341 = vsel %vm319, %v2335, 0.0
      %2342 = vadd.xlane.f32.xlu0 %v2341
      %v2343 = vpop.xlane.xlu0 %2342
      %v2344 = vsel %vm319, %v2336, 0.0
      %2345 = vadd.xlane.f32.xlu0 %v2344
      %v2346 = vpop.xlane.xlu0 %2345
      %v2347 = vsel %vm319, %v2337, 0.0
      %2348 = vadd.xlane.f32.xlu0 %v2347
      %v2349 = vpop.xlane.xlu0 %2348
      %v2350 = vsel %vm319, %v2338, 0.0
      %2351 = vadd.xlane.f32.xlu0 %v2350
      %v2352 = vpop.xlane.xlu0 %2351
      %v2353 = vsel %vm319, %v2339, 0.0
      %2354 = vadd.xlane.f32.xlu0 %v2353
      %v2355 = vpop.xlane.xlu0 %2354
      %v2356 = vsel %vm319, %v2340, 0.0
      %2357 = vadd.xlane.f32.xlu0 %v2356
      %v2358 = vpop.xlane.xlu0 %2357
      %v2359 = vmul.f32 %v2343, %v1995
      %v2360 = vmul.f32 %v2346, %v1995
      %v2361 = vmul.f32 %v2349, %v1995
      %v2362 = vmul.f32 %v2352, %v1995
      %v2363 = vmul.f32 %v2355, %v1995
      %v2364 = vmul.f32 %v2358, %v1995
      %v2365 = vadd.f32 %v2359, 1e-05
      %v2366 = vadd.f32 %v2360, 1e-05
      %v2367 = vadd.f32 %v2361, 1e-05
      %v2368 = vadd.f32 %v2362, 1e-05
      %v2369 = vadd.f32 %v2363, 1e-05
      %v2370 = vadd.f32 %v2364, 1e-05
      %v2371 = vrsqrt.pop %v2365
      %v2372 = vrsqrt.pop %v2366
      %v2373 = vrsqrt.pop %v2367
      %v2374 = vrsqrt.pop %v2368
      %v2375 = vrsqrt.pop %v2369
      %v2376 = vrsqrt.pop %v2370
      %v2377 = vmul.f32 %v2329, %v2371
      %v2378 = vmul.f32 %v2330, %v2372
      %v2379 = vmul.f32 %v2331, %v2373
      %v2380 = vmul.f32 %v2332, %v2374
      %v2381 = vmul.f32 %v2333, %v2375
      %v2382 = vmul.f32 %v2334, %v2376
      %v2383 = vlaneseq
      %v2384 = vshrl.u32 %v2383, 7
      %v2385 = vsub.s32 6, %v2384
      %v2386 = vrot.slane %v295, %v2385
      %v2387 = vmul.f32 %v2377, %v2386
      %v2388 = vmul.f32 %v2378, %v2386
      %v2389 = vmul.f32 %v2379, %v2386
      %v2390 = vmul.f32 %v2380, %v2386
      %v2391 = vmul.f32 %v2381, %v2386
      %v2392 = vmul.f32 %v2382, %v2386
      %v2393 = vlaneseq
      %v2394 = vshrl.u32 %v2393, 7
      %v2395 = vsub.s32 7, %v2394
      %v2396 = vrot.slane %v295, %v2395
      %v2397 = vadd.f32 %v2387, %v2396
      %v2398 = vadd.f32 %v2388, %v2396
      %v2399 = vadd.f32 %v2389, %v2396
      %v2400 = vadd.f32 %v2390, %v2396
      %v2401 = vadd.f32 %v2391, %v2396
      %v2402 = vadd.f32 %v2392, %v2396
      %s2403 = scalar_lea.vmem %s6, 8
      %v2404 = vld [vmem:[%s2403] sm:$0xff]
      %v2405 = vpack.c.bf16 %v2398, %v2397
      %v2406 = vpack.c.bf16 %v2400, %v2399
      %v2407 = vpack.c.bf16 %v2402, %v2401
      %s2408 = scalar_lea.vmem %s2, 16
      %v2409 = vld [vmem:[%s2408] sm:$0xf]
      %v2410 = vld [vmem:[%s2408 + $0x4] sm:$0xf]
      %v2411 = vld [vmem:[%s2408 + $0x8] sm:$0xf]
      %v2412 = vld [vmem:[%s2408 + $0xc] sm:$0xf]
      %v2413 = vlaneseq
      %v2414 = vshrl.u32 %v2413, 7
      %v2415 = vsub.s32 0, %v2414
      %v2416 = vrot.slane %v2404, %v2415
      %v2421 = vunpack.c.l.b16 %v2409
      %v2422 = vunpack.c.l.b16 %v2410
      %v2423 = vunpack.c.l.b16 %v2411
      %v2424 = vunpack.c.l.b16 %v2412
      %v2425 = vpack.c.b16 %v2422, %v2421
      %v2426 = vpack.c.b16 %v2424, %v2423
      %v2430 = vsel %vm319, %v2405, 0
      %v2433 = vsel %vm319, %v2406, 0
      %v2436 = vsel %vm319, %v2407, 0
      %2438 = vmatprep.subr.bf16.mxu0 0
      %2439 = vmatpush1.bf16.msra.mxu0 %v2425
      %2440 = vmatprep.subr.bf16.mxu0 0
      %2441 = vmatpush1.bf16.msra.mxu0 %v2426
      %2442 = vmatprep.subr.bf16.mxu0 0
      %2443 = vmatpush1.bf16.msra.mxu0 0
      %2444 = vmatprep.subr.bf16.mxu0 0
      %2445 = vmatpush1.bf16.msra.mxu0 0
      %2446 = vmatprep.subr.bf16.mxu0 0
      %2447 = vmatpush1.bf16.msra.mxu0 0
      %2448 = vmatprep.subr.bf16.mxu0 0
      %2449 = vmatpush1.bf16.msra.mxu0 0
      %2450 = vmatprep.subr.bf16.mxu0 0
      %2451 = vmatpush1.bf16.msra.mxu0 0
      %2452 = vmatprep.subr.bf16.mxu0 0
      %2453 = vmatpush1.bf16.msra.mxu0 0
      %2454 = vmatprep.subr.bf16.mxu0 0
      %2455 = vmatpush1.bf16.msra.mxu0 0
      %2456 = vmatprep.subr.bf16.mxu0 0
      %2457 = vmatpush1.bf16.msra.mxu0 0
      %2458 = vmatprep.subr.bf16.mxu0 0
      %2459 = vmatpush1.bf16.msra.mxu0 0
      %2460 = vmatprep.subr.bf16.mxu0 0
      %2461 = vmatpush1.bf16.msra.mxu0 0
      %2462 = vmatprep.subr.bf16.mxu0 0
      %2463 = vmatpush1.bf16.msra.mxu0 0
      %2464 = vmatprep.subr.bf16.mxu0 0
      %2465 = vmatpush1.bf16.msra.mxu0 0
      %2466 = vmatprep.subr.bf16.mxu0 0
      %2467 = vmatpush1.bf16.msra.mxu0 0
      %2468 = vmatprep.subr.bf16.mxu0 0
      %2469 = vmatpush1.bf16.msra.mxu0 0
      %2470 = vmatprep.mubr.bf16.mxu0 0
      %2471 = vmatmul.mubr.bf16.gmra.mrb[0].mxu0 %v2430
      %v2472 = vpop.f32.mrb[0].mxu0
      %v2473 = vadd.f32 %v2416, %v2472
      %v2474 = vpop.f32.mrb[0].mxu0
      %v2475 = vpop.f32.mrb[0].mxu0
      %v2476 = vadd.f32 %v2416, %v2475
      %v2477 = vpop.f32.mrb[0].mxu0
      %2478 = vmatprep.mubr.bf16.mxu0 0
      %2479 = vmatmul.mubr.bf16.gmra.mrb[0].mxu0 %v2433
      %v2480 = vpop.f32.mrb[0].mxu0
      %v2481 = vadd.f32 %v2416, %v2480
      %v2482 = vpop.f32.mrb[0].mxu0
      %v2483 = vpop.f32.mrb[0].mxu0
      %v2484 = vadd.f32 %v2416, %v2483
      %v2485 = vpop.f32.mrb[0].mxu0
      %2486 = vmatprep.mubr.bf16.mxu0 0
      %2487 = vmatmul.mubr.bf16.gmra.mrb[0].mxu0 %v2436
      %v2488 = vpop.f32.mrb[0].mxu0
      %v2489 = vadd.f32 %v2416, %v2488
      %v2490 = vpop.f32.mrb[0].mxu0
      %v2491 = vpop.f32.mrb[0].mxu0
      %v2492 = vadd.f32 %v2416, %v2491
      %v2493 = vpop.f32.mrb[0].mxu0
      %2494 = vdwg.mxu0
      %2501 = vrot.lane.b32.xlu0 %v2473, 96
      %v2502 = vpop.permute.xlu0 %2501
      %2503 = vrot.lane.b32.xlu0 %v2476, 96
      %v2504 = vpop.permute.xlu0 %2503
      %2505 = vrot.lane.b32.xlu0 %v2481, 96
      %v2506 = vpop.permute.xlu0 %2505
      %2507 = vrot.lane.b32.xlu0 %v2484, 96
      %v2508 = vpop.permute.xlu0 %2507
      %2509 = vrot.lane.b32.xlu0 %v2489, 96
      %v2510 = vpop.permute.xlu0 %2509
      %2511 = vrot.lane.b32.xlu0 %v2492, 96
      %v2512 = vpop.permute.xlu0 %2511
      %v2513 = vsel %vm404, %v2473, 0
      %v2515 = vsel %vm404, %v2476, 0
      %v2517 = vsel %vm404, %v2481, 0
      %v2519 = vsel %vm404, %v2484, 0
      %v2521 = vsel %vm404, %v2489, 0
      %v2523 = vsel %vm404, %v2492, 0
      %v2525 = vsel %vm404, %v2502, 0
      %v2527 = vsel %vm404, %v2504, 0
      %v2529 = vsel %vm404, %v2506, 0
      %v2531 = vsel %vm404, %v2508, 0
      %v2533 = vsel %vm404, %v2510, 0
      %v2535 = vsel %vm404, %v2512, 0
      %2537 = vmatprep.subr.mxu0 0.0
      %2538 = vmatpush1.xpose.msra.mxu0 %v2525
      %2539 = vmatprep.subr.mxu0 0.0
      %2540 = vmatpush1.xpose.msra.mxu0 %v2527
      %2541 = vmatprep.subr.mxu0 0.0
      %2542 = vmatpush1.xpose.msra.mxu0 %v2529
      %2543 = vmatprep.subr.mxu0 0.0
      %2544 = vmatpush1.xpose.msra.mxu0 %v2531
      %2545 = vmatprep.subr.mxu0 0.0
      %2546 = vmatpush1.xpose.msra.mxu0 %v2533
      %2547 = vmatprep.subr.mxu0 0.0
      %2548 = vmatpush1.xpose.msra.mxu0 %v2535
      %2549 = vmatprep.subr.mxu0 0.0
      %2550 = vmatpush1.xpose.msra.mxu0 0.0
      %2551 = vmatprep.subr.mxu0 0.0
      %2552 = vmatpush1.xpose.msra.mxu0 0.0
      %2553 = vmatprep.subr.mxu0 0.0
      %2554 = vmatpush1.xpose.msra.mxu0 0.0
      %2555 = vmatprep.subr.mxu0 0.0
      %2556 = vmatpush1.xpose.msra.mxu0 0.0
      %2557 = vmatprep.subr.mxu0 0.0
      %2558 = vmatpush1.xpose.msra.mxu0 0.0
      %2559 = vmatprep.subr.mxu0 0.0
      %2560 = vmatpush1.xpose.msra.mxu0 0.0
      %2561 = vmatprep.subr.mxu0 0.0
      %2562 = vmatpush1.xpose.msra.mxu0 0.0
      %2563 = vmatprep.subr.mxu0 0.0
      %2564 = vmatpush1.xpose.msra.mxu0 0.0
      %2565 = vmatprep.subr.mxu0 0.0
      %2566 = vmatpush1.xpose.msra.mxu0 0.0
      %2567 = vmatprep.subr.mxu0 0.0
      %2568 = vmatpush1.xpose.msra.mxu0 0.0
      %2569 = vmatprep.subr.mxu0 0.0
      %2570 = vmatpush1.xpose.msra.mxu0 0.0
      %2571 = vmatprep.subr.mxu0 0.0
      %2572 = vmatpush1.xpose.msra.mxu0 0.0
      %2573 = vmatprep.subr.mxu0 0.0
      %2574 = vmatpush1.xpose.msra.mxu0 0.0
      %2575 = vmatprep.subr.mxu0 0.0
      %2576 = vmatpush1.xpose.msra.mxu0 0.0
      %2577 = vmatprep.subr.mxu0 0.0
      %2578 = vmatpush1.xpose.msra.mxu0 0.0
      %2579 = vmatprep.subr.mxu0 0.0
      %2580 = vmatpush1.xpose.msra.mxu0 0.0
      %2581 = vmatprep.subr.mxu0 0.0
      %2582 = vmatpush1.xpose.msra.mxu0 0.0
      %2583 = vmatprep.subr.mxu0 0.0
      %2584 = vmatpush1.xpose.msra.mxu0 0.0
      %2585 = vmatprep.subr.mxu0 0.0
      %2586 = vmatpush1.xpose.msra.mxu0 0.0
      %2587 = vmatprep.subr.mxu0 0.0
      %2588 = vmatpush1.xpose.msra.mxu0 0.0
      %2589 = vmatprep.subr.mxu0 0.0
      %2590 = vmatpush1.xpose.msra.mxu0 0.0
      %2591 = vmatprep.subr.mxu0 0.0
      %2592 = vmatpush1.xpose.msra.mxu0 0.0
      %2593 = vmatprep.subr.mxu0 0.0
      %2594 = vmatpush1.xpose.msra.mxu0 0.0
      %2595 = vmatprep.subr.mxu0 0.0
      %2596 = vmatpush1.xpose.msra.mxu0 0.0
      %2597 = vmatprep.subr.mxu0 0.0
      %2598 = vmatpush1.xpose.msra.mxu0 0.0
      %2599 = vmatprep.subr.mxu0 0.0
      %2600 = vmatpush1.xpose.msra.mxu0 0.0
      %2601 = vmatprep.mubr.f32.mxu0 0.0
      %2602 = vmatmul.mubr.f32.gmra.mrb[0].mxu0 %v2513
      %v2603 = vpop.f32.mrb[0].mxu0
      %v2604 = vadd.f32 0.0, %v2603
      %v2605 = vpop.f32.mrb[0].mxu0
      %2606 = vmatprep.mubr.f32.mxu0 0.0
      %2607 = vmatmul.mubr.f32.gmra.mrb[0].mxu0 %v2515
      %v2608 = vpop.f32.mrb[0].mxu0
      %v2609 = vadd.f32 0.0, %v2608
      %v2610 = vpop.f32.mrb[0].mxu0
      %2611 = vmatprep.mubr.f32.mxu0 0.0
      %2612 = vmatmul.mubr.f32.gmra.mrb[0].mxu0 %v2517
      %v2613 = vpop.f32.mrb[0].mxu0
      %v2614 = vadd.f32 0.0, %v2613
      %v2615 = vpop.f32.mrb[0].mxu0
      %2616 = vmatprep.mubr.f32.mxu0 0.0
      %2617 = vmatmul.mubr.f32.gmra.mrb[0].mxu0 %v2519
      %v2618 = vpop.f32.mrb[0].mxu0
      %v2619 = vadd.f32 0.0, %v2618
      %v2620 = vpop.f32.mrb[0].mxu0
      %2621 = vmatprep.mubr.f32.mxu0 0.0
      %2622 = vmatmul.mubr.f32.gmra.mrb[0].mxu0 %v2521
      %v2623 = vpop.f32.mrb[0].mxu0
      %v2624 = vadd.f32 0.0, %v2623
      %v2625 = vpop.f32.mrb[0].mxu0
      %2626 = vmatprep.mubr.f32.mxu0 0.0
      %2627 = vmatmul.mubr.f32.gmra.mrb[0].mxu0 %v2523
      %v2628 = vpop.f32.mrb[0].mxu0
      %v2629 = vadd.f32 0.0, %v2628
      %v2630 = vpop.f32.mrb[0].mxu0
      %2631 = vdwg.mxu0
      %v2632 = vmul.f32 %v2604, 0.35355338
      %v2633 = vmul.f32 %v2609, 0.35355338
      %v2634 = vmul.f32 %v2614, 0.35355338
      %v2635 = vmul.f32 %v2619, 0.35355338
      %v2636 = vmul.f32 %v2624, 0.35355338
      %v2637 = vmul.f32 %v2629, 0.35355338
      %v2638 = vadd.f32 %v2632, %v289
      %v2639 = vadd.f32 %v2633, %v290
      %v2640 = vadd.f32 %v2634, %v291
      %v2641 = vadd.f32 %v2635, %v292
      %v2642 = vadd.f32 %v2636, %v293
      %v2643 = vadd.f32 %v2637, %v294
      %v2644 = vsel %vm536, %v2638, -inf
      %2645 = vmax.xlane.f32.xlu0 %v2644
      %v2646 = vpop.xlane.xlu0 %2645
      %v2647 = vsel %vm536, %v2639, -inf
      %2648 = vmax.xlane.f32.xlu0 %v2647
      %v2649 = vpop.xlane.xlu0 %2648
      %v2650 = vsel %vm536, %v2640, -inf
      %2651 = vmax.xlane.f32.xlu0 %v2650
      %v2652 = vpop.xlane.xlu0 %2651
      %v2653 = vsel %vm536, %v2641, -inf
      %2654 = vmax.xlane.f32.xlu0 %v2653
      %v2655 = vpop.xlane.xlu0 %2654
      %v2656 = vsel %vm536, %v2642, -inf
      %2657 = vmax.xlane.f32.xlu0 %v2656
      %v2658 = vpop.xlane.xlu0 %2657
      %v2659 = vsel %vm536, %v2643, -inf
      %2660 = vmax.xlane.f32.xlu0 %v2659
      %v2661 = vpop.xlane.xlu0 %2660
      %v2662 = vsub.f32 %v2638, %v2646
      %v2663 = vsub.f32 %v2639, %v2649
      %v2664 = vsub.f32 %v2640, %v2652
      %v2665 = vsub.f32 %v2641, %v2655
      %v2666 = vsub.f32 %v2642, %v2658
      %v2667 = vsub.f32 %v2643, %v2661
      %v2668 = vmul.f32 %v2662, 1.442695
      %v2669 = vpow.pop %v2668
      %v2670 = vmul.f32 %v2663, 1.442695
      %v2671 = vpow.pop %v2670
      %v2672 = vmul.f32 %v2664, 1.442695
      %v2673 = vpow.pop %v2672
      %v2674 = vmul.f32 %v2665, 1.442695
      %v2675 = vpow.pop %v2674
      %v2676 = vmul.f32 %v2666, 1.442695
      %v2677 = vpow.pop %v2676
      %v2678 = vmul.f32 %v2667, 1.442695
      %v2679 = vpow.pop %v2678
      %v2680 = vsel %vm536, %v2669, 0.0
      %2681 = vadd.xlane.f32.xlu0 %v2680
      %v2682 = vpop.xlane.xlu0 %2681
      %v2683 = vsel %vm536, %v2671, 0.0
      %2684 = vadd.xlane.f32.xlu0 %v2683
      %v2685 = vpop.xlane.xlu0 %2684
      %v2686 = vsel %vm536, %v2673, 0.0
      %2687 = vadd.xlane.f32.xlu0 %v2686
      %v2688 = vpop.xlane.xlu0 %2687
      %v2689 = vsel %vm536, %v2675, 0.0
      %2690 = vadd.xlane.f32.xlu0 %v2689
      %v2691 = vpop.xlane.xlu0 %2690
      %v2692 = vsel %vm536, %v2677, 0.0
      %2693 = vadd.xlane.f32.xlu0 %v2692
      %v2694 = vpop.xlane.xlu0 %2693
      %v2695 = vsel %vm536, %v2679, 0.0
      %2696 = vadd.xlane.f32.xlu0 %v2695
      %v2697 = vpop.xlane.xlu0 %2696
      %v2698 = vrcp.pop %v2682
      %v2699 = vrcp.pop %v2685
      %v2700 = vrcp.pop %v2688
      %v2701 = vrcp.pop %v2691
      %v2702 = vrcp.pop %v2694
      %v2703 = vrcp.pop %v2697
      %2704 = vrot.lane.b32.xlu0 %v2473, 64
      %v2705 = vpop.permute.xlu0 %2704
      %2706 = vrot.lane.b32.xlu0 %v2476, 64
      %v2707 = vpop.permute.xlu0 %2706
      %2708 = vrot.lane.b32.xlu0 %v2481, 64
      %v2709 = vpop.permute.xlu0 %2708
      %2710 = vrot.lane.b32.xlu0 %v2484, 64
      %v2711 = vpop.permute.xlu0 %2710
      %2712 = vrot.lane.b32.xlu0 %v2489, 64
      %v2713 = vpop.permute.xlu0 %2712
      %2714 = vrot.lane.b32.xlu0 %v2492, 64
      %v2715 = vpop.permute.xlu0 %2714
      %v2723 = vsel %vm536, %v2669, 0
      %v2726 = vsel %vm536, %v2671, 0
      %v2729 = vsel %vm536, %v2673, 0
      %v2732 = vsel %vm536, %v2675, 0
      %v2735 = vsel %vm536, %v2677, 0
      %v2738 = vsel %vm536, %v2679, 0
      %2740 = vmatprep.subr.mxu0 0.0
      %2741 = vmatpush1.msra.mxu0 %v2705
      %2742 = vmatprep.subr.mxu0 0.0
      %2743 = vmatpush1.msra.mxu0 %v2707
      %2744 = vmatprep.subr.mxu0 0.0
      %2745 = vmatpush1.msra.mxu0 %v2709
      %2746 = vmatprep.subr.mxu0 0.0
      %2747 = vmatpush1.msra.mxu0 %v2711
      %2748 = vmatprep.subr.mxu0 0.0
      %2749 = vmatpush1.msra.mxu0 %v2713
      %2750 = vmatprep.subr.mxu0 0.0
      %2751 = vmatpush1.msra.mxu0 %v2715
      %2752 = vmatprep.subr.mxu0 0.0
      %2753 = vmatpush1.msra.mxu0 0.0
      %2754 = vmatprep.subr.mxu0 0.0
      %2755 = vmatpush1.msra.mxu0 0.0
      %2756 = vmatprep.subr.mxu0 0.0
      %2757 = vmatpush1.msra.mxu0 0.0
      %2758 = vmatprep.subr.mxu0 0.0
      %2759 = vmatpush1.msra.mxu0 0.0
      %2760 = vmatprep.subr.mxu0 0.0
      %2761 = vmatpush1.msra.mxu0 0.0
      %2762 = vmatprep.subr.mxu0 0.0
      %2763 = vmatpush1.msra.mxu0 0.0
      %2764 = vmatprep.subr.mxu0 0.0
      %2765 = vmatpush1.msra.mxu0 0.0
      %2766 = vmatprep.subr.mxu0 0.0
      %2767 = vmatpush1.msra.mxu0 0.0
      %2768 = vmatprep.subr.mxu0 0.0
      %2769 = vmatpush1.msra.mxu0 0.0
      %2770 = vmatprep.subr.mxu0 0.0
      %2771 = vmatpush1.msra.mxu0 0.0
      %2772 = vmatprep.subr.mxu0 0.0
      %2773 = vmatpush1.msra.mxu0 0.0
      %2774 = vmatprep.subr.mxu0 0.0
      %2775 = vmatpush1.msra.mxu0 0.0
      %2776 = vmatprep.subr.mxu0 0.0
      %2777 = vmatpush1.msra.mxu0 0.0
      %2778 = vmatprep.subr.mxu0 0.0
      %2779 = vmatpush1.msra.mxu0 0.0
      %2780 = vmatprep.subr.mxu0 0.0
      %2781 = vmatpush1.msra.mxu0 0.0
      %2782 = vmatprep.subr.mxu0 0.0
      %2783 = vmatpush1.msra.mxu0 0.0
      %2784 = vmatprep.subr.mxu0 0.0
      %2785 = vmatpush1.msra.mxu0 0.0
      %2786 = vmatprep.subr.mxu0 0.0
      %2787 = vmatpush1.msra.mxu0 0.0
      %2788 = vmatprep.subr.mxu0 0.0
      %2789 = vmatpush1.msra.mxu0 0.0
      %2790 = vmatprep.subr.mxu0 0.0
      %2791 = vmatpush1.msra.mxu0 0.0
      %2792 = vmatprep.subr.mxu0 0.0
      %2793 = vmatpush1.msra.mxu0 0.0
      %2794 = vmatprep.subr.mxu0 0.0
      %2795 = vmatpush1.msra.mxu0 0.0
      %2796 = vmatprep.subr.mxu0 0.0
      %2797 = vmatpush1.msra.mxu0 0.0
      %2798 = vmatprep.subr.mxu0 0.0
      %2799 = vmatpush1.msra.mxu0 0.0
      %2800 = vmatprep.subr.mxu0 0.0
      %2801 = vmatpush1.msra.mxu0 0.0
      %2802 = vmatprep.subr.mxu0 0.0
      %2803 = vmatpush1.msra.mxu0 0.0
      %2804 = vmatprep.mubr.f32.mxu0 0.0
      %2805 = vmatmul.mubr.f32.gmra.mrb[0].mxu0 %v2723
      %v2806 = vpop.f32.mrb[0].mxu0
      %v2807 = vadd.f32 0.0, %v2806
      %v2808 = vpop.f32.mrb[0].mxu0
      %2809 = vmatprep.mubr.f32.mxu0 0.0
      %2810 = vmatmul.mubr.f32.gmra.mrb[0].mxu0 %v2726
      %v2811 = vpop.f32.mrb[0].mxu0
      %v2812 = vadd.f32 0.0, %v2811
      %v2813 = vpop.f32.mrb[0].mxu0
      %2814 = vmatprep.mubr.f32.mxu0 0.0
      %2815 = vmatmul.mubr.f32.gmra.mrb[0].mxu0 %v2729
      %v2816 = vpop.f32.mrb[0].mxu0
      %v2817 = vadd.f32 0.0, %v2816
      %v2818 = vpop.f32.mrb[0].mxu0
      %2819 = vmatprep.mubr.f32.mxu0 0.0
      %2820 = vmatmul.mubr.f32.gmra.mrb[0].mxu0 %v2732
      %v2821 = vpop.f32.mrb[0].mxu0
      %v2822 = vadd.f32 0.0, %v2821
      %v2823 = vpop.f32.mrb[0].mxu0
      %2824 = vmatprep.mubr.f32.mxu0 0.0
      %2825 = vmatmul.mubr.f32.gmra.mrb[0].mxu0 %v2735
      %v2826 = vpop.f32.mrb[0].mxu0
      %v2827 = vadd.f32 0.0, %v2826
      %v2828 = vpop.f32.mrb[0].mxu0
      %2829 = vmatprep.mubr.f32.mxu0 0.0
      %2830 = vmatmul.mubr.f32.gmra.mrb[0].mxu0 %v2738
      %v2831 = vpop.f32.mrb[0].mxu0
      %v2832 = vadd.f32 0.0, %v2831
      %v2833 = vpop.f32.mrb[0].mxu0
      %2834 = vdwg.mxu0
      %v2835 = vmul.f32 %v2807, %v2698
      %v2836 = vmul.f32 %v2812, %v2699
      %v2837 = vmul.f32 %v2817, %v2700
      %v2838 = vmul.f32 %v2822, %v2701
      %v2839 = vmul.f32 %v2827, %v2702
      %v2840 = vmul.f32 %v2832, %v2703
      %2841 = vrot.lane.b32.xlu0 %v2473, 120
      %v2842 = vpop.permute.xlu0 %2841
      %2843 = vrot.lane.b32.xlu0 %v2476, 120
      %v2844 = vpop.permute.xlu0 %2843
      %2845 = vrot.lane.b32.xlu0 %v2481, 120
      %v2846 = vpop.permute.xlu0 %2845
      %2847 = vrot.lane.b32.xlu0 %v2484, 120
      %v2848 = vpop.permute.xlu0 %2847
      %2849 = vrot.lane.b32.xlu0 %v2489, 120
      %v2850 = vpop.permute.xlu0 %2849
      %2851 = vrot.lane.b32.xlu0 %v2492, 120
      %v2852 = vpop.permute.xlu0 %2851
      %2853 = vrot.lane.b32.xlu0 %v2473, 88
      %v2854 = vpop.permute.xlu0 %2853
      %2855 = vrot.lane.b32.xlu0 %v2476, 88
      %v2856 = vpop.permute.xlu0 %2855
      %2857 = vrot.lane.b32.xlu0 %v2481, 88
      %v2858 = vpop.permute.xlu0 %2857
      %2859 = vrot.lane.b32.xlu0 %v2484, 88
      %v2860 = vpop.permute.xlu0 %2859
      %2861 = vrot.lane.b32.xlu0 %v2489, 88
      %v2862 = vpop.permute.xlu0 %2861
      %2863 = vrot.lane.b32.xlu0 %v2492, 88
      %v2864 = vpop.permute.xlu0 %2863
      %v2865 = vsel %vm404, %v2842, 0
      %v2867 = vsel %vm404, %v2844, 0
      %v2869 = vsel %vm404, %v2846, 0
      %v2871 = vsel %vm404, %v2848, 0
      %v2873 = vsel %vm404, %v2850, 0
      %v2875 = vsel %vm404, %v2852, 0
      %v2877 = vsel %vm404, %v2854, 0
      %v2879 = vsel %vm404, %v2856, 0
      %v2881 = vsel %vm404, %v2858, 0
      %v2883 = vsel %vm404, %v2860, 0
      %v2885 = vsel %vm404, %v2862, 0
      %v2887 = vsel %vm404, %v2864, 0
      %2889 = vmatprep.subr.mxu0 0.0
      %2890 = vmatpush1.xpose.msra.mxu0 %v2877
      %2891 = vmatprep.subr.mxu0 0.0
      %2892 = vmatpush1.xpose.msra.mxu0 %v2879
      %2893 = vmatprep.subr.mxu0 0.0
      %2894 = vmatpush1.xpose.msra.mxu0 %v2881
      %2895 = vmatprep.subr.mxu0 0.0
      %2896 = vmatpush1.xpose.msra.mxu0 %v2883
      %2897 = vmatprep.subr.mxu0 0.0
      %2898 = vmatpush1.xpose.msra.mxu0 %v2885
      %2899 = vmatprep.subr.mxu0 0.0
      %2900 = vmatpush1.xpose.msra.mxu0 %v2887
      %2901 = vmatprep.subr.mxu0 0.0
      %2902 = vmatpush1.xpose.msra.mxu0 0.0
      %2903 = vmatprep.subr.mxu0 0.0
      %2904 = vmatpush1.xpose.msra.mxu0 0.0
      %2905 = vmatprep.subr.mxu0 0.0
      %2906 = vmatpush1.xpose.msra.mxu0 0.0
      %2907 = vmatprep.subr.mxu0 0.0
      %2908 = vmatpush1.xpose.msra.mxu0 0.0
      %2909 = vmatprep.subr.mxu0 0.0
      %2910 = vmatpush1.xpose.msra.mxu0 0.0
      %2911 = vmatprep.subr.mxu0 0.0
      %2912 = vmatpush1.xpose.msra.mxu0 0.0
      %2913 = vmatprep.subr.mxu0 0.0
      %2914 = vmatpush1.xpose.msra.mxu0 0.0
      %2915 = vmatprep.subr.mxu0 0.0
      %2916 = vmatpush1.xpose.msra.mxu0 0.0
      %2917 = vmatprep.subr.mxu0 0.0
      %2918 = vmatpush1.xpose.msra.mxu0 0.0
      %2919 = vmatprep.subr.mxu0 0.0
      %2920 = vmatpush1.xpose.msra.mxu0 0.0
      %2921 = vmatprep.subr.mxu0 0.0
      %2922 = vmatpush1.xpose.msra.mxu0 0.0
      %2923 = vmatprep.subr.mxu0 0.0
      %2924 = vmatpush1.xpose.msra.mxu0 0.0
      %2925 = vmatprep.subr.mxu0 0.0
      %2926 = vmatpush1.xpose.msra.mxu0 0.0
      %2927 = vmatprep.subr.mxu0 0.0
      %2928 = vmatpush1.xpose.msra.mxu0 0.0
      %2929 = vmatprep.subr.mxu0 0.0
      %2930 = vmatpush1.xpose.msra.mxu0 0.0
      %2931 = vmatprep.subr.mxu0 0.0
      %2932 = vmatpush1.xpose.msra.mxu0 0.0
      %2933 = vmatprep.subr.mxu0 0.0
      %2934 = vmatpush1.xpose.msra.mxu0 0.0
      %2935 = vmatprep.subr.mxu0 0.0
      %2936 = vmatpush1.xpose.msra.mxu0 0.0
      %2937 = vmatprep.subr.mxu0 0.0
      %2938 = vmatpush1.xpose.msra.mxu0 0.0
      %2939 = vmatprep.subr.mxu0 0.0
      %2940 = vmatpush1.xpose.msra.mxu0 0.0
      %2941 = vmatprep.subr.mxu0 0.0
      %2942 = vmatpush1.xpose.msra.mxu0 0.0
      %2943 = vmatprep.subr.mxu0 0.0
      %2944 = vmatpush1.xpose.msra.mxu0 0.0
      %2945 = vmatprep.subr.mxu0 0.0
      %2946 = vmatpush1.xpose.msra.mxu0 0.0
      %2947 = vmatprep.subr.mxu0 0.0
      %2948 = vmatpush1.xpose.msra.mxu0 0.0
      %2949 = vmatprep.subr.mxu0 0.0
      %2950 = vmatpush1.xpose.msra.mxu0 0.0
      %2951 = vmatprep.subr.mxu0 0.0
      %2952 = vmatpush1.xpose.msra.mxu0 0.0
      %2953 = vmatprep.mubr.f32.mxu0 0.0
      %2954 = vmatmul.mubr.f32.gmra.mrb[0].mxu0 %v2865
      %v2955 = vpop.f32.mrb[0].mxu0
      %v2956 = vadd.f32 0.0, %v2955
      %v2957 = vpop.f32.mrb[0].mxu0
      %2958 = vmatprep.mubr.f32.mxu0 0.0
      %2959 = vmatmul.mubr.f32.gmra.mrb[0].mxu0 %v2867
      %v2960 = vpop.f32.mrb[0].mxu0
      %v2961 = vadd.f32 0.0, %v2960
      %v2962 = vpop.f32.mrb[0].mxu0
      %2963 = vmatprep.mubr.f32.mxu0 0.0
      %2964 = vmatmul.mubr.f32.gmra.mrb[0].mxu0 %v2869
      %v2965 = vpop.f32.mrb[0].mxu0
      %v2966 = vadd.f32 0.0, %v2965
      %v2967 = vpop.f32.mrb[0].mxu0
      %2968 = vmatprep.mubr.f32.mxu0 0.0
      %2969 = vmatmul.mubr.f32.gmra.mrb[0].mxu0 %v2871
      %v2970 = vpop.f32.mrb[0].mxu0
      %v2971 = vadd.f32 0.0, %v2970
      %v2972 = vpop.f32.mrb[0].mxu0
      %2973 = vmatprep.mubr.f32.mxu0 0.0
      %2974 = vmatmul.mubr.f32.gmra.mrb[0].mxu0 %v2873
      %v2975 = vpop.f32.mrb[0].mxu0
      %v2976 = vadd.f32 0.0, %v2975
      %v2977 = vpop.f32.mrb[0].mxu0
      %2978 = vmatprep.mubr.f32.mxu0 0.0
      %2979 = vmatmul.mubr.f32.gmra.mrb[0].mxu0 %v2875
      %v2980 = vpop.f32.mrb[0].mxu0
      %v2981 = vadd.f32 0.0, %v2980
      %v2982 = vpop.f32.mrb[0].mxu0
      %2983 = vdwg.mxu0
      %v2984 = vmul.f32 %v2956, 0.35355338
      %v2985 = vmul.f32 %v2961, 0.35355338
      %v2986 = vmul.f32 %v2966, 0.35355338
      %v2987 = vmul.f32 %v2971, 0.35355338
      %v2988 = vmul.f32 %v2976, 0.35355338
      %v2989 = vmul.f32 %v2981, 0.35355338
      %v2990 = vadd.f32 %v2984, %v289
      %v2991 = vadd.f32 %v2985, %v290
      %v2992 = vadd.f32 %v2986, %v291
      %v2993 = vadd.f32 %v2987, %v292
      %v2994 = vadd.f32 %v2988, %v293
      %v2995 = vadd.f32 %v2989, %v294
      %v2996 = vsel %vm536, %v2990, -inf
      %2997 = vmax.xlane.f32.xlu0 %v2996
      %v2998 = vpop.xlane.xlu0 %2997
      %v2999 = vsel %vm536, %v2991, -inf
      %3000 = vmax.xlane.f32.xlu0 %v2999
      %v3001 = vpop.xlane.xlu0 %3000
      %v3002 = vsel %vm536, %v2992, -inf
      %3003 = vmax.xlane.f32.xlu0 %v3002
      %v3004 = vpop.xlane.xlu0 %3003
      %v3005 = vsel %vm536, %v2993, -inf
      %3006 = vmax.xlane.f32.xlu0 %v3005
      %v3007 = vpop.xlane.xlu0 %3006
      %v3008 = vsel %vm536, %v2994, -inf
      %3009 = vmax.xlane.f32.xlu0 %v3008
      %v3010 = vpop.xlane.xlu0 %3009
      %v3011 = vsel %vm536, %v2995, -inf
      %3012 = vmax.xlane.f32.xlu0 %v3011
      %v3013 = vpop.xlane.xlu0 %3012
      %v3014 = vsub.f32 %v2990, %v2998
      %v3015 = vsub.f32 %v2991, %v3001
      %v3016 = vsub.f32 %v2992, %v3004
      %v3017 = vsub.f32 %v2993, %v3007
      %v3018 = vsub.f32 %v2994, %v3010
      %v3019 = vsub.f32 %v2995, %v3013
      %v3020 = vmul.f32 %v3014, 1.442695
      %v3021 = vpow.pop %v3020
      %v3022 = vmul.f32 %v3015, 1.442695
      %v3023 = vpow.pop %v3022
      %v3024 = vmul.f32 %v3016, 1.442695
      %v3025 = vpow.pop %v3024
      %v3026 = vmul.f32 %v3017, 1.442695
      %v3027 = vpow.pop %v3026
      %v3028 = vmul.f32 %v3018, 1.442695
      %v3029 = vpow.pop %v3028
      %v3030 = vmul.f32 %v3019, 1.442695
      %v3031 = vpow.pop %v3030
      %v3032 = vsel %vm536, %v3021, 0.0
      %3033 = vadd.xlane.f32.xlu0 %v3032
      %v3034 = vpop.xlane.xlu0 %3033
      %v3035 = vsel %vm536, %v3023, 0.0
      %3036 = vadd.xlane.f32.xlu0 %v3035
      %v3037 = vpop.xlane.xlu0 %3036
      %v3038 = vsel %vm536, %v3025, 0.0
      %3039 = vadd.xlane.f32.xlu0 %v3038
      %v3040 = vpop.xlane.xlu0 %3039
      %v3041 = vsel %vm536, %v3027, 0.0
      %3042 = vadd.xlane.f32.xlu0 %v3041
      %v3043 = vpop.xlane.xlu0 %3042
      %v3044 = vsel %vm536, %v3029, 0.0
      %3045 = vadd.xlane.f32.xlu0 %v3044
      %v3046 = vpop.xlane.xlu0 %3045
      %v3047 = vsel %vm536, %v3031, 0.0
      %3048 = vadd.xlane.f32.xlu0 %v3047
      %v3049 = vpop.xlane.xlu0 %3048
      %v3050 = vrcp.pop %v3034
      %v3051 = vrcp.pop %v3037
      %v3052 = vrcp.pop %v3040
      %v3053 = vrcp.pop %v3043
      %v3054 = vrcp.pop %v3046
      %v3055 = vrcp.pop %v3049
      %3056 = vrot.lane.b32.xlu0 %v2473, 56
      %v3057 = vpop.permute.xlu0 %3056
      %3058 = vrot.lane.b32.xlu0 %v2476, 56
      %v3059 = vpop.permute.xlu0 %3058
      %3060 = vrot.lane.b32.xlu0 %v2481, 56
      %v3061 = vpop.permute.xlu0 %3060
      %3062 = vrot.lane.b32.xlu0 %v2484, 56
      %v3063 = vpop.permute.xlu0 %3062
      %3064 = vrot.lane.b32.xlu0 %v2489, 56
      %v3065 = vpop.permute.xlu0 %3064
      %3066 = vrot.lane.b32.xlu0 %v2492, 56
      %v3067 = vpop.permute.xlu0 %3066
      %v3075 = vsel %vm536, %v3021, 0
      %v3078 = vsel %vm536, %v3023, 0
      %v3081 = vsel %vm536, %v3025, 0
      %v3084 = vsel %vm536, %v3027, 0
      %v3087 = vsel %vm536, %v3029, 0
      %v3090 = vsel %vm536, %v3031, 0
      %3092 = vmatprep.subr.mxu0 0.0
      %3093 = vmatpush1.msra.mxu0 %v3057
      %3094 = vmatprep.subr.mxu0 0.0
      %3095 = vmatpush1.msra.mxu0 %v3059
      %3096 = vmatprep.subr.mxu0 0.0
      %3097 = vmatpush1.msra.mxu0 %v3061
      %3098 = vmatprep.subr.mxu0 0.0
      %3099 = vmatpush1.msra.mxu0 %v3063
      %3100 = vmatprep.subr.mxu0 0.0
      %3101 = vmatpush1.msra.mxu0 %v3065
      %3102 = vmatprep.subr.mxu0 0.0
      %3103 = vmatpush1.msra.mxu0 %v3067
      %3104 = vmatprep.subr.mxu0 0.0
      %3105 = vmatpush1.msra.mxu0 0.0
      %3106 = vmatprep.subr.mxu0 0.0
      %3107 = vmatpush1.msra.mxu0 0.0
      %3108 = vmatprep.subr.mxu0 0.0
      %3109 = vmatpush1.msra.mxu0 0.0
      %3110 = vmatprep.subr.mxu0 0.0
      %3111 = vmatpush1.msra.mxu0 0.0
      %3112 = vmatprep.subr.mxu0 0.0
      %3113 = vmatpush1.msra.mxu0 0.0
      %3114 = vmatprep.subr.mxu0 0.0
      %3115 = vmatpush1.msra.mxu0 0.0
      %3116 = vmatprep.subr.mxu0 0.0
      %3117 = vmatpush1.msra.mxu0 0.0
      %3118 = vmatprep.subr.mxu0 0.0
      %3119 = vmatpush1.msra.mxu0 0.0
      %3120 = vmatprep.subr.mxu0 0.0
      %3121 = vmatpush1.msra.mxu0 0.0
      %3122 = vmatprep.subr.mxu0 0.0
      %3123 = vmatpush1.msra.mxu0 0.0
      %3124 = vmatprep.subr.mxu0 0.0
      %3125 = vmatpush1.msra.mxu0 0.0
      %3126 = vmatprep.subr.mxu0 0.0
      %3127 = vmatpush1.msra.mxu0 0.0
      %3128 = vmatprep.subr.mxu0 0.0
      %3129 = vmatpush1.msra.mxu0 0.0
      %3130 = vmatprep.subr.mxu0 0.0
      %3131 = vmatpush1.msra.mxu0 0.0
      %3132 = vmatprep.subr.mxu0 0.0
      %3133 = vmatpush1.msra.mxu0 0.0
      %3134 = vmatprep.subr.mxu0 0.0
      %3135 = vmatpush1.msra.mxu0 0.0
      %3136 = vmatprep.subr.mxu0 0.0
      %3137 = vmatpush1.msra.mxu0 0.0
      %3138 = vmatprep.subr.mxu0 0.0
      %3139 = vmatpush1.msra.mxu0 0.0
      %3140 = vmatprep.subr.mxu0 0.0
      %3141 = vmatpush1.msra.mxu0 0.0
      %3142 = vmatprep.subr.mxu0 0.0
      %3143 = vmatpush1.msra.mxu0 0.0
      %3144 = vmatprep.subr.mxu0 0.0
      %3145 = vmatpush1.msra.mxu0 0.0
      %3146 = vmatprep.subr.mxu0 0.0
      %3147 = vmatpush1.msra.mxu0 0.0
      %3148 = vmatprep.subr.mxu0 0.0
      %3149 = vmatpush1.msra.mxu0 0.0
      %3150 = vmatprep.subr.mxu0 0.0
      %3151 = vmatpush1.msra.mxu0 0.0
      %3152 = vmatprep.subr.mxu0 0.0
      %3153 = vmatpush1.msra.mxu0 0.0
      %3154 = vmatprep.subr.mxu0 0.0
      %3155 = vmatpush1.msra.mxu0 0.0
      %3156 = vmatprep.mubr.f32.mxu0 0.0
      %3157 = vmatmul.mubr.f32.gmra.mrb[0].mxu0 %v3075
      %v3158 = vpop.f32.mrb[0].mxu0
      %v3159 = vadd.f32 0.0, %v3158
      %v3160 = vpop.f32.mrb[0].mxu0
      %3161 = vmatprep.mubr.f32.mxu0 0.0
      %3162 = vmatmul.mubr.f32.gmra.mrb[0].mxu0 %v3078
      %v3163 = vpop.f32.mrb[0].mxu0
      %v3164 = vadd.f32 0.0, %v3163
      %v3165 = vpop.f32.mrb[0].mxu0
      %3166 = vmatprep.mubr.f32.mxu0 0.0
      %3167 = vmatmul.mubr.f32.gmra.mrb[0].mxu0 %v3081
      %v3168 = vpop.f32.mrb[0].mxu0
      %v3169 = vadd.f32 0.0, %v3168
      %v3170 = vpop.f32.mrb[0].mxu0
      %3171 = vmatprep.mubr.f32.mxu0 0.0
      %3172 = vmatmul.mubr.f32.gmra.mrb[0].mxu0 %v3084
      %v3173 = vpop.f32.mrb[0].mxu0
      %v3174 = vadd.f32 0.0, %v3173
      %v3175 = vpop.f32.mrb[0].mxu0
      %3176 = vmatprep.mubr.f32.mxu0 0.0
      %3177 = vmatmul.mubr.f32.gmra.mrb[0].mxu0 %v3087
      %v3178 = vpop.f32.mrb[0].mxu0
      %v3179 = vadd.f32 0.0, %v3178
      %v3180 = vpop.f32.mrb[0].mxu0
      %3181 = vmatprep.mubr.f32.mxu0 0.0
      %3182 = vmatmul.mubr.f32.gmra.mrb[0].mxu0 %v3090
      %v3183 = vpop.f32.mrb[0].mxu0
      %v3184 = vadd.f32 0.0, %v3183
      %v3185 = vpop.f32.mrb[0].mxu0
      %3186 = vdwg.mxu0
      %v3187 = vmul.f32 %v3159, %v3050
      %v3188 = vmul.f32 %v3164, %v3051
      %v3189 = vmul.f32 %v3169, %v3052
      %v3190 = vmul.f32 %v3174, %v3053
      %v3191 = vmul.f32 %v3179, %v3054
      %v3192 = vmul.f32 %v3184, %v3055
      %3193 = vrot.lane.b32.xlu0 %v2473, 112
      %v3194 = vpop.permute.xlu0 %3193
      %3195 = vrot.lane.b32.xlu0 %v2476, 112
      %v3196 = vpop.permute.xlu0 %3195
      %3197 = vrot.lane.b32.xlu0 %v2481, 112
      %v3198 = vpop.permute.xlu0 %3197
      %3199 = vrot.lane.b32.xlu0 %v2484, 112
      %v3200 = vpop.permute.xlu0 %3199
      %3201 = vrot.lane.b32.xlu0 %v2489, 112
      %v3202 = vpop.permute.xlu0 %3201
      %3203 = vrot.lane.b32.xlu0 %v2492, 112
      %v3204 = vpop.permute.xlu0 %3203
      %3205 = vrot.lane.b32.xlu0 %v2473, 80
      %v3206 = vpop.permute.xlu0 %3205
      %3207 = vrot.lane.b32.xlu0 %v2476, 80
      %v3208 = vpop.permute.xlu0 %3207
      %3209 = vrot.lane.b32.xlu0 %v2481, 80
      %v3210 = vpop.permute.xlu0 %3209
      %3211 = vrot.lane.b32.xlu0 %v2484, 80
      %v3212 = vpop.permute.xlu0 %3211
      %3213 = vrot.lane.b32.xlu0 %v2489, 80
      %v3214 = vpop.permute.xlu0 %3213
      %3215 = vrot.lane.b32.xlu0 %v2492, 80
      %v3216 = vpop.permute.xlu0 %3215
      %v3217 = vsel %vm404, %v3194, 0
      %v3219 = vsel %vm404, %v3196, 0
      %v3221 = vsel %vm404, %v3198, 0
      %v3223 = vsel %vm404, %v3200, 0
      %v3225 = vsel %vm404, %v3202, 0
      %v3227 = vsel %vm404, %v3204, 0
      %v3229 = vsel %vm404, %v3206, 0
      %v3231 = vsel %vm404, %v3208, 0
      %v3233 = vsel %vm404, %v3210, 0
      %v3235 = vsel %vm404, %v3212, 0
      %v3237 = vsel %vm404, %v3214, 0
      %v3239 = vsel %vm404, %v3216, 0
      %3241 = vmatprep.subr.mxu0 0.0
      %3242 = vmatpush1.xpose.msra.mxu0 %v3229
      %3243 = vmatprep.subr.mxu0 0.0
      %3244 = vmatpush1.xpose.msra.mxu0 %v3231
      %3245 = vmatprep.subr.mxu0 0.0
      %3246 = vmatpush1.xpose.msra.mxu0 %v3233
      %3247 = vmatprep.subr.mxu0 0.0
      %3248 = vmatpush1.xpose.msra.mxu0 %v3235
      %3249 = vmatprep.subr.mxu0 0.0
      %3250 = vmatpush1.xpose.msra.mxu0 %v3237
      %3251 = vmatprep.subr.mxu0 0.0
      %3252 = vmatpush1.xpose.msra.mxu0 %v3239
      %3253 = vmatprep.subr.mxu0 0.0
      %3254 = vmatpush1.xpose.msra.mxu0 0.0
      %3255 = vmatprep.subr.mxu0 0.0
      %3256 = vmatpush1.xpose.msra.mxu0 0.0
      %3257 = vmatprep.subr.mxu0 0.0
      %3258 = vmatpush1.xpose.msra.mxu0 0.0
      %3259 = vmatprep.subr.mxu0 0.0
      %3260 = vmatpush1.xpose.msra.mxu0 0.0
      %3261 = vmatprep.subr.mxu0 0.0
      %3262 = vmatpush1.xpose.msra.mxu0 0.0
      %3263 = vmatprep.subr.mxu0 0.0
      %3264 = vmatpush1.xpose.msra.mxu0 0.0
      %3265 = vmatprep.subr.mxu0 0.0
      %3266 = vmatpush1.xpose.msra.mxu0 0.0
      %3267 = vmatprep.subr.mxu0 0.0
      %3268 = vmatpush1.xpose.msra.mxu0 0.0
      %3269 = vmatprep.subr.mxu0 0.0
      %3270 = vmatpush1.xpose.msra.mxu0 0.0
      %3271 = vmatprep.subr.mxu0 0.0
      %3272 = vmatpush1.xpose.msra.mxu0 0.0
      %3273 = vmatprep.subr.mxu0 0.0
      %3274 = vmatpush1.xpose.msra.mxu0 0.0
      %3275 = vmatprep.subr.mxu0 0.0
      %3276 = vmatpush1.xpose.msra.mxu0 0.0
      %3277 = vmatprep.subr.mxu0 0.0
      %3278 = vmatpush1.xpose.msra.mxu0 0.0
      %3279 = vmatprep.subr.mxu0 0.0
      %3280 = vmatpush1.xpose.msra.mxu0 0.0
      %3281 = vmatprep.subr.mxu0 0.0
      %3282 = vmatpush1.xpose.msra.mxu0 0.0
      %3283 = vmatprep.subr.mxu0 0.0
      %3284 = vmatpush1.xpose.msra.mxu0 0.0
      %3285 = vmatprep.subr.mxu0 0.0
      %3286 = vmatpush1.xpose.msra.mxu0 0.0
      %3287 = vmatprep.subr.mxu0 0.0
      %3288 = vmatpush1.xpose.msra.mxu0 0.0
      %3289 = vmatprep.subr.mxu0 0.0
      %3290 = vmatpush1.xpose.msra.mxu0 0.0
      %3291 = vmatprep.subr.mxu0 0.0
      %3292 = vmatpush1.xpose.msra.mxu0 0.0
      %3293 = vmatprep.subr.mxu0 0.0
      %3294 = vmatpush1.xpose.msra.mxu0 0.0
      %3295 = vmatprep.subr.mxu0 0.0
      %3296 = vmatpush1.xpose.msra.mxu0 0.0
      %3297 = vmatprep.subr.mxu0 0.0
      %3298 = vmatpush1.xpose.msra.mxu0 0.0
      %3299 = vmatprep.subr.mxu0 0.0
      %3300 = vmatpush1.xpose.msra.mxu0 0.0
      %3301 = vmatprep.subr.mxu0 0.0
      %3302 = vmatpush1.xpose.msra.mxu0 0.0
      %3303 = vmatprep.subr.mxu0 0.0
      %3304 = vmatpush1.xpose.msra.mxu0 0.0
      %3305 = vmatprep.mubr.f32.mxu0 0.0
      %3306 = vmatmul.mubr.f32.gmra.mrb[0].mxu0 %v3217
      %v3307 = vpop.f32.mrb[0].mxu0
      %v3308 = vadd.f32 0.0, %v3307
      %v3309 = vpop.f32.mrb[0].mxu0
      %3310 = vmatprep.mubr.f32.mxu0 0.0
      %3311 = vmatmul.mubr.f32.gmra.mrb[0].mxu0 %v3219
      %v3312 = vpop.f32.mrb[0].mxu0
      %v3313 = vadd.f32 0.0, %v3312
      %v3314 = vpop.f32.mrb[0].mxu0
      %3315 = vmatprep.mubr.f32.mxu0 0.0
      %3316 = vmatmul.mubr.f32.gmra.mrb[0].mxu0 %v3221
      %v3317 = vpop.f32.mrb[0].mxu0
      %v3318 = vadd.f32 0.0, %v3317
      %v3319 = vpop.f32.mrb[0].mxu0
      %3320 = vmatprep.mubr.f32.mxu0 0.0
      %3321 = vmatmul.mubr.f32.gmra.mrb[0].mxu0 %v3223
      %v3322 = vpop.f32.mrb[0].mxu0
      %v3323 = vadd.f32 0.0, %v3322
      %v3324 = vpop.f32.mrb[0].mxu0
      %3325 = vmatprep.mubr.f32.mxu0 0.0
      %3326 = vmatmul.mubr.f32.gmra.mrb[0].mxu0 %v3225
      %v3327 = vpop.f32.mrb[0].mxu0
      %v3328 = vadd.f32 0.0, %v3327
      %v3329 = vpop.f32.mrb[0].mxu0
      %3330 = vmatprep.mubr.f32.mxu0 0.0
      %3331 = vmatmul.mubr.f32.gmra.mrb[0].mxu0 %v3227
      %v3332 = vpop.f32.mrb[0].mxu0
      %v3333 = vadd.f32 0.0, %v3332
      %v3334 = vpop.f32.mrb[0].mxu0
      %3335 = vdwg.mxu0
      %v3336 = vmul.f32 %v3308, 0.35355338
      %v3337 = vmul.f32 %v3313, 0.35355338
      %v3338 = vmul.f32 %v3318, 0.35355338
      %v3339 = vmul.f32 %v3323, 0.35355338
      %v3340 = vmul.f32 %v3328, 0.35355338
      %v3341 = vmul.f32 %v3333, 0.35355338
      %v3342 = vadd.f32 %v3336, %v289
      %v3343 = vadd.f32 %v3337, %v290
      %v3344 = vadd.f32 %v3338, %v291
      %v3345 = vadd.f32 %v3339, %v292
      %v3346 = vadd.f32 %v3340, %v293
      %v3347 = vadd.f32 %v3341, %v294
      %v3348 = vsel %vm536, %v3342, -inf
      %3349 = vmax.xlane.f32.xlu0 %v3348
      %v3350 = vpop.xlane.xlu0 %3349
      %v3351 = vsel %vm536, %v3343, -inf
      %3352 = vmax.xlane.f32.xlu0 %v3351
      %v3353 = vpop.xlane.xlu0 %3352
      %v3354 = vsel %vm536, %v3344, -inf
      %3355 = vmax.xlane.f32.xlu0 %v3354
      %v3356 = vpop.xlane.xlu0 %3355
      %v3357 = vsel %vm536, %v3345, -inf
      %3358 = vmax.xlane.f32.xlu0 %v3357
      %v3359 = vpop.xlane.xlu0 %3358
      %v3360 = vsel %vm536, %v3346, -inf
      %3361 = vmax.xlane.f32.xlu0 %v3360
      %v3362 = vpop.xlane.xlu0 %3361
      %v3363 = vsel %vm536, %v3347, -inf
      %3364 = vmax.xlane.f32.xlu0 %v3363
      %v3365 = vpop.xlane.xlu0 %3364
      %v3366 = vsub.f32 %v3342, %v3350
      %v3367 = vsub.f32 %v3343, %v3353
      %v3368 = vsub.f32 %v3344, %v3356
      %v3369 = vsub.f32 %v3345, %v3359
      %v3370 = vsub.f32 %v3346, %v3362
      %v3371 = vsub.f32 %v3347, %v3365
      %v3372 = vmul.f32 %v3366, 1.442695
      %v3373 = vpow.pop %v3372
      %v3374 = vmul.f32 %v3367, 1.442695
      %v3375 = vpow.pop %v3374
      %v3376 = vmul.f32 %v3368, 1.442695
      %v3377 = vpow.pop %v3376
      %v3378 = vmul.f32 %v3369, 1.442695
      %v3379 = vpow.pop %v3378
      %v3380 = vmul.f32 %v3370, 1.442695
      %v3381 = vpow.pop %v3380
      %v3382 = vmul.f32 %v3371, 1.442695
      %v3383 = vpow.pop %v3382
      %v3384 = vsel %vm536, %v3373, 0.0
      %3385 = vadd.xlane.f32.xlu0 %v3384
      %v3386 = vpop.xlane.xlu0 %3385
      %v3387 = vsel %vm536, %v3375, 0.0
      %3388 = vadd.xlane.f32.xlu0 %v3387
      %v3389 = vpop.xlane.xlu0 %3388
      %v3390 = vsel %vm536, %v3377, 0.0
      %3391 = vadd.xlane.f32.xlu0 %v3390
      %v3392 = vpop.xlane.xlu0 %3391
      %v3393 = vsel %vm536, %v3379, 0.0
      %3394 = vadd.xlane.f32.xlu0 %v3393
      %v3395 = vpop.xlane.xlu0 %3394
      %v3396 = vsel %vm536, %v3381, 0.0
      %3397 = vadd.xlane.f32.xlu0 %v3396
      %v3398 = vpop.xlane.xlu0 %3397
      %v3399 = vsel %vm536, %v3383, 0.0
      %3400 = vadd.xlane.f32.xlu0 %v3399
      %v3401 = vpop.xlane.xlu0 %3400
      %v3402 = vrcp.pop %v3386
      %v3403 = vrcp.pop %v3389
      %v3404 = vrcp.pop %v3392
      %v3405 = vrcp.pop %v3395
      %v3406 = vrcp.pop %v3398
      %v3407 = vrcp.pop %v3401
      %3408 = vrot.lane.b32.xlu0 %v2473, 48
      %v3409 = vpop.permute.xlu0 %3408
      %3410 = vrot.lane.b32.xlu0 %v2476, 48
      %v3411 = vpop.permute.xlu0 %3410
      %3412 = vrot.lane.b32.xlu0 %v2481, 48
      %v3413 = vpop.permute.xlu0 %3412
      %3414 = vrot.lane.b32.xlu0 %v2484, 48
      %v3415 = vpop.permute.xlu0 %3414
      %3416 = vrot.lane.b32.xlu0 %v2489, 48
      %v3417 = vpop.permute.xlu0 %3416
      %3418 = vrot.lane.b32.xlu0 %v2492, 48
      %v3419 = vpop.permute.xlu0 %3418
      %v3427 = vsel %vm536, %v3373, 0
      %v3430 = vsel %vm536, %v3375, 0
      %v3433 = vsel %vm536, %v3377, 0
      %v3436 = vsel %vm536, %v3379, 0
      %v3439 = vsel %vm536, %v3381, 0
      %v3442 = vsel %vm536, %v3383, 0
      %3444 = vmatprep.subr.mxu0 0.0
      %3445 = vmatpush1.msra.mxu0 %v3409
      %3446 = vmatprep.subr.mxu0 0.0
      %3447 = vmatpush1.msra.mxu0 %v3411
      %3448 = vmatprep.subr.mxu0 0.0
      %3449 = vmatpush1.msra.mxu0 %v3413
      %3450 = vmatprep.subr.mxu0 0.0
      %3451 = vmatpush1.msra.mxu0 %v3415
      %3452 = vmatprep.subr.mxu0 0.0
      %3453 = vmatpush1.msra.mxu0 %v3417
      %3454 = vmatprep.subr.mxu0 0.0
      %3455 = vmatpush1.msra.mxu0 %v3419
      %3456 = vmatprep.subr.mxu0 0.0
      %3457 = vmatpush1.msra.mxu0 0.0
      %3458 = vmatprep.subr.mxu0 0.0
      %3459 = vmatpush1.msra.mxu0 0.0
      %3460 = vmatprep.subr.mxu0 0.0
      %3461 = vmatpush1.msra.mxu0 0.0
      %3462 = vmatprep.subr.mxu0 0.0
      %3463 = vmatpush1.msra.mxu0 0.0
      %3464 = vmatprep.subr.mxu0 0.0
      %3465 = vmatpush1.msra.mxu0 0.0
      %3466 = vmatprep.subr.mxu0 0.0
      %3467 = vmatpush1.msra.mxu0 0.0
      %3468 = vmatprep.subr.mxu0 0.0
      %3469 = vmatpush1.msra.mxu0 0.0
      %3470 = vmatprep.subr.mxu0 0.0
      %3471 = vmatpush1.msra.mxu0 0.0
      %3472 = vmatprep.subr.mxu0 0.0
      %3473 = vmatpush1.msra.mxu0 0.0
      %3474 = vmatprep.subr.mxu0 0.0
      %3475 = vmatpush1.msra.mxu0 0.0
      %3476 = vmatprep.subr.mxu0 0.0
      %3477 = vmatpush1.msra.mxu0 0.0
      %3478 = vmatprep.subr.mxu0 0.0
      %3479 = vmatpush1.msra.mxu0 0.0
      %3480 = vmatprep.subr.mxu0 0.0
      %3481 = vmatpush1.msra.mxu0 0.0
      %3482 = vmatprep.subr.mxu0 0.0
      %3483 = vmatpush1.msra.mxu0 0.0
      %3484 = vmatprep.subr.mxu0 0.0
      %3485 = vmatpush1.msra.mxu0 0.0
      %3486 = vmatprep.subr.mxu0 0.0
      %3487 = vmatpush1.msra.mxu0 0.0
      %3488 = vmatprep.subr.mxu0 0.0
      %3489 = vmatpush1.msra.mxu0 0.0
      %3490 = vmatprep.subr.mxu0 0.0
      %3491 = vmatpush1.msra.mxu0 0.0
      %3492 = vmatprep.subr.mxu0 0.0
      %3493 = vmatpush1.msra.mxu0 0.0
      %3494 = vmatprep.subr.mxu0 0.0
      %3495 = vmatpush1.msra.mxu0 0.0
      %3496 = vmatprep.subr.mxu0 0.0
      %3497 = vmatpush1.msra.mxu0 0.0
      %3498 = vmatprep.subr.mxu0 0.0
      %3499 = vmatpush1.msra.mxu0 0.0
      %3500 = vmatprep.subr.mxu0 0.0
      %3501 = vmatpush1.msra.mxu0 0.0
      %3502 = vmatprep.subr.mxu0 0.0
      %3503 = vmatpush1.msra.mxu0 0.0
      %3504 = vmatprep.subr.mxu0 0.0
      %3505 = vmatpush1.msra.mxu0 0.0
      %3506 = vmatprep.subr.mxu0 0.0
      %3507 = vmatpush1.msra.mxu0 0.0
      %3508 = vmatprep.mubr.f32.mxu0 0.0
      %3509 = vmatmul.mubr.f32.gmra.mrb[0].mxu0 %v3427
      %v3510 = vpop.f32.mrb[0].mxu0
      %v3511 = vadd.f32 0.0, %v3510
      %v3512 = vpop.f32.mrb[0].mxu0
      %3513 = vmatprep.mubr.f32.mxu0 0.0
      %3514 = vmatmul.mubr.f32.gmra.mrb[0].mxu0 %v3430
      %v3515 = vpop.f32.mrb[0].mxu0
      %v3516 = vadd.f32 0.0, %v3515
      %v3517 = vpop.f32.mrb[0].mxu0
      %3518 = vmatprep.mubr.f32.mxu0 0.0
      %3519 = vmatmul.mubr.f32.gmra.mrb[0].mxu0 %v3433
      %v3520 = vpop.f32.mrb[0].mxu0
      %v3521 = vadd.f32 0.0, %v3520
      %v3522 = vpop.f32.mrb[0].mxu0
      %3523 = vmatprep.mubr.f32.mxu0 0.0
      %3524 = vmatmul.mubr.f32.gmra.mrb[0].mxu0 %v3436
      %v3525 = vpop.f32.mrb[0].mxu0
      %v3526 = vadd.f32 0.0, %v3525
      %v3527 = vpop.f32.mrb[0].mxu0
      %3528 = vmatprep.mubr.f32.mxu0 0.0
      %3529 = vmatmul.mubr.f32.gmra.mrb[0].mxu0 %v3439
      %v3530 = vpop.f32.mrb[0].mxu0
      %v3531 = vadd.f32 0.0, %v3530
      %v3532 = vpop.f32.mrb[0].mxu0
      %3533 = vmatprep.mubr.f32.mxu0 0.0
      %3534 = vmatmul.mubr.f32.gmra.mrb[0].mxu0 %v3442
      %v3535 = vpop.f32.mrb[0].mxu0
      %v3536 = vadd.f32 0.0, %v3535
      %v3537 = vpop.f32.mrb[0].mxu0
      %3538 = vdwg.mxu0
      %v3539 = vmul.f32 %v3511, %v3402
      %v3540 = vmul.f32 %v3516, %v3403
      %v3541 = vmul.f32 %v3521, %v3404
      %v3542 = vmul.f32 %v3526, %v3405
      %v3543 = vmul.f32 %v3531, %v3406
      %v3544 = vmul.f32 %v3536, %v3407
      %3545 = vrot.lane.b32.xlu0 %v2473, 104
      %v3546 = vpop.permute.xlu0 %3545
      %3547 = vrot.lane.b32.xlu0 %v2476, 104
      %v3548 = vpop.permute.xlu0 %3547
      %3549 = vrot.lane.b32.xlu0 %v2481, 104
      %v3550 = vpop.permute.xlu0 %3549
      %3551 = vrot.lane.b32.xlu0 %v2484, 104
      %v3552 = vpop.permute.xlu0 %3551
      %3553 = vrot.lane.b32.xlu0 %v2489, 104
      %v3554 = vpop.permute.xlu0 %3553
      %3555 = vrot.lane.b32.xlu0 %v2492, 104
      %v3556 = vpop.permute.xlu0 %3555
      %3557 = vrot.lane.b32.xlu0 %v2473, 72
      %v3558 = vpop.permute.xlu0 %3557
      %3559 = vrot.lane.b32.xlu0 %v2476, 72
      %v3560 = vpop.permute.xlu0 %3559
      %3561 = vrot.lane.b32.xlu0 %v2481, 72
      %v3562 = vpop.permute.xlu0 %3561
      %3563 = vrot.lane.b32.xlu0 %v2484, 72
      %v3564 = vpop.permute.xlu0 %3563
      %3565 = vrot.lane.b32.xlu0 %v2489, 72
      %v3566 = vpop.permute.xlu0 %3565
      %3567 = vrot.lane.b32.xlu0 %v2492, 72
      %v3568 = vpop.permute.xlu0 %3567
      %v3569 = vsel %vm404, %v3546, 0
      %v3571 = vsel %vm404, %v3548, 0
      %v3573 = vsel %vm404, %v3550, 0
      %v3575 = vsel %vm404, %v3552, 0
      %v3577 = vsel %vm404, %v3554, 0
      %v3579 = vsel %vm404, %v3556, 0
      %v3581 = vsel %vm404, %v3558, 0
      %v3583 = vsel %vm404, %v3560, 0
      %v3585 = vsel %vm404, %v3562, 0
      %v3587 = vsel %vm404, %v3564, 0
      %v3589 = vsel %vm404, %v3566, 0
      %v3591 = vsel %vm404, %v3568, 0
      %3593 = vmatprep.subr.mxu0 0.0
      %3594 = vmatpush1.xpose.msra.mxu0 %v3581
      %3595 = vmatprep.subr.mxu0 0.0
      %3596 = vmatpush1.xpose.msra.mxu0 %v3583
      %3597 = vmatprep.subr.mxu0 0.0
      %3598 = vmatpush1.xpose.msra.mxu0 %v3585
      %3599 = vmatprep.subr.mxu0 0.0
      %3600 = vmatpush1.xpose.msra.mxu0 %v3587
      %3601 = vmatprep.subr.mxu0 0.0
      %3602 = vmatpush1.xpose.msra.mxu0 %v3589
      %3603 = vmatprep.subr.mxu0 0.0
      %3604 = vmatpush1.xpose.msra.mxu0 %v3591
      %3605 = vmatprep.subr.mxu0 0.0
      %3606 = vmatpush1.xpose.msra.mxu0 0.0
      %3607 = vmatprep.subr.mxu0 0.0
      %3608 = vmatpush1.xpose.msra.mxu0 0.0
      %3609 = vmatprep.subr.mxu0 0.0
      %3610 = vmatpush1.xpose.msra.mxu0 0.0
      %3611 = vmatprep.subr.mxu0 0.0
      %3612 = vmatpush1.xpose.msra.mxu0 0.0
      %3613 = vmatprep.subr.mxu0 0.0
      %3614 = vmatpush1.xpose.msra.mxu0 0.0
      %3615 = vmatprep.subr.mxu0 0.0
      %3616 = vmatpush1.xpose.msra.mxu0 0.0
      %3617 = vmatprep.subr.mxu0 0.0
      %3618 = vmatpush1.xpose.msra.mxu0 0.0
      %3619 = vmatprep.subr.mxu0 0.0
      %3620 = vmatpush1.xpose.msra.mxu0 0.0
      %3621 = vmatprep.subr.mxu0 0.0
      %3622 = vmatpush1.xpose.msra.mxu0 0.0
      %3623 = vmatprep.subr.mxu0 0.0
      %3624 = vmatpush1.xpose.msra.mxu0 0.0
      %3625 = vmatprep.subr.mxu0 0.0
      %3626 = vmatpush1.xpose.msra.mxu0 0.0
      %3627 = vmatprep.subr.mxu0 0.0
      %3628 = vmatpush1.xpose.msra.mxu0 0.0
      %3629 = vmatprep.subr.mxu0 0.0
      %3630 = vmatpush1.xpose.msra.mxu0 0.0
      %3631 = vmatprep.subr.mxu0 0.0
      %3632 = vmatpush1.xpose.msra.mxu0 0.0
      %3633 = vmatprep.subr.mxu0 0.0
      %3634 = vmatpush1.xpose.msra.mxu0 0.0
      %3635 = vmatprep.subr.mxu0 0.0
      %3636 = vmatpush1.xpose.msra.mxu0 0.0
      %3637 = vmatprep.subr.mxu0 0.0
      %3638 = vmatpush1.xpose.msra.mxu0 0.0
      %3639 = vmatprep.subr.mxu0 0.0
      %3640 = vmatpush1.xpose.msra.mxu0 0.0
      %3641 = vmatprep.subr.mxu0 0.0
      %3642 = vmatpush1.xpose.msra.mxu0 0.0
      %3643 = vmatprep.subr.mxu0 0.0
      %3644 = vmatpush1.xpose.msra.mxu0 0.0
      %3645 = vmatprep.subr.mxu0 0.0
      %3646 = vmatpush1.xpose.msra.mxu0 0.0
      %3647 = vmatprep.subr.mxu0 0.0
      %3648 = vmatpush1.xpose.msra.mxu0 0.0
      %3649 = vmatprep.subr.mxu0 0.0
      %3650 = vmatpush1.xpose.msra.mxu0 0.0
      %3651 = vmatprep.subr.mxu0 0.0
      %3652 = vmatpush1.xpose.msra.mxu0 0.0
      %3653 = vmatprep.subr.mxu0 0.0
      %3654 = vmatpush1.xpose.msra.mxu0 0.0
      %3655 = vmatprep.subr.mxu0 0.0
      %3656 = vmatpush1.xpose.msra.mxu0 0.0
      %3657 = vmatprep.mubr.f32.mxu0 0.0
      %3658 = vmatmul.mubr.f32.gmra.mrb[0].mxu0 %v3569
      %v3659 = vpop.f32.mrb[0].mxu0
      %v3660 = vadd.f32 0.0, %v3659
      %v3661 = vpop.f32.mrb[0].mxu0
      %3662 = vmatprep.mubr.f32.mxu0 0.0
      %3663 = vmatmul.mubr.f32.gmra.mrb[0].mxu0 %v3571
      %v3664 = vpop.f32.mrb[0].mxu0
      %v3665 = vadd.f32 0.0, %v3664
      %v3666 = vpop.f32.mrb[0].mxu0
      %3667 = vmatprep.mubr.f32.mxu0 0.0
      %3668 = vmatmul.mubr.f32.gmra.mrb[0].mxu0 %v3573
      %v3669 = vpop.f32.mrb[0].mxu0
      %v3670 = vadd.f32 0.0, %v3669
      %v3671 = vpop.f32.mrb[0].mxu0
      %3672 = vmatprep.mubr.f32.mxu0 0.0
      %3673 = vmatmul.mubr.f32.gmra.mrb[0].mxu0 %v3575
      %v3674 = vpop.f32.mrb[0].mxu0
      %v3675 = vadd.f32 0.0, %v3674
      %v3676 = vpop.f32.mrb[0].mxu0
      %3677 = vmatprep.mubr.f32.mxu0 0.0
      %3678 = vmatmul.mubr.f32.gmra.mrb[0].mxu0 %v3577
      %v3679 = vpop.f32.mrb[0].mxu0
      %v3680 = vadd.f32 0.0, %v3679
      %v3681 = vpop.f32.mrb[0].mxu0
      %3682 = vmatprep.mubr.f32.mxu0 0.0
      %3683 = vmatmul.mubr.f32.gmra.mrb[0].mxu0 %v3579
      %v3684 = vpop.f32.mrb[0].mxu0
      %v3685 = vadd.f32 0.0, %v3684
      %v3686 = vpop.f32.mrb[0].mxu0
      %3687 = vdwg.mxu0
      %v3688 = vmul.f32 %v3660, 0.35355338
      %v3689 = vmul.f32 %v3665, 0.35355338
      %v3690 = vmul.f32 %v3670, 0.35355338
      %v3691 = vmul.f32 %v3675, 0.35355338
      %v3692 = vmul.f32 %v3680, 0.35355338
      %v3693 = vmul.f32 %v3685, 0.35355338
      %v3694 = vadd.f32 %v3688, %v289
      %v3695 = vadd.f32 %v3689, %v290
      %v3696 = vadd.f32 %v3690, %v291
      %v3697 = vadd.f32 %v3691, %v292
      %v3698 = vadd.f32 %v3692, %v293
      %v3699 = vadd.f32 %v3693, %v294
      %v3700 = vsel %vm536, %v3694, -inf
      %3701 = vmax.xlane.f32.xlu0 %v3700
      %v3702 = vpop.xlane.xlu0 %3701
      %v3703 = vsel %vm536, %v3695, -inf
      %3704 = vmax.xlane.f32.xlu0 %v3703
      %v3705 = vpop.xlane.xlu0 %3704
      %v3706 = vsel %vm536, %v3696, -inf
      %3707 = vmax.xlane.f32.xlu0 %v3706
      %v3708 = vpop.xlane.xlu0 %3707
      %v3709 = vsel %vm536, %v3697, -inf
      %3710 = vmax.xlane.f32.xlu0 %v3709
      %v3711 = vpop.xlane.xlu0 %3710
      %v3712 = vsel %vm536, %v3698, -inf
      %3713 = vmax.xlane.f32.xlu0 %v3712
      %v3714 = vpop.xlane.xlu0 %3713
      %v3715 = vsel %vm536, %v3699, -inf
      %3716 = vmax.xlane.f32.xlu0 %v3715
      %v3717 = vpop.xlane.xlu0 %3716
      %v3718 = vsub.f32 %v3694, %v3702
      %v3719 = vsub.f32 %v3695, %v3705
      %v3720 = vsub.f32 %v3696, %v3708
      %v3721 = vsub.f32 %v3697, %v3711
      %v3722 = vsub.f32 %v3698, %v3714
      %v3723 = vsub.f32 %v3699, %v3717
      %v3724 = vmul.f32 %v3718, 1.442695
      %v3725 = vpow.pop %v3724
      %v3726 = vmul.f32 %v3719, 1.442695
      %v3727 = vpow.pop %v3726
      %v3728 = vmul.f32 %v3720, 1.442695
      %v3729 = vpow.pop %v3728
      %v3730 = vmul.f32 %v3721, 1.442695
      %v3731 = vpow.pop %v3730
      %v3732 = vmul.f32 %v3722, 1.442695
      %v3733 = vpow.pop %v3732
      %v3734 = vmul.f32 %v3723, 1.442695
      %v3735 = vpow.pop %v3734
      %v3736 = vsel %vm536, %v3725, 0.0
      %3737 = vadd.xlane.f32.xlu0 %v3736
      %v3738 = vpop.xlane.xlu0 %3737
      %v3739 = vsel %vm536, %v3727, 0.0
      %3740 = vadd.xlane.f32.xlu0 %v3739
      %v3741 = vpop.xlane.xlu0 %3740
      %v3742 = vsel %vm536, %v3729, 0.0
      %3743 = vadd.xlane.f32.xlu0 %v3742
      %v3744 = vpop.xlane.xlu0 %3743
      %v3745 = vsel %vm536, %v3731, 0.0
      %3746 = vadd.xlane.f32.xlu0 %v3745
      %v3747 = vpop.xlane.xlu0 %3746
      %v3748 = vsel %vm536, %v3733, 0.0
      %3749 = vadd.xlane.f32.xlu0 %v3748
      %v3750 = vpop.xlane.xlu0 %3749
      %v3751 = vsel %vm536, %v3735, 0.0
      %3752 = vadd.xlane.f32.xlu0 %v3751
      %v3753 = vpop.xlane.xlu0 %3752
      %v3754 = vrcp.pop %v3738
      %v3755 = vrcp.pop %v3741
      %v3756 = vrcp.pop %v3744
      %v3757 = vrcp.pop %v3747
      %v3758 = vrcp.pop %v3750
      %v3759 = vrcp.pop %v3753
      %3760 = vrot.lane.b32.xlu0 %v2473, 40
      %v3761 = vpop.permute.xlu0 %3760
      %3762 = vrot.lane.b32.xlu0 %v2476, 40
      %v3763 = vpop.permute.xlu0 %3762
      %3764 = vrot.lane.b32.xlu0 %v2481, 40
      %v3765 = vpop.permute.xlu0 %3764
      %3766 = vrot.lane.b32.xlu0 %v2484, 40
      %v3767 = vpop.permute.xlu0 %3766
      %3768 = vrot.lane.b32.xlu0 %v2489, 40
      %v3769 = vpop.permute.xlu0 %3768
      %3770 = vrot.lane.b32.xlu0 %v2492, 40
      %v3771 = vpop.permute.xlu0 %3770
      %v3779 = vsel %vm536, %v3725, 0
      %v3782 = vsel %vm536, %v3727, 0
      %v3785 = vsel %vm536, %v3729, 0
      %v3788 = vsel %vm536, %v3731, 0
      %v3791 = vsel %vm536, %v3733, 0
      %v3794 = vsel %vm536, %v3735, 0
      %3796 = vmatprep.subr.mxu0 0.0
      %3797 = vmatpush1.msra.mxu0 %v3761
      %3798 = vmatprep.subr.mxu0 0.0
      %3799 = vmatpush1.msra.mxu0 %v3763
      %3800 = vmatprep.subr.mxu0 0.0
      %3801 = vmatpush1.msra.mxu0 %v3765
      %3802 = vmatprep.subr.mxu0 0.0
      %3803 = vmatpush1.msra.mxu0 %v3767
      %3804 = vmatprep.subr.mxu0 0.0
      %3805 = vmatpush1.msra.mxu0 %v3769
      %3806 = vmatprep.subr.mxu0 0.0
      %3807 = vmatpush1.msra.mxu0 %v3771
      %3808 = vmatprep.subr.mxu0 0.0
      %3809 = vmatpush1.msra.mxu0 0.0
      %3810 = vmatprep.subr.mxu0 0.0
      %3811 = vmatpush1.msra.mxu0 0.0
      %3812 = vmatprep.subr.mxu0 0.0
      %3813 = vmatpush1.msra.mxu0 0.0
      %3814 = vmatprep.subr.mxu0 0.0
      %3815 = vmatpush1.msra.mxu0 0.0
      %3816 = vmatprep.subr.mxu0 0.0
      %3817 = vmatpush1.msra.mxu0 0.0
      %3818 = vmatprep.subr.mxu0 0.0
      %3819 = vmatpush1.msra.mxu0 0.0
      %3820 = vmatprep.subr.mxu0 0.0
      %3821 = vmatpush1.msra.mxu0 0.0
      %3822 = vmatprep.subr.mxu0 0.0
      %3823 = vmatpush1.msra.mxu0 0.0
      %3824 = vmatprep.subr.mxu0 0.0
      %3825 = vmatpush1.msra.mxu0 0.0
      %3826 = vmatprep.subr.mxu0 0.0
      %3827 = vmatpush1.msra.mxu0 0.0
      %3828 = vmatprep.subr.mxu0 0.0
      %3829 = vmatpush1.msra.mxu0 0.0
      %3830 = vmatprep.subr.mxu0 0.0
      %3831 = vmatpush1.msra.mxu0 0.0
      %3832 = vmatprep.subr.mxu0 0.0
      %3833 = vmatpush1.msra.mxu0 0.0
      %3834 = vmatprep.subr.mxu0 0.0
      %3835 = vmatpush1.msra.mxu0 0.0
      %3836 = vmatprep.subr.mxu0 0.0
      %3837 = vmatpush1.msra.mxu0 0.0
      %3838 = vmatprep.subr.mxu0 0.0
      %3839 = vmatpush1.msra.mxu0 0.0
      %3840 = vmatprep.subr.mxu0 0.0
      %3841 = vmatpush1.msra.mxu0 0.0
      %3842 = vmatprep.subr.mxu0 0.0
      %3843 = vmatpush1.msra.mxu0 0.0
      %3844 = vmatprep.subr.mxu0 0.0
      %3845 = vmatpush1.msra.mxu0 0.0
      %3846 = vmatprep.subr.mxu0 0.0
      %3847 = vmatpush1.msra.mxu0 0.0
      %3848 = vmatprep.subr.mxu0 0.0
      %3849 = vmatpush1.msra.mxu0 0.0
      %3850 = vmatprep.subr.mxu0 0.0
      %3851 = vmatpush1.msra.mxu0 0.0
      %3852 = vmatprep.subr.mxu0 0.0
      %3853 = vmatpush1.msra.mxu0 0.0
      %3854 = vmatprep.subr.mxu0 0.0
      %3855 = vmatpush1.msra.mxu0 0.0
      %3856 = vmatprep.subr.mxu0 0.0
      %3857 = vmatpush1.msra.mxu0 0.0
      %3858 = vmatprep.subr.mxu0 0.0
      %3859 = vmatpush1.msra.mxu0 0.0
      %3860 = vmatprep.mubr.f32.mxu0 0.0
      %3861 = vmatmul.mubr.f32.gmra.mrb[0].mxu0 %v3779
      %v3862 = vpop.f32.mrb[0].mxu0
      %v3863 = vadd.f32 0.0, %v3862
      %v3864 = vpop.f32.mrb[0].mxu0
      %3865 = vmatprep.mubr.f32.mxu0 0.0
      %3866 = vmatmul.mubr.f32.gmra.mrb[0].mxu0 %v3782
      %v3867 = vpop.f32.mrb[0].mxu0
      %v3868 = vadd.f32 0.0, %v3867
      %v3869 = vpop.f32.mrb[0].mxu0
      %3870 = vmatprep.mubr.f32.mxu0 0.0
      %3871 = vmatmul.mubr.f32.gmra.mrb[0].mxu0 %v3785
      %v3872 = vpop.f32.mrb[0].mxu0
      %v3873 = vadd.f32 0.0, %v3872
      %v3874 = vpop.f32.mrb[0].mxu0
      %3875 = vmatprep.mubr.f32.mxu0 0.0
      %3876 = vmatmul.mubr.f32.gmra.mrb[0].mxu0 %v3788
      %v3877 = vpop.f32.mrb[0].mxu0
      %v3878 = vadd.f32 0.0, %v3877
      %v3879 = vpop.f32.mrb[0].mxu0
      %3880 = vmatprep.mubr.f32.mxu0 0.0
      %3881 = vmatmul.mubr.f32.gmra.mrb[0].mxu0 %v3791
      %v3882 = vpop.f32.mrb[0].mxu0
      %v3883 = vadd.f32 0.0, %v3882
      %v3884 = vpop.f32.mrb[0].mxu0
      %3885 = vmatprep.mubr.f32.mxu0 0.0
      %3886 = vmatmul.mubr.f32.gmra.mrb[0].mxu0 %v3794
      %v3887 = vpop.f32.mrb[0].mxu0
      %v3888 = vadd.f32 0.0, %v3887
      %v3889 = vpop.f32.mrb[0].mxu0
      %3890 = vdwg.mxu0
      %v3891 = vmul.f32 %v3863, %v3754
      %v3892 = vmul.f32 %v3868, %v3755
      %v3893 = vmul.f32 %v3873, %v3756
      %v3894 = vmul.f32 %v3878, %v3757
      %v3895 = vmul.f32 %v3883, %v3758
      %v3896 = vmul.f32 %v3888, %v3759
      %3903 = vrot.lane.b32.xlu0 %v3187, 8
      %v3904 = vpop.permute.xlu0 %3903
      %3905 = vrot.lane.b32.xlu0 %v3188, 8
      %v3906 = vpop.permute.xlu0 %3905
      %3907 = vrot.lane.b32.xlu0 %v3189, 8
      %v3908 = vpop.permute.xlu0 %3907
      %3909 = vrot.lane.b32.xlu0 %v3190, 8
      %v3910 = vpop.permute.xlu0 %3909
      %3911 = vrot.lane.b32.xlu0 %v3191, 8
      %v3912 = vpop.permute.xlu0 %3911
      %3913 = vrot.lane.b32.xlu0 %v3192, 8
      %v3914 = vpop.permute.xlu0 %3913
      %3927 = vrot.lane.b32.xlu0 %v3539, 16
      %v3928 = vpop.permute.xlu0 %3927
      %3929 = vrot.lane.b32.xlu0 %v3540, 16
      %v3930 = vpop.permute.xlu0 %3929
      %3931 = vrot.lane.b32.xlu0 %v3541, 16
      %v3932 = vpop.permute.xlu0 %3931
      %3933 = vrot.lane.b32.xlu0 %v3542, 16
      %v3934 = vpop.permute.xlu0 %3933
      %3935 = vrot.lane.b32.xlu0 %v3543, 16
      %v3936 = vpop.permute.xlu0 %3935
      %3937 = vrot.lane.b32.xlu0 %v3544, 16
      %v3938 = vpop.permute.xlu0 %3937
      %3951 = vrot.lane.b32.xlu0 %v3891, 24
      %v3952 = vpop.permute.xlu0 %3951
      %3953 = vrot.lane.b32.xlu0 %v3892, 24
      %v3954 = vpop.permute.xlu0 %3953
      %3955 = vrot.lane.b32.xlu0 %v3893, 24
      %v3956 = vpop.permute.xlu0 %3955
      %3957 = vrot.lane.b32.xlu0 %v3894, 24
      %v3958 = vpop.permute.xlu0 %3957
      %3959 = vrot.lane.b32.xlu0 %v3895, 24
      %v3960 = vpop.permute.xlu0 %3959
      %3961 = vrot.lane.b32.xlu0 %v3896, 24
      %v3962 = vpop.permute.xlu0 %3961
      %v3969 = vsel %vm404, %v2835, %v3904
      %v3970 = vsel %vm404, %v2836, %v3906
      %v3971 = vsel %vm404, %v2837, %v3908
      %v3972 = vsel %vm404, %v2838, %v3910
      %v3973 = vsel %vm404, %v2839, %v3912
      %v3974 = vsel %vm404, %v2840, %v3914
      %v3975 = vsel %vm1868, %v3969, %v3928
      %v3976 = vsel %vm1868, %v3970, %v3930
      %v3977 = vsel %vm1868, %v3971, %v3932
      %v3978 = vsel %vm1868, %v3972, %v3934
      %v3979 = vsel %vm1868, %v3973, %v3936
      %v3980 = vsel %vm1868, %v3974, %v3938
      %v3981 = vsel %vm1875, %v3975, %v3952
      %v3982 = vsel %vm1875, %v3976, %v3954
      %v3983 = vsel %vm1875, %v3977, %v3956
      %v3984 = vsel %vm1875, %v3978, %v3958
      %v3985 = vsel %vm1875, %v3979, %v3960
      %v3986 = vsel %vm1875, %v3980, %v3962
      %v3987 = vpack.c.bf16 %v3982, %v3981
      %v3988 = vpack.c.bf16 %v3984, %v3983
      %v3989 = vpack.c.bf16 %v3986, %v3985
      %s3990 = scalar_lea.vmem %s3, 16
      %v3991 = vld [vmem:[%s3990] sm:$0xf]
      %v3992 = vld [vmem:[%s3990 + $0x4] sm:$0xf]
      %v3993 = vld [vmem:[%s3990 + $0x8] sm:$0xf]
      %v3994 = vld [vmem:[%s3990 + $0xc] sm:$0xf]
      %v3995 = vlaneseq
      %v3996 = vshrl.u32 %v3995, 7
      %v3997 = vsub.s32 1, %v3996
      %v3998 = vrot.slane %v2404, %v3997
      %v4003 = vunpack.c.l.b16 %v3991
      %v4004 = vunpack.c.l.b16 %v3992
      %v4005 = vunpack.c.l.b16 %v3993
      %v4006 = vunpack.c.l.b16 %v3994
      %v4007 = vpack.c.b16 %v4004, %v4003
      %v4008 = vpack.c.b16 %v4006, %v4005
      %v4012 = vsel %vm319, %v3987, 0
      %v4015 = vsel %vm319, %v3988, 0
      %v4018 = vsel %vm319, %v3989, 0
      %4020 = vmatprep.subr.bf16.mxu0 0
      %4021 = vmatpush1.bf16.msra.mxu0 %v4007
      %4022 = vmatprep.subr.bf16.mxu0 0
      %4023 = vmatpush1.bf16.msra.mxu0 %v4008
      %4024 = vmatprep.subr.bf16.mxu0 0
      %4025 = vmatpush1.bf16.msra.mxu0 0
      %4026 = vmatprep.subr.bf16.mxu0 0
      %4027 = vmatpush1.bf16.msra.mxu0 0
      %4028 = vmatprep.subr.bf16.mxu0 0
      %4029 = vmatpush1.bf16.msra.mxu0 0
      %4030 = vmatprep.subr.bf16.mxu0 0
      %4031 = vmatpush1.bf16.msra.mxu0 0
      %4032 = vmatprep.subr.bf16.mxu0 0
      %4033 = vmatpush1.bf16.msra.mxu0 0
      %4034 = vmatprep.subr.bf16.mxu0 0
      %4035 = vmatpush1.bf16.msra.mxu0 0
      %4036 = vmatprep.subr.bf16.mxu0 0
      %4037 = vmatpush1.bf16.msra.mxu0 0
      %4038 = vmatprep.subr.bf16.mxu0 0
      %4039 = vmatpush1.bf16.msra.mxu0 0
      %4040 = vmatprep.subr.bf16.mxu0 0
      %4041 = vmatpush1.bf16.msra.mxu0 0
      %4042 = vmatprep.subr.bf16.mxu0 0
      %4043 = vmatpush1.bf16.msra.mxu0 0
      %4044 = vmatprep.subr.bf16.mxu0 0
      %4045 = vmatpush1.bf16.msra.mxu0 0
      %4046 = vmatprep.subr.bf16.mxu0 0
      %4047 = vmatpush1.bf16.msra.mxu0 0
      %4048 = vmatprep.subr.bf16.mxu0 0
      %4049 = vmatpush1.bf16.msra.mxu0 0
      %4050 = vmatprep.subr.bf16.mxu0 0
      %4051 = vmatpush1.bf16.msra.mxu0 0
      %4052 = vmatprep.mubr.bf16.mxu0 0
      %4053 = vmatmul.mubr.bf16.gmra.mrb[0].mxu0 %v4012
      %v4054 = vpop.f32.mrb[0].mxu0
      %v4055 = vadd.f32 %v3998, %v4054
      %v4056 = vpop.f32.mrb[0].mxu0
      %v4057 = vpop.f32.mrb[0].mxu0
      %v4058 = vadd.f32 %v3998, %v4057
      %v4059 = vpop.f32.mrb[0].mxu0
      %4060 = vmatprep.mubr.bf16.mxu0 0
      %4061 = vmatmul.mubr.bf16.gmra.mrb[0].mxu0 %v4015
      %v4062 = vpop.f32.mrb[0].mxu0
      %v4063 = vadd.f32 %v3998, %v4062
      %v4064 = vpop.f32.mrb[0].mxu0
      %v4065 = vpop.f32.mrb[0].mxu0
      %v4066 = vadd.f32 %v3998, %v4065
      %v4067 = vpop.f32.mrb[0].mxu0
      %4068 = vmatprep.mubr.bf16.mxu0 0
      %4069 = vmatmul.mubr.bf16.gmra.mrb[0].mxu0 %v4018
      %v4070 = vpop.f32.mrb[0].mxu0
      %v4071 = vadd.f32 %v3998, %v4070
      %v4072 = vpop.f32.mrb[0].mxu0
      %v4073 = vpop.f32.mrb[0].mxu0
      %v4074 = vadd.f32 %v3998, %v4073
      %v4075 = vpop.f32.mrb[0].mxu0
      %4076 = vdwg.mxu0
      %v4077 = vadd.f32 %v2397, %v4055
      %v4078 = vadd.f32 %v2398, %v4058
      %v4079 = vadd.f32 %v2399, %v4063
      %v4080 = vadd.f32 %v2400, %v4066
      %v4081 = vadd.f32 %v2401, %v4071
      %v4082 = vadd.f32 %v2402, %v4074
      %v4083 = vsel %vm319, %v4077, 0.0
      %4084 = vadd.xlane.f32.xlu0 %v4083
      %v4085 = vpop.xlane.xlu0 %4084
      %v4086 = vsel %vm319, %v4078, 0.0
      %4087 = vadd.xlane.f32.xlu0 %v4086
      %v4088 = vpop.xlane.xlu0 %4087
      %v4089 = vsel %vm319, %v4079, 0.0
      %4090 = vadd.xlane.f32.xlu0 %v4089
      %v4091 = vpop.xlane.xlu0 %4090
      %v4092 = vsel %vm319, %v4080, 0.0
      %4093 = vadd.xlane.f32.xlu0 %v4092
      %v4094 = vpop.xlane.xlu0 %4093
      %v4095 = vsel %vm319, %v4081, 0.0
      %4096 = vadd.xlane.f32.xlu0 %v4095
      %v4097 = vpop.xlane.xlu0 %4096
      %v4098 = vsel %vm319, %v4082, 0.0
      %4099 = vadd.xlane.f32.xlu0 %v4098
      %v4100 = vpop.xlane.xlu0 %4099
      %v4101 = vmul.f32 %v4085, %v1995
      %v4102 = vmul.f32 %v4088, %v1995
      %v4103 = vmul.f32 %v4091, %v1995
      %v4104 = vmul.f32 %v4094, %v1995
      %v4105 = vmul.f32 %v4097, %v1995
      %v4106 = vmul.f32 %v4100, %v1995
      %v4107 = vsub.f32 %v4077, %v4101
      %v4108 = vsub.f32 %v4078, %v4102
      %v4109 = vsub.f32 %v4079, %v4103
      %v4110 = vsub.f32 %v4080, %v4104
      %v4111 = vsub.f32 %v4081, %v4105
      %v4112 = vsub.f32 %v4082, %v4106
      %v4113 = vmul.f32 %v4107, %v4107
      %v4114 = vmul.f32 %v4108, %v4108
      %v4115 = vmul.f32 %v4109, %v4109
      %v4116 = vmul.f32 %v4110, %v4110
      %v4117 = vmul.f32 %v4111, %v4111
      %v4118 = vmul.f32 %v4112, %v4112
      %v4119 = vsel %vm319, %v4113, 0.0
      %4120 = vadd.xlane.f32.xlu0 %v4119
      %v4121 = vpop.xlane.xlu0 %4120
      %v4122 = vsel %vm319, %v4114, 0.0
      %4123 = vadd.xlane.f32.xlu0 %v4122
      %v4124 = vpop.xlane.xlu0 %4123
      %v4125 = vsel %vm319, %v4115, 0.0
      %4126 = vadd.xlane.f32.xlu0 %v4125
      %v4127 = vpop.xlane.xlu0 %4126
      %v4128 = vsel %vm319, %v4116, 0.0
      %4129 = vadd.xlane.f32.xlu0 %v4128
      %v4130 = vpop.xlane.xlu0 %4129
      %v4131 = vsel %vm319, %v4117, 0.0
      %4132 = vadd.xlane.f32.xlu0 %v4131
      %v4133 = vpop.xlane.xlu0 %4132
      %v4134 = vsel %vm319, %v4118, 0.0
      %4135 = vadd.xlane.f32.xlu0 %v4134
      %v4136 = vpop.xlane.xlu0 %4135
      %v4137 = vmul.f32 %v4121, %v1995
      %v4138 = vmul.f32 %v4124, %v1995
      %v4139 = vmul.f32 %v4127, %v1995
      %v4140 = vmul.f32 %v4130, %v1995
      %v4141 = vmul.f32 %v4133, %v1995
      %v4142 = vmul.f32 %v4136, %v1995
      %v4143 = vadd.f32 %v4137, 1e-05
      %v4144 = vadd.f32 %v4138, 1e-05
      %v4145 = vadd.f32 %v4139, 1e-05
      %v4146 = vadd.f32 %v4140, 1e-05
      %v4147 = vadd.f32 %v4141, 1e-05
      %v4148 = vadd.f32 %v4142, 1e-05
      %v4149 = vrsqrt.pop %v4143
      %v4150 = vrsqrt.pop %v4144
      %v4151 = vrsqrt.pop %v4145
      %v4152 = vrsqrt.pop %v4146
      %v4153 = vrsqrt.pop %v4147
      %v4154 = vrsqrt.pop %v4148
      %v4155 = vmul.f32 %v4107, %v4149
      %v4156 = vmul.f32 %v4108, %v4150
      %v4157 = vmul.f32 %v4109, %v4151
      %v4158 = vmul.f32 %v4110, %v4152
      %v4159 = vmul.f32 %v4111, %v4153
      %v4160 = vmul.f32 %v4112, %v4154
      %v4161 = vlaneseq
      %v4162 = vshrl.u32 %v4161, 7
      %v4163 = vsub.s32 2, %v4162
      %v4164 = vrot.slane %v2404, %v4163
      %v4165 = vmul.f32 %v4155, %v4164
      %v4166 = vmul.f32 %v4156, %v4164
      %v4167 = vmul.f32 %v4157, %v4164
      %v4168 = vmul.f32 %v4158, %v4164
      %v4169 = vmul.f32 %v4159, %v4164
      %v4170 = vmul.f32 %v4160, %v4164
      %v4171 = vlaneseq
      %v4172 = vshrl.u32 %v4171, 7
      %v4173 = vsub.s32 3, %v4172
      %v4174 = vrot.slane %v2404, %v4173
      %v4175 = vadd.f32 %v4165, %v4174
      %v4176 = vadd.f32 %v4166, %v4174
      %v4177 = vadd.f32 %v4167, %v4174
      %v4178 = vadd.f32 %v4168, %v4174
      %v4179 = vadd.f32 %v4169, %v4174
      %v4180 = vadd.f32 %v4170, %v4174
      %v4181 = vpack.c.bf16 %v4176, %v4175
      %v4182 = vpack.c.bf16 %v4178, %v4177
      %v4183 = vpack.c.bf16 %v4180, %v4179
      %s4184 = scalar_lea.vmem %s4, 16
      %v4185 = vld [vmem:[%s4184] sm:$0xf]
      %v4186 = vld [vmem:[%s4184 + $0x4] sm:$0xf]
      %v4187 = vld [vmem:[%s4184 + $0x8] sm:$0xf]
      %v4188 = vld [vmem:[%s4184 + $0xc] sm:$0xf]
      %v4189 = vlaneseq
      %v4190 = vshrl.u32 %v4189, 7
      %v4191 = vsub.s32 4, %v4190
      %v4192 = vrot.slane %v2404, %v4191
      %v4197 = vunpack.c.l.b16 %v4185
      %v4198 = vunpack.c.l.b16 %v4186
      %v4199 = vunpack.c.l.b16 %v4187
      %v4200 = vunpack.c.l.b16 %v4188
      %v4201 = vpack.c.b16 %v4198, %v4197
      %v4202 = vpack.c.b16 %v4200, %v4199
      %v4206 = vsel %vm319, %v4181, 0
      %v4209 = vsel %vm319, %v4182, 0
      %v4212 = vsel %vm319, %v4183, 0
      %4214 = vmatprep.subr.bf16.mxu0 0
      %4215 = vmatpush1.bf16.msra.mxu0 %v4201
      %4216 = vmatprep.subr.bf16.mxu0 0
      %4217 = vmatpush1.bf16.msra.mxu0 %v4202
      %4218 = vmatprep.subr.bf16.mxu0 0
      %4219 = vmatpush1.bf16.msra.mxu0 0
      %4220 = vmatprep.subr.bf16.mxu0 0
      %4221 = vmatpush1.bf16.msra.mxu0 0
      %4222 = vmatprep.subr.bf16.mxu0 0
      %4223 = vmatpush1.bf16.msra.mxu0 0
      %4224 = vmatprep.subr.bf16.mxu0 0
      %4225 = vmatpush1.bf16.msra.mxu0 0
      %4226 = vmatprep.subr.bf16.mxu0 0
      %4227 = vmatpush1.bf16.msra.mxu0 0
      %4228 = vmatprep.subr.bf16.mxu0 0
      %4229 = vmatpush1.bf16.msra.mxu0 0
      %4230 = vmatprep.subr.bf16.mxu0 0
      %4231 = vmatpush1.bf16.msra.mxu0 0
      %4232 = vmatprep.subr.bf16.mxu0 0
      %4233 = vmatpush1.bf16.msra.mxu0 0
      %4234 = vmatprep.subr.bf16.mxu0 0
      %4235 = vmatpush1.bf16.msra.mxu0 0
      %4236 = vmatprep.subr.bf16.mxu0 0
      %4237 = vmatpush1.bf16.msra.mxu0 0
      %4238 = vmatprep.subr.bf16.mxu0 0
      %4239 = vmatpush1.bf16.msra.mxu0 0
      %4240 = vmatprep.subr.bf16.mxu0 0
      %4241 = vmatpush1.bf16.msra.mxu0 0
      %4242 = vmatprep.subr.bf16.mxu0 0
      %4243 = vmatpush1.bf16.msra.mxu0 0
      %4244 = vmatprep.subr.bf16.mxu0 0
      %4245 = vmatpush1.bf16.msra.mxu0 0
      %4246 = vmatprep.mubr.bf16.mxu0 0
      %4247 = vmatmul.mubr.bf16.gmra.mrb[0].mxu0 %v4206
      %v4248 = vpop.f32.mrb[0].mxu0
      %v4249 = vadd.f32 %v4192, %v4248
      %v4250 = vpop.f32.mrb[0].mxu0
      %v4251 = vpop.f32.mrb[0].mxu0
      %v4252 = vadd.f32 %v4192, %v4251
      %v4253 = vpop.f32.mrb[0].mxu0
      %4254 = vmatprep.mubr.bf16.mxu0 0
      %4255 = vmatmul.mubr.bf16.gmra.mrb[0].mxu0 %v4209
      %v4256 = vpop.f32.mrb[0].mxu0
      %v4257 = vadd.f32 %v4192, %v4256
      %v4258 = vpop.f32.mrb[0].mxu0
      %v4259 = vpop.f32.mrb[0].mxu0
      %v4260 = vadd.f32 %v4192, %v4259
      %v4261 = vpop.f32.mrb[0].mxu0
      %4262 = vmatprep.mubr.bf16.mxu0 0
      %4263 = vmatmul.mubr.bf16.gmra.mrb[0].mxu0 %v4212
      %v4264 = vpop.f32.mrb[0].mxu0
      %v4265 = vadd.f32 %v4192, %v4264
      %v4266 = vpop.f32.mrb[0].mxu0
      %v4267 = vpop.f32.mrb[0].mxu0
      %v4268 = vadd.f32 %v4192, %v4267
      %v4269 = vpop.f32.mrb[0].mxu0
      %4270 = vdwg.mxu0
      %v4271 = vmax.f32 %v4249, 0.0
      %v4272 = vmax.f32 %v4252, 0.0
      %v4273 = vmax.f32 %v4257, 0.0
      %v4274 = vmax.f32 %v4260, 0.0
      %v4275 = vmax.f32 %v4265, 0.0
      %v4276 = vmax.f32 %v4268, 0.0
      %v4277 = vpack.c.bf16 %v4272, %v4271
      %v4278 = vpack.c.bf16 %v4274, %v4273
      %v4279 = vpack.c.bf16 %v4276, %v4275
      %s4280 = scalar_lea.vmem %s5, 64
      %v4281 = vld [vmem:[%s4280] sm:$0xf]
      %v4282 = vld [vmem:[%s4280 + $0x4] sm:$0xf]
      %v4283 = vld [vmem:[%s4280 + $0x8] sm:$0xf]
      %v4284 = vld [vmem:[%s4280 + $0xc] sm:$0xf]
      %v4285 = vld [vmem:[%s4280 + $0x10] sm:$0xf]
      %v4286 = vld [vmem:[%s4280 + $0x14] sm:$0xf]
      %v4287 = vld [vmem:[%s4280 + $0x18] sm:$0xf]
      %v4288 = vld [vmem:[%s4280 + $0x1c] sm:$0xf]
      %v4289 = vld [vmem:[%s4280 + $0x20] sm:$0xf]
      %v4290 = vld [vmem:[%s4280 + $0x24] sm:$0xf]
      %v4291 = vld [vmem:[%s4280 + $0x28] sm:$0xf]
      %v4292 = vld [vmem:[%s4280 + $0x2c] sm:$0xf]
      %v4293 = vld [vmem:[%s4280 + $0x30] sm:$0xf]
      %v4294 = vld [vmem:[%s4280 + $0x34] sm:$0xf]
      %v4295 = vld [vmem:[%s4280 + $0x38] sm:$0xf]
      %v4296 = vld [vmem:[%s4280 + $0x3c] sm:$0xf]
      %v4297 = vlaneseq
      %v4298 = vshrl.u32 %v4297, 7
      %v4299 = vsub.s32 5, %v4298
      %v4300 = vrot.slane %v2404, %v4299
      %v4317 = vunpack.c.l.b16 %v4281
      %v4318 = vunpack.c.l.b16 %v4282
      %v4319 = vunpack.c.l.b16 %v4283
      %v4320 = vunpack.c.l.b16 %v4284
      %v4321 = vunpack.c.l.b16 %v4285
      %v4322 = vunpack.c.l.b16 %v4286
      %v4323 = vunpack.c.l.b16 %v4287
      %v4324 = vunpack.c.l.b16 %v4288
      %v4325 = vunpack.c.l.b16 %v4289
      %v4326 = vunpack.c.l.b16 %v4290
      %v4327 = vunpack.c.l.b16 %v4291
      %v4328 = vunpack.c.l.b16 %v4292
      %v4329 = vunpack.c.l.b16 %v4293
      %v4330 = vunpack.c.l.b16 %v4294
      %v4331 = vunpack.c.l.b16 %v4295
      %v4332 = vunpack.c.l.b16 %v4296
      %v4333 = vpack.c.b16 %v4318, %v4317
      %v4334 = vpack.c.b16 %v4320, %v4319
      %v4335 = vpack.c.b16 %v4322, %v4321
      %v4336 = vpack.c.b16 %v4324, %v4323
      %v4337 = vpack.c.b16 %v4326, %v4325
      %v4338 = vpack.c.b16 %v4328, %v4327
      %v4339 = vpack.c.b16 %v4330, %v4329
      %v4340 = vpack.c.b16 %v4332, %v4331
      %4349 = vmatprep.subr.bf16.mxu0 0
      %4350 = vmatpush1.bf16.msra.mxu0 %v4333
      %4351 = vmatprep.subr.bf16.mxu0 0
      %4352 = vmatpush1.bf16.msra.mxu0 %v4334
      %4353 = vmatprep.subr.bf16.mxu0 0
      %4354 = vmatpush1.bf16.msra.mxu0 %v4335
      %4355 = vmatprep.subr.bf16.mxu0 0
      %4356 = vmatpush1.bf16.msra.mxu0 %v4336
      %4357 = vmatprep.subr.bf16.mxu0 0
      %4358 = vmatpush1.bf16.msra.mxu0 %v4337
      %4359 = vmatprep.subr.bf16.mxu0 0
      %4360 = vmatpush1.bf16.msra.mxu0 %v4338
      %4361 = vmatprep.subr.bf16.mxu0 0
      %4362 = vmatpush1.bf16.msra.mxu0 %v4339
      %4363 = vmatprep.subr.bf16.mxu0 0
      %4364 = vmatpush1.bf16.msra.mxu0 %v4340
      %4365 = vmatprep.subr.bf16.mxu0 0
      %4366 = vmatpush1.bf16.msra.mxu0 0
      %4367 = vmatprep.subr.bf16.mxu0 0
      %4368 = vmatpush1.bf16.msra.mxu0 0
      %4369 = vmatprep.subr.bf16.mxu0 0
      %4370 = vmatpush1.bf16.msra.mxu0 0
      %4371 = vmatprep.subr.bf16.mxu0 0
      %4372 = vmatpush1.bf16.msra.mxu0 0
      %4373 = vmatprep.subr.bf16.mxu0 0
      %4374 = vmatpush1.bf16.msra.mxu0 0
      %4375 = vmatprep.subr.bf16.mxu0 0
      %4376 = vmatpush1.bf16.msra.mxu0 0
      %4377 = vmatprep.subr.bf16.mxu0 0
      %4378 = vmatpush1.bf16.msra.mxu0 0
      %4379 = vmatprep.subr.bf16.mxu0 0
      %4380 = vmatpush1.bf16.msra.mxu0 0
      %4381 = vmatprep.mubr.bf16.mxu0 0
      %4382 = vmatmul.mubr.bf16.gmra.mrb[0].mxu0 %v4277
      %v4383 = vpop.f32.mrb[0].mxu0
      %v4384 = vadd.f32 %v4300, %v4383
      %v4385 = vpop.f32.mrb[0].mxu0
      %v4386 = vpop.f32.mrb[0].mxu0
      %v4387 = vadd.f32 %v4300, %v4386
      %v4388 = vpop.f32.mrb[0].mxu0
      %4389 = vmatprep.mubr.bf16.mxu0 0
      %4390 = vmatmul.mubr.bf16.gmra.mrb[0].mxu0 %v4278
      %v4391 = vpop.f32.mrb[0].mxu0
      %v4392 = vadd.f32 %v4300, %v4391
      %v4393 = vpop.f32.mrb[0].mxu0
      %v4394 = vpop.f32.mrb[0].mxu0
      %v4395 = vadd.f32 %v4300, %v4394
      %v4396 = vpop.f32.mrb[0].mxu0
      %4397 = vmatprep.mubr.bf16.mxu0 0
      %4398 = vmatmul.mubr.bf16.gmra.mrb[0].mxu0 %v4279
      %v4399 = vpop.f32.mrb[0].mxu0
      %v4400 = vadd.f32 %v4300, %v4399
      %v4401 = vpop.f32.mrb[0].mxu0
      %v4402 = vpop.f32.mrb[0].mxu0
      %v4403 = vadd.f32 %v4300, %v4402
      %v4404 = vpop.f32.mrb[0].mxu0
      %4405 = vdwg.mxu0
      %v4406 = vadd.f32 %v4175, %v4384
      %v4407 = vadd.f32 %v4176, %v4387
      %v4408 = vadd.f32 %v4177, %v4392
      %v4409 = vadd.f32 %v4178, %v4395
      %v4410 = vadd.f32 %v4179, %v4400
      %v4411 = vadd.f32 %v4180, %v4403
      %v4412 = vsel %vm319, %v4406, 0.0
      %4413 = vadd.xlane.f32.xlu0 %v4412
      %v4414 = vpop.xlane.xlu0 %4413
      %v4415 = vsel %vm319, %v4407, 0.0
      %4416 = vadd.xlane.f32.xlu0 %v4415
      %v4417 = vpop.xlane.xlu0 %4416
      %v4418 = vsel %vm319, %v4408, 0.0
      %4419 = vadd.xlane.f32.xlu0 %v4418
      %v4420 = vpop.xlane.xlu0 %4419
      %v4421 = vsel %vm319, %v4409, 0.0
      %4422 = vadd.xlane.f32.xlu0 %v4421
      %v4423 = vpop.xlane.xlu0 %4422
      %v4424 = vsel %vm319, %v4410, 0.0
      %4425 = vadd.xlane.f32.xlu0 %v4424
      %v4426 = vpop.xlane.xlu0 %4425
      %v4427 = vsel %vm319, %v4411, 0.0
      %4428 = vadd.xlane.f32.xlu0 %v4427
      %v4429 = vpop.xlane.xlu0 %4428
      %v4430 = vmul.f32 %v4414, %v1995
      %v4431 = vmul.f32 %v4417, %v1995
      %v4432 = vmul.f32 %v4420, %v1995
      %v4433 = vmul.f32 %v4423, %v1995
      %v4434 = vmul.f32 %v4426, %v1995
      %v4435 = vmul.f32 %v4429, %v1995
      %v4436 = vsub.f32 %v4406, %v4430
      %v4437 = vsub.f32 %v4407, %v4431
      %v4438 = vsub.f32 %v4408, %v4432
      %v4439 = vsub.f32 %v4409, %v4433
      %v4440 = vsub.f32 %v4410, %v4434
      %v4441 = vsub.f32 %v4411, %v4435
      %v4442 = vmul.f32 %v4436, %v4436
      %v4443 = vmul.f32 %v4437, %v4437
      %v4444 = vmul.f32 %v4438, %v4438
      %v4445 = vmul.f32 %v4439, %v4439
      %v4446 = vmul.f32 %v4440, %v4440
      %v4447 = vmul.f32 %v4441, %v4441
      %v4448 = vsel %vm319, %v4442, 0.0
      %4449 = vadd.xlane.f32.xlu0 %v4448
      %v4450 = vpop.xlane.xlu0 %4449
      %v4451 = vsel %vm319, %v4443, 0.0
      %4452 = vadd.xlane.f32.xlu0 %v4451
      %v4453 = vpop.xlane.xlu0 %4452
      %v4454 = vsel %vm319, %v4444, 0.0
      %4455 = vadd.xlane.f32.xlu0 %v4454
      %v4456 = vpop.xlane.xlu0 %4455
      %v4457 = vsel %vm319, %v4445, 0.0
      %4458 = vadd.xlane.f32.xlu0 %v4457
      %v4459 = vpop.xlane.xlu0 %4458
      %v4460 = vsel %vm319, %v4446, 0.0
      %4461 = vadd.xlane.f32.xlu0 %v4460
      %v4462 = vpop.xlane.xlu0 %4461
      %v4463 = vsel %vm319, %v4447, 0.0
      %4464 = vadd.xlane.f32.xlu0 %v4463
      %v4465 = vpop.xlane.xlu0 %4464
      %v4466 = vmul.f32 %v4450, %v1995
      %v4467 = vmul.f32 %v4453, %v1995
      %v4468 = vmul.f32 %v4456, %v1995
      %v4469 = vmul.f32 %v4459, %v1995
      %v4470 = vmul.f32 %v4462, %v1995
      %v4471 = vmul.f32 %v4465, %v1995
      %v4472 = vadd.f32 %v4466, 1e-05
      %v4473 = vadd.f32 %v4467, 1e-05
      %v4474 = vadd.f32 %v4468, 1e-05
      %v4475 = vadd.f32 %v4469, 1e-05
      %v4476 = vadd.f32 %v4470, 1e-05
      %v4477 = vadd.f32 %v4471, 1e-05
      %v4478 = vrsqrt.pop %v4472
      %v4479 = vrsqrt.pop %v4473
      %v4480 = vrsqrt.pop %v4474
      %v4481 = vrsqrt.pop %v4475
      %v4482 = vrsqrt.pop %v4476
      %v4483 = vrsqrt.pop %v4477
      %v4484 = vmul.f32 %v4436, %v4478
      %v4485 = vmul.f32 %v4437, %v4479
      %v4486 = vmul.f32 %v4438, %v4480
      %v4487 = vmul.f32 %v4439, %v4481
      %v4488 = vmul.f32 %v4440, %v4482
      %v4489 = vmul.f32 %v4441, %v4483
      %v4490 = vlaneseq
      %v4491 = vshrl.u32 %v4490, 7
      %v4492 = vsub.s32 6, %v4491
      %v4493 = vrot.slane %v2404, %v4492
      %v4494 = vmul.f32 %v4484, %v4493
      %v4495 = vmul.f32 %v4485, %v4493
      %v4496 = vmul.f32 %v4486, %v4493
      %v4497 = vmul.f32 %v4487, %v4493
      %v4498 = vmul.f32 %v4488, %v4493
      %v4499 = vmul.f32 %v4489, %v4493
      %v4500 = vlaneseq
      %v4501 = vshrl.u32 %v4500, 7
      %v4502 = vsub.s32 7, %v4501
      %v4503 = vrot.slane %v2404, %v4502
      %v4504 = vadd.f32 %v4494, %v4503
      %v4505 = vadd.f32 %v4495, %v4503
      %v4506 = vadd.f32 %v4496, %v4503
      %v4507 = vadd.f32 %v4497, %v4503
      %v4508 = vadd.f32 %v4498, %v4503
      %v4509 = vadd.f32 %v4499, %v4503
      %4510 = vst.msk [vmem:[%s280] sm:$0xff] %vm319, %v4504
      %4511 = vst.msk [vmem:[%s280 + $0x8] sm:$0xff] %vm319, %v4505
      %4512 = vst.msk [vmem:[%s280 + $0x10] sm:$0xff] %vm319, %v4506
      %4513 = vst.msk [vmem:[%s280 + $0x18] sm:$0xff] %vm319, %v4507
      %4514 = vst.msk [vmem:[%s280 + $0x20] sm:$0xff] %vm319, %v4508
      %4515 = vst.msk [vmem:[%s280 + $0x28] sm:$0xff] %vm319, %v4509
      %s4516 = smul.u32 6, %s18
      %p4517 = scmp.lt.s32.totalorder %s4516, 11
      %s4518 = scalar_select %p4517, %s4516, 11
      %s4519 = smul.addr %s4518, 8
      %s4520 = scalar_lea.vmem %s7, %s4519
      // Predicated region
      $region49: #{backbone_forward.2} parent=47 // pred_check
        %p4521 = pneg %p188
      $region50: #{backbone_forward.2} parent=47 // pred_check_branch
        %4523 = sbr.rel (%p4521) target = $region52
      $region51: #{backbone_forward.2} parent=47 // pred_region
        %s4524 = smul.u32 6, %s18
      $region52: #{backbone_forward.2} parent=47 // pred_fallthru
        _
    $region48: #{backbone_forward.2} parent=5 // pred_fallthru
      _
    %p4525 = scmp.le.s32.totalorder 2, %s13
    // Predicated region
    $region53: #{backbone_forward.2} parent=5 // pred_check
      %p4526 = pneg %p4525
    $region54: #{backbone_forward.2} parent=5 // pred_check_branch
      %4528 = sbr.rel (%p4526) target = $region56
    $region55: #{backbone_forward.2} parent=5 // pred_region
      %s4529 = ssub.s32 %s13, 2
      // Predicated region
      $region57: #{backbone_forward.2} parent=55 // pred_check
        %p4530 = pneg %p194
      $region58: #{backbone_forward.2} parent=55 // pred_check_branch
        %4532 = sbr.rel (%p4530) target = $region60
      $region59: #{backbone_forward.2} parent=55 // pred_region
        %s4533 = smul.u32 6, %s19
        %p4534 = scmp.lt.s32.totalorder %s4533, 11
        %s4535 = scalar_select %p4534, %s4533, 11
        %s4536 = smul.addr %s4535, 8
        %s4537 = scalar_lea.vmem %s7, %s4536
      $region60: #{backbone_forward.2} parent=55 // pred_fallthru
        _
    $region56: #{backbone_forward.2} parent=5 // pred_fallthru
      _
  $region6: #{backbone_forward.2} parent=0 // loop_footer
    %s17 = sadd.s32 1, %s13
  $region7: #{backbone_forward.2} parent=0 // loop_footer_branch
    %12 = sbr.rel target = $region3
  $region8: #{backbone_forward.2} parent=0 // loop_exit
    _

</llo_original>
